<compile_context>
chip_gen: v7x
topology: tpu7x:2x2x1
jax: 0.10.0
libtpu: 0.0.40
codegen_flags: <defaults>
</compile_context>

<pallas_src>
import functools

import jax
import jax.numpy as jnp
from jax.experimental import pallas as pl
from jax.experimental.pallas import tpu as pltpu

_VMEM_LIMIT = 48 * 1024 * 1024  # headroom under v7x's 64 MiB physical VMEM


def _row_tile(m, target):
    """Largest row tile <= target that divides m (multiple of 8 when possible)."""
    if m <= target:
        return m
    for t in range(target, 7, -8):
        if m % t == 0:
            return t
    return m


def _cparams(sem):
    return pltpu.CompilerParams(dimension_semantics=sem,
                                vmem_limit_bytes=_VMEM_LIMIT)


# ----------------------------- Pallas kernels -------------------------------

def _ln_linear_kernel(x_ref, g_ref, b_ref, w_ref, bias_ref, o_ref, *, eps):
    """Fused LayerNorm (f32) + Linear (bf16 matmul, f32 accumulation)."""
    x = x_ref[...].astype(jnp.float32)
    mu = jnp.mean(x, axis=-1, keepdims=True)
    var = jnp.mean(jnp.square(x - mu), axis=-1, keepdims=True)
    xn = (x - mu) * jax.lax.rsqrt(var + eps) * g_ref[...] + b_ref[...]
    y = jnp.dot(xn.astype(jnp.bfloat16), w_ref[...],
                preferred_element_type=jnp.float32) + bias_ref[...]
    o_ref[...] = y.astype(o_ref.dtype)


def ln_linear(x, g, b, w, bias, *, eps, out_dtype=jnp.float32, target_rows=512):
    M, Cin = x.shape
    Cout = w.shape[1]
    tm = _row_tile(M, target_rows)
    return pl.pallas_call(
        functools.partial(_ln_linear_kernel, eps=eps),
        out_shape=jax.ShapeDtypeStruct((M, Cout), out_dtype),
        grid=(M // tm,),
        in_specs=[pl.BlockSpec((tm, Cin), lambda i: (i, 0)),
                  pl.BlockSpec((1, Cin), lambda i: (0, 0)),
                  pl.BlockSpec((1, Cin), lambda i: (0, 0)),
                  pl.BlockSpec((Cin, Cout), lambda i: (0, 0)),
                  pl.BlockSpec((1, Cout), lambda i: (0, 0))],
        out_specs=pl.BlockSpec((tm, Cout), lambda i: (i, 0)),
        compiler_params=_cparams(("parallel",)),
    )(x, g, b, w, bias)


def _linear_kernel(x_ref, w_ref, bias_ref, o_ref):
    y = jnp.dot(x_ref[...].astype(jnp.bfloat16), w_ref[...],
                preferred_element_type=jnp.float32) + bias_ref[...]
    o_ref[...] = y.astype(o_ref.dtype)


def linear(x, w, b, *, out_dtype=jnp.float32, target_rows=512):
    M, Cin = x.shape
    Cout = w.shape[1]
    tm = _row_tile(M, target_rows)
    return pl.pallas_call(
        _linear_kernel,
        out_shape=jax.ShapeDtypeStruct((M, Cout), out_dtype),
        grid=(M // tm,),
        in_specs=[pl.BlockSpec((tm, Cin), lambda i: (i, 0)),
                  pl.BlockSpec((Cin, Cout), lambda i: (0, 0)),
                  pl.BlockSpec((1, Cout), lambda i: (0, 0))],
        out_specs=pl.BlockSpec((tm, Cout), lambda i: (i, 0)),
        compiler_params=_cparams(("parallel",)),
    )(x, w, b)


def _linear_residual_kernel(x_ref, w_ref, bias_ref, res_ref, o_ref):
    """Linear (bf16 matmul, f32 accumulation) with fused residual add."""
    y = jnp.dot(x_ref[...].astype(jnp.bfloat16), w_ref[...],
                preferred_element_type=jnp.float32)
    o_ref[...] = (y + bias_ref[...] + res_ref[...]).astype(o_ref.dtype)


def linear_residual(x, w, b, res, *, out_dtype=jnp.float32, target_rows=512):
    M, Cin = x.shape
    Cout = w.shape[1]
    tm = _row_tile(M, target_rows)
    return pl.pallas_call(
        _linear_residual_kernel,
        out_shape=jax.ShapeDtypeStruct((M, Cout), out_dtype),
        grid=(M // tm,),
        in_specs=[pl.BlockSpec((tm, Cin), lambda i: (i, 0)),
                  pl.BlockSpec((Cin, Cout), lambda i: (0, 0)),
                  pl.BlockSpec((1, Cout), lambda i: (0, 0)),
                  pl.BlockSpec((tm, Cout), lambda i: (i, 0))],
        out_specs=pl.BlockSpec((tm, Cout), lambda i: (i, 0)),
        compiler_params=_cparams(("parallel",)),
    )(x, w, b, res)


def _attn_core(q, k, v, scale):
    # q/k/v: (H, N, Dh) bf16. Scores/softmax in f32 (no bf16 VPU/EUP on v5e).
    s = jnp.einsum('hqd,hkd->hqk', q, k,
                   preferred_element_type=jnp.float32) * scale
    s = s - jnp.max(s, axis=-1, keepdims=True)
    e = jnp.exp(s)
    p = e * pl.reciprocal(jnp.sum(e, axis=-1, keepdims=True), approx=True)
    o = jnp.einsum('hqk,hkd->hqd', p.astype(v.dtype), v,
                   preferred_element_type=jnp.float32)
    return o, p


def _attention_kernel(q_ref, k_ref, v_ref, o_ref, *, scale):
    o, _ = _attn_core(q_ref[...], k_ref[...], v_ref[...], scale)
    o_ref[...] = o.astype(o_ref.dtype)


def _attention_probs_kernel(q_ref, k_ref, v_ref, o_ref, p_ref, *, scale):
    o, p = _attn_core(q_ref[...], k_ref[...], v_ref[...], scale)
    o_ref[...] = o.astype(o_ref.dtype)
    p_ref[...] = p


def attention(qh, kh, vh, *, return_probs=False):
    """qh/kh/vh: (B, H, N, Dh). All heads of one batch are processed per grid step."""
    B, H, Nq, Dh = qh.shape
    Nk = kh.shape[2]
    scale = 1.0 / (Dh ** 0.5)
    q_spec = pl.BlockSpec((None, H, Nq, Dh), lambda b: (b, 0, 0, 0))
    kv_spec = pl.BlockSpec((None, H, Nk, Dh), lambda b: (b, 0, 0, 0))
    o_spec = pl.BlockSpec((None, H, Nq, Dh), lambda b: (b, 0, 0, 0))
    cp = _cparams(("parallel",))
    if return_probs:
        return pl.pallas_call(
            functools.partial(_attention_probs_kernel, scale=scale),
            out_shape=(jax.ShapeDtypeStruct((B, H, Nq, Dh), qh.dtype),
                       jax.ShapeDtypeStruct((B, H, Nq, Nk), jnp.float32)),
            grid=(B,),
            in_specs=[q_spec, kv_spec, kv_spec],
            out_specs=(o_spec,
                       pl.BlockSpec((None, H, Nq, Nk), lambda b: (b, 0, 0, 0))),
            compiler_params=cp,
        )(qh, kh, vh)
    return pl.pallas_call(
        functools.partial(_attention_kernel, scale=scale),
        out_shape=jax.ShapeDtypeStruct((B, H, Nq, Dh), qh.dtype),
        grid=(B,),
        in_specs=[q_spec, kv_spec, kv_spec],
        out_specs=o_spec,
        compiler_params=cp,
    )(qh, kh, vh)


def _ffn_compute(tmp_ref, w1_ref, b1_ref, w2_ref, b2_ref):
    x = tmp_ref[...].astype(jnp.bfloat16)                          # (tm, C)
    h = jnp.dot(x, w1_ref[...], preferred_element_type=jnp.float32) + b1_ref[...]
    h = jnp.maximum(h, 0.0)                                        # ReLU; dropout = identity
    return jnp.dot(h.astype(jnp.bfloat16), w2_ref[...],
                   preferred_element_type=jnp.float32) + b2_ref[...]


def _multiway_ffn_kernel(cnt_ref, tmp_ref, wid_ref, w1_ref, b1_ref, w2_ref, b2_ref,
                         o_ref):
    mi = pl.program_id(0)
    ci = pl.program_id(1)
    cnt = cnt_ref[mi, ci]          # scalar-prefetched per-(tile, way) row count (SMEM)

    # Reproduces the PyTorch loop exactly:
    #   output = ffn_0(tmp); for ci > 0: output = where(w == ci, ffn_ci(tmp), output)
    @pl.when(ci == 0)
    def _():
        o_ref[...] = _ffn_compute(tmp_ref, w1_ref, b1_ref, w2_ref, b2_ref)

    # Skip the FLOPs of way ci entirely when no row in this tile uses it.
    @pl.when(jnp.logical_and(ci > 0, cnt > 0))
    def _():
        y = _ffn_compute(tmp_ref, w1_ref, b1_ref, w2_ref, b2_ref)
        mask = wid_ref[...] == ci                                  # (tm, 1) bool
        o_ref[...] = jnp.where(mask, y, o_ref[...])


def multiway_ffn_select(tmp, way_ids, w1, b1, w2, b2, *, num_way, target_rows=256):
    M, C = tmp.shape
    Hf = w1.shape[2]
    tm = _row_tile(M, target_rows)
    tiles = M // tm

    wid = way_ids.astype(jnp.int32)                                # (M,)
    counts = jnp.sum(
        (wid.reshape(tiles, tm, 1) ==
         jnp.arange(num_way, dtype=jnp.int32)[None, None, :]).astype(jnp.int32),
        axis=1)                                                    # (tiles, num_way)
    wid2 = wid.reshape(M, 1)

    grid_spec = pltpu.PrefetchScalarGridSpec(
        num_scalar_prefetch=1,
        grid=(tiles, num_way),
        in_specs=[pl.BlockSpec((tm, C), lambda mi, ci, cnt: (mi, 0)),
                  pl.BlockSpec((tm, 1), lambda mi, ci, cnt: (mi, 0)),
                  pl.BlockSpec((None, C, Hf), lambda mi, ci, cnt: (ci, 0, 0)),
                  pl.BlockSpec((None, 1, Hf), lambda mi, ci, cnt: (ci, 0, 0)),
                  pl.BlockSpec((None, Hf, C), lambda mi, ci, cnt: (ci, 0, 0)),
                  pl.BlockSpec((None, 1, C), lambda mi, ci, cnt: (ci, 0, 0))],
        out_specs=pl.BlockSpec((tm, C), lambda mi, ci, cnt: (mi, 0)),
    )
    return pl.pallas_call(
        _multiway_ffn_kernel,
        out_shape=jax.ShapeDtypeStruct((M, C), jnp.float32),
        grid_spec=grid_spec,
        # way axis revisits the output block (read-modify-write) -> must stay "arbitrary".
        compiler_params=_cparams(("parallel", "arbitrary")),
    )(counts, tmp, wid2, w1, b1, w2, b2)


# ----------------------------- module wrapper --------------------------------

def multiway_contextual_attention(x, context, w, params, num_heads=8,
                                  num_way=6, need_attn=False):
    """x, context: (B, N_b, C) float; w: (B, N_b) int way ids."""
    # TODO(synk): MultiHeadAttn / FFN bodies are not in the reference snippet; assumed
    # standard MHA with call order (key, value, query) and FFN = Linear->ReLU->Linear
    # (scale=4); dropout is identity (eval mode).
    B, N, C = x.shape
    H = num_heads
    Dh = C // H
    M = B * N
    x2 = x.reshape(M, C).astype(jnp.float32)       # kept f32: LN precision + residual path
    c2 = context.reshape(M, C).astype(jnp.float32)

    sp = params["self_attn"]
    # ---- self attention: fused input_norm + QKV projection (single (C, 3C) matmul) ----
    qkv = ln_linear(x2, params["input_norm_g"], params["input_norm_b"],
                    sp["wqkv"], sp["bqkv"], eps=1e-6, out_dtype=jnp.bfloat16)   # (M, 3C)
    qkv = qkv.reshape(B, N, 3, H, Dh).transpose(2, 0, 3, 1, 4)                  # (3,B,H,N,Dh)
    o_self = attention(qkv[0], qkv[1], qkv[2])                                  # probs skipped
    o_self2 = o_self.transpose(0, 2, 1, 3).reshape(M, C)
    query = linear_residual(o_self2, sp["wo"], sp["bo"], x2)                    # drop(q)+input

    cp_ = params["context_attn"]
    # ---- context attention: fused query_norm+Wq and context_norm+Wkv projections ----
    # eps asymmetry matches PyTorch: context_norm uses the nn.LayerNorm default (1e-5),
    # input_norm / query_norm were constructed with eps=1e-6.
    q_ctx = ln_linear(query, params["query_norm_g"], params["query_norm_b"],
                      cp_["wq"], cp_["bq"], eps=1e-6, out_dtype=jnp.bfloat16)   # (M, C)
    kv_ctx = ln_linear(c2, params["context_norm_g"], params["context_norm_b"],
                       cp_["wkv"], cp_["bkv"], eps=1e-5, out_dtype=jnp.bfloat16)  # (M, 2C)
    qh = q_ctx.reshape(B, N, H, Dh).transpose(0, 2, 1, 3)
    kvh = kv_ctx.reshape(B, N, 2, H, Dh).transpose(2, 0, 3, 1, 4)
    if need_attn:
        o_ctx, contextual_attn = attention(qh, kvh[0], kvh[1], return_probs=True)
    else:
        o_ctx = attention(qh, kvh[0], kvh[1])
        contextual_attn = None
    o_ctx2 = o_ctx.transpose(0, 2, 1, 3).reshape(M, C)
    tmp = linear_residual(o_ctx2, cp_["wo"], cp_["bo"], x2)                     # drop(mid)+input

    out = multiway_ffn_select(tmp, w.reshape(M), params["ffn_w1"], params["ffn_b1"],
                              params["ffn_w2"], params["ffn_b2"], num_way=num_way)
    way_logits = linear(tmp, params["way_cls_w"], params["way_cls_b"])

    return (out.reshape(B, N, C),
            way_logits.reshape(B, N, num_way),
            contextual_attn)


# ----------------------------- deterministic init ---------------------------

def _dense(key, cin, cout, scale=0.02):
    return (scale * jax.random.normal(key, (cin, cout), jnp.float32)).astype(jnp.bfloat16)


def init_self_mha_params(key, C):
    ks = jax.random.split(key, 2)
    return dict(wqkv=_dense(ks[0], C, 3 * C), bqkv=jnp.zeros((1, 3 * C), jnp.float32),
                wo=_dense(ks[1], C, C), bo=jnp.zeros((1, C), jnp.float32))


def init_ctx_mha_params(key, C):
    ks = jax.random.split(key, 3)
    return dict(wq=_dense(ks[0], C, C), bq=jnp.zeros((1, C), jnp.float32),
                wkv=_dense(ks[1], C, 2 * C), bkv=jnp.zeros((1, 2 * C), jnp.float32),
                wo=_dense(ks[2], C, C), bo=jnp.zeros((1, C), jnp.float32))


def init_params(key, C, num_heads, num_way, ffn_scale=4):
    ks = jax.random.split(key, 6)
    Hf = C * ffn_scale
    ones = jnp.ones((1, C), jnp.float32)
    zeros = jnp.zeros((1, C), jnp.float32)
    return dict(
        self_attn=init_self_mha_params(ks[0], C),
        context_attn=init_ctx_mha_params(ks[1], C),
        input_norm_g=ones, input_norm_b=zeros,
        query_norm_g=ones, query_norm_b=zeros,
        context_norm_g=ones, context_norm_b=zeros,
        ffn_w1=(0.02 * jax.random.normal(ks[2], (num_way, C, Hf), jnp.float32)
                ).astype(jnp.bfloat16),
        ffn_b1=jnp.zeros((num_way, 1, Hf), jnp.float32),
        ffn_w2=(0.02 * jax.random.normal(ks[3], (num_way, Hf, C), jnp.float32)
                ).astype(jnp.bfloat16),
        ffn_b2=jnp.zeros((num_way, 1, C), jnp.float32),
        way_cls_w=_dense(ks[4], C, num_way),
        way_cls_b=jnp.zeros((1, num_way), jnp.float32),
    )


# ----------------------------------- main ------------------------------------

if __name__ == "__main__":
    B, N, C = 2, 8, 32            # (B x N_b x in_dim) variant of the forward pass
    num_heads, num_way = 8, 6

    key = jax.random.PRNGKey(0)
    kp, kx, kc, kw = jax.random.split(key, 4)
    params = init_params(kp, C, num_heads, num_way)

    x = jax.random.normal(kx, (B, N, C), jnp.float32)
    context = jax.random.normal(kc, (B, N, C), jnp.float32)
    w = jax.random.randint(kw, (B, N), 0, num_way)

    fwd = jax.jit(functools.partial(multiway_contextual_attention,
                                    num_heads=num_heads, num_way=num_way,
                                    need_attn=True))
    out, way_logits, attn = fwd(x, context, w, params)

    jax.block_until_ready((out, way_logits, attn))
    assert out.shape == (B, N, C)
    assert way_logits.shape == (B, N, num_way)
    assert attn.shape == (B, num_heads, N, N)
    print("KERNEL_OK")
</pallas_src>

<mosaic_0001>
module attributes {stable_mosaic.version = 11 : i64} {
  func.func @_ln_linear_kernel(%arg0: i32, %arg1: memref<16x32xf32, #tpu.memory_space<vmem>>, %arg2: memref<1x32xf32, #tpu.memory_space<vmem>>, %arg3: memref<1x32xf32, #tpu.memory_space<vmem>>, %arg4: memref<32x96xbf16, #tpu.memory_space<vmem>>, %arg5: memref<1x96xf32, #tpu.memory_space<vmem>>, %arg6: memref<16x96xbf16, #tpu.memory_space<vmem>>) attributes {dimension_semantics = [#tpu.dimension_semantics<parallel>], iteration_bounds = array<i64: 1>, scalar_prefetch = 0 : i64, scratch_operands = 0 : i64, tpu.core_type = #tpu.core_type<tc>, window_params = [{transform_indices = @transform_0, window_bounds = array<i64: 16, 32>}, {pipeline_mode = #tpu.pipeline_mode<synchronous>, transform_indices = @transform_1, window_bounds = array<i64: 1, 32>}, {pipeline_mode = #tpu.pipeline_mode<synchronous>, transform_indices = @transform_2, window_bounds = array<i64: 1, 32>}, {pipeline_mode = #tpu.pipeline_mode<synchronous>, transform_indices = @transform_3, window_bounds = array<i64: 32, 96>}, {pipeline_mode = #tpu.pipeline_mode<synchronous>, transform_indices = @transform_4, window_bounds = array<i64: 1, 96>}, {transform_indices = @transform_5, window_bounds = array<i64: 16, 96>}]} {
    %c0 = arith.constant 0 : index
    %c0_0 = arith.constant 0 : index
    %0 = vector.load %arg1[%c0, %c0_0] : memref<16x32xf32, #tpu.memory_space<vmem>>, vector<16x32xf32>
    %cst = arith.constant dense<0.000000e+00> : vector<16xf32>
    %1 = vector.multi_reduction <add>, %0, %cst [1] : vector<16x32xf32> to vector<16xf32>
    %2 = vector.shape_cast %1 : vector<16xf32> to vector<16x1xf32>
    %cst_1 = arith.constant 3.200000e+01 : f32
    %3 = vector.broadcast %cst_1 : f32 to vector<16x1xf32>
    %4 = arith.divf %2, %3 : vector<16x1xf32>
    %5 = vector.broadcast %4 : vector<16x1xf32> to vector<16x32xf32>
    %6 = arith.subf %0, %5 : vector<16x32xf32>
    %7 = arith.mulf %6, %6 : vector<16x32xf32>
    %cst_2 = arith.constant dense<0.000000e+00> : vector<16xf32>
    %8 = vector.multi_reduction <add>, %7, %cst_2 [1] : vector<16x32xf32> to vector<16xf32>
    %9 = vector.shape_cast %8 : vector<16xf32> to vector<16x1xf32>
    %cst_3 = arith.constant 3.200000e+01 : f32
    %10 = vector.broadcast %cst_3 : f32 to vector<16x1xf32>
    %11 = arith.divf %9, %10 : vector<16x1xf32>
    %12 = vector.broadcast %4 : vector<16x1xf32> to vector<16x32xf32>
    %13 = arith.subf %0, %12 : vector<16x32xf32>
    %cst_4 = arith.constant 9.99999997E-7 : f32
    %14 = vector.broadcast %cst_4 : f32 to vector<16x1xf32>
    %15 = arith.addf %11, %14 : vector<16x1xf32>
    %16 = math.rsqrt %15 : vector<16x1xf32>
    %17 = vector.broadcast %16 : vector<16x1xf32> to vector<16x32xf32>
    %18 = arith.mulf %13, %17 : vector<16x32xf32>
    %c0_5 = arith.constant 0 : index
    %c0_6 = arith.constant 0 : index
    %19 = vector.load %arg2[%c0_5, %c0_6] : memref<1x32xf32, #tpu.memory_space<vmem>>, vector<1x32xf32>
    %20 = vector.broadcast %19 : vector<1x32xf32> to vector<16x32xf32>
    %21 = arith.mulf %18, %20 : vector<16x32xf32>
    %c0_7 = arith.constant 0 : index
    %c0_8 = arith.constant 0 : index
    %22 = vector.load %arg3[%c0_7, %c0_8] : memref<1x32xf32, #tpu.memory_space<vmem>>, vector<1x32xf32>
    %23 = vector.broadcast %22 : vector<1x32xf32> to vector<16x32xf32>
    %24 = arith.addf %21, %23 : vector<16x32xf32>
    %25 = arith.truncf %24 : vector<16x32xf32> to vector<16x32xbf16>
    %c0_9 = arith.constant 0 : index
    %c0_10 = arith.constant 0 : index
    %26 = vector.load %arg4[%c0_9, %c0_10] : memref<32x96xbf16, #tpu.memory_space<vmem>>, vector<32x96xbf16>
    %cst_11 = arith.constant dense<0.000000e+00> : vector<16x96xf32>
    %27 = tpu.matmul %25, %26, %cst_11 {dimension_numbers = #tpu.dot_dimension_numbers<[1], [0], [0], [1], [0, 0, 1, 1], [], []>} : vector<16x32xbf16>, vector<32x96xbf16>, vector<16x96xf32> -> vector<16x96xf32>
    %c0_12 = arith.constant 0 : index
    %c0_13 = arith.constant 0 : index
    %28 = vector.load %arg5[%c0_12, %c0_13] : memref<1x96xf32, #tpu.memory_space<vmem>>, vector<1x96xf32>
    %29 = vector.broadcast %28 : vector<1x96xf32> to vector<16x96xf32>
    %30 = arith.addf %27, %29 : vector<16x96xf32>
    %31 = arith.truncf %30 : vector<16x96xf32> to vector<16x96xbf16>
    %c0_14 = arith.constant 0 : index
    %c0_15 = arith.constant 0 : index
    %32 = vector.load %arg6[%c0_14, %c0_15] : memref<16x96xbf16, #tpu.memory_space<vmem>>, vector<16x96xbf16>
    tpu.vector_store %arg6[%c0_14, %c0_15], %31 {strides = array<i32>} : memref<16x96xbf16, #tpu.memory_space<vmem>>, vector<16x96xbf16>,
    return
  }
  func.func @transform_0(%arg0: i32) -> (i32, i32) {
    %c0_i32 = arith.constant 0 : i32
    %c0_i32_0 = arith.constant 0 : i32
    return %arg0, %c0_i32 : i32, i32
  }
  func.func @transform_1(%arg0: i32) -> (i32, i32) {
    %c0_i32 = arith.constant 0 : i32
    %c0_i32_0 = arith.constant 0 : i32
    %c0_i32_1 = arith.constant 0 : i32
    return %c0_i32, %c0_i32_0 : i32, i32
  }
  func.func @transform_2(%arg0: i32) -> (i32, i32) {
    %c0_i32 = arith.constant 0 : i32
    %c0_i32_0 = arith.constant 0 : i32
    %c0_i32_1 = arith.constant 0 : i32
    return %c0_i32, %c0_i32_0 : i32, i32
  }
  func.func @transform_3(%arg0: i32) -> (i32, i32) {
    %c0_i32 = arith.constant 0 : i32
    %c0_i32_0 = arith.constant 0 : i32
    %c0_i32_1 = arith.constant 0 : i32
    return %c0_i32, %c0_i32_0 : i32, i32
  }
  func.func @transform_4(%arg0: i32) -> (i32, i32) {
    %c0_i32 = arith.constant 0 : i32
    %c0_i32_0 = arith.constant 0 : i32
    %c0_i32_1 = arith.constant 0 : i32
    return %c0_i32, %c0_i32_0 : i32, i32
  }
  func.func @transform_5(%arg0: i32) -> (i32, i32) {
    %c0_i32 = arith.constant 0 : i32
    %c0_i32_0 = arith.constant 0 : i32
    return %arg0, %c0_i32 : i32, i32
  }
}

module attributes {stable_mosaic.version = 11 : i64} {
  func.func @_attention_kernel(%arg0: i32, %arg1: memref<1x8x8x4xbf16, #tpu.memory_space<vmem>>, %arg2: memref<1x8x8x4xbf16, #tpu.memory_space<vmem>>, %arg3: memref<1x8x8x4xbf16, #tpu.memory_space<vmem>>, %arg4: memref<1x8x8x4xbf16, #tpu.memory_space<vmem>>) attributes {dimension_semantics = [#tpu.dimension_semantics<parallel>], iteration_bounds = array<i64: 2>, scalar_prefetch = 0 : i64, scratch_operands = 0 : i64, tpu.core_type = #tpu.core_type<tc>, window_params = [{transform_indices = @transform_0, window_bounds = array<i64: 1, 8, 8, 4>}, {transform_indices = @transform_1, window_bounds = array<i64: 1, 8, 8, 4>}, {transform_indices = @transform_2, window_bounds = array<i64: 1, 8, 8, 4>}, {transform_indices = @transform_3, window_bounds = array<i64: 1, 8, 8, 4>}]} {
    %c0 = arith.constant 0 : index
    %c0_0 = arith.constant 0 : index
    %c0_1 = arith.constant 0 : index
    %c0_2 = arith.constant 0 : index
    %0 = vector.load %arg1[%c0, %c0_0, %c0_1, %c0_2] : memref<1x8x8x4xbf16, #tpu.memory_space<vmem>>, vector<1x8x8x4xbf16>
    %1 = vector.shape_cast %0 : vector<1x8x8x4xbf16> to vector<8x8x4xbf16>
    %c0_3 = arith.constant 0 : index
    %c0_4 = arith.constant 0 : index
    %c0_5 = arith.constant 0 : index
    %c0_6 = arith.constant 0 : index
    %2 = vector.load %arg2[%c0_3, %c0_4, %c0_5, %c0_6] : memref<1x8x8x4xbf16, #tpu.memory_space<vmem>>, vector<1x8x8x4xbf16>
    %3 = vector.shape_cast %2 : vector<1x8x8x4xbf16> to vector<8x8x4xbf16>
    %c0_7 = arith.constant 0 : index
    %c0_8 = arith.constant 0 : index
    %c0_9 = arith.constant 0 : index
    %c0_10 = arith.constant 0 : index
    %4 = vector.load %arg3[%c0_7, %c0_8, %c0_9, %c0_10] : memref<1x8x8x4xbf16, #tpu.memory_space<vmem>>, vector<1x8x8x4xbf16>
    %5 = vector.shape_cast %4 : vector<1x8x8x4xbf16> to vector<8x8x4xbf16>
    "tpu.trace_start"() <{level = 10 : i32, message = "hqd,hkd->hqk"}> : () -> ()
    %cst = arith.constant dense<0.000000e+00> : vector<8x8x8xf32>
    %6 = tpu.matmul %1, %3, %cst {dimension_numbers = #tpu.dot_dimension_numbers<[2], [2], [1], [1], [0, 0, 0, 1, 1, 1], [0], [0]>} : vector<8x8x4xbf16>, vector<8x8x4xbf16>, vector<8x8x8xf32> -> vector<8x8x8xf32>
    "tpu.trace_stop"() : () -> ()
    %cst_11 = arith.constant 5.000000e-01 : f32
    %7 = vector.broadcast %cst_11 : f32 to vector<8x8x8xf32>
    %8 = arith.mulf %6, %7 : vector<8x8x8xf32>
    %cst_12 = arith.constant dense<0xFF800000> : vector<8x8xf32>
    %9 = vector.multi_reduction <maximumf>, %8, %cst_12 [2] : vector<8x8x8xf32> to vector<8x8xf32>
    %10 = vector.shape_cast %9 : vector<8x8xf32> to vector<8x8x1xf32>
    %11 = vector.broadcast %10 : vector<8x8x1xf32> to vector<8x8x8xf32>
    %12 = arith.subf %8, %11 : vector<8x8x8xf32>
    %13 = math.exp %12 : vector<8x8x8xf32>
    %cst_13 = arith.constant dense<0.000000e+00> : vector<8x8xf32>
    %14 = vector.multi_reduction <add>, %13, %cst_13 [2] : vector<8x8x8xf32> to vector<8x8xf32>
    %15 = vector.shape_cast %14 : vector<8x8xf32> to vector<8x8x1xf32>
    %16 = tpu.reciprocal %15 {approx = true} : vector<8x8x1xf32> -> vector<8x8x1xf32>
    %17 = vector.broadcast %16 : vector<8x8x1xf32> to vector<8x8x8xf32>
    %18 = arith.mulf %13, %17 : vector<8x8x8xf32>
    %19 = arith.truncf %18 : vector<8x8x8xf32> to vector<8x8x8xbf16>
    "tpu.trace_start"() <{level = 10 : i32, message = "hqk,hkd->hqd"}> : () -> ()
    %cst_14 = arith.constant dense<0.000000e+00> : vector<8x8x4xf32>
    %20 = tpu.matmul %19, %5, %cst_14 {dimension_numbers = #tpu.dot_dimension_numbers<[2], [1], [1], [2], [0, 0, 0, 1, 1, 2], [0], [0]>} : vector<8x8x8xbf16>, vector<8x8x4xbf16>, vector<8x8x4xf32> -> vector<8x8x4xf32>
    "tpu.trace_stop"() : () -> ()
    %21 = arith.truncf %20 : vector<8x8x4xf32> to vector<8x8x4xbf16>
    %c0_15 = arith.constant 0 : index
    %c0_16 = arith.constant 0 : index
    %c0_17 = arith.constant 0 : index
    %c0_18 = arith.constant 0 : index
    %22 = vector.load %arg4[%c0_15, %c0_16, %c0_17, %c0_18] : memref<1x8x8x4xbf16, #tpu.memory_space<vmem>>, vector<1x8x8x4xbf16>
    %23 = vector.shape_cast %22 : vector<1x8x8x4xbf16> to vector<8x8x4xbf16>
    %24 = vector.shape_cast %21 : vector<8x8x4xbf16> to vector<1x8x8x4xbf16>
    tpu.vector_store %arg4[%c0_15, %c0_16, %c0_17, %c0_18], %24 {strides = array<i32>} : memref<1x8x8x4xbf16, #tpu.memory_space<vmem>>, vector<1x8x8x4xbf16>,
    return
  }
  func.func @transform_0(%arg0: i32) -> (i32, i32, i32, i32) {
    %c0_i32 = arith.constant 0 : i32
    %c0_i32_0 = arith.constant 0 : i32
    %c0_i32_1 = arith.constant 0 : i32
    %c0_i32_2 = arith.constant 0 : i32
    return %arg0, %c0_i32, %c0_i32_0, %c0_i32_1 : i32, i32, i32, i32
  }
  func.func @transform_1(%arg0: i32) -> (i32, i32, i32, i32) {
    %c0_i32 = arith.constant 0 : i32
    %c0_i32_0 = arith.constant 0 : i32
    %c0_i32_1 = arith.constant 0 : i32
    %c0_i32_2 = arith.constant 0 : i32
    return %arg0, %c0_i32, %c0_i32_0, %c0_i32_1 : i32, i32, i32, i32
  }
  func.func @transform_2(%arg0: i32) -> (i32, i32, i32, i32) {
    %c0_i32 = arith.constant 0 : i32
    %c0_i32_0 = arith.constant 0 : i32
    %c0_i32_1 = arith.constant 0 : i32
    %c0_i32_2 = arith.constant 0 : i32
    return %arg0, %c0_i32, %c0_i32_0, %c0_i32_1 : i32, i32, i32, i32
  }
  func.func @transform_3(%arg0: i32) -> (i32, i32, i32, i32) {
    %c0_i32 = arith.constant 0 : i32
    %c0_i32_0 = arith.constant 0 : i32
    %c0_i32_1 = arith.constant 0 : i32
    %c0_i32_2 = arith.constant 0 : i32
    return %arg0, %c0_i32, %c0_i32_0, %c0_i32_1 : i32, i32, i32, i32
  }
}

module attributes {stable_mosaic.version = 11 : i64} {
  func.func @_linear_residual_kernel(%arg0: i32, %arg1: memref<16x32xbf16, #tpu.memory_space<vmem>>, %arg2: memref<32x32xbf16, #tpu.memory_space<vmem>>, %arg3: memref<1x32xf32, #tpu.memory_space<vmem>>, %arg4: memref<16x32xf32, #tpu.memory_space<vmem>>, %arg5: memref<16x32xf32, #tpu.memory_space<vmem>>) attributes {dimension_semantics = [#tpu.dimension_semantics<parallel>], iteration_bounds = array<i64: 1>, scalar_prefetch = 0 : i64, scratch_operands = 0 : i64, tpu.core_type = #tpu.core_type<tc>, window_params = [{transform_indices = @transform_0, window_bounds = array<i64: 16, 32>}, {pipeline_mode = #tpu.pipeline_mode<synchronous>, transform_indices = @transform_1, window_bounds = array<i64: 32, 32>}, {pipeline_mode = #tpu.pipeline_mode<synchronous>, transform_indices = @transform_2, window_bounds = array<i64: 1, 32>}, {transform_indices = @transform_3, window_bounds = array<i64: 16, 32>}, {transform_indices = @transform_4, window_bounds = array<i64: 16, 32>}]} {
    %c0 = arith.constant 0 : index
    %c0_0 = arith.constant 0 : index
    %0 = vector.load %arg1[%c0, %c0_0] : memref<16x32xbf16, #tpu.memory_space<vmem>>, vector<16x32xbf16>
    %c0_1 = arith.constant 0 : index
    %c0_2 = arith.constant 0 : index
    %1 = vector.load %arg2[%c0_1, %c0_2] : memref<32x32xbf16, #tpu.memory_space<vmem>>, vector<32x32xbf16>
    %cst = arith.constant dense<0.000000e+00> : vector<16x32xf32>
    %2 = tpu.matmul %0, %1, %cst {dimension_numbers = #tpu.dot_dimension_numbers<[1], [0], [0], [1], [0, 0, 1, 1], [], []>} : vector<16x32xbf16>, vector<32x32xbf16>, vector<16x32xf32> -> vector<16x32xf32>
    %c0_3 = arith.constant 0 : index
    %c0_4 = arith.constant 0 : index
    %3 = vector.load %arg3[%c0_3, %c0_4] : memref<1x32xf32, #tpu.memory_space<vmem>>, vector<1x32xf32>
    %4 = vector.broadcast %3 : vector<1x32xf32> to vector<16x32xf32>
    %5 = arith.addf %2, %4 : vector<16x32xf32>
    %c0_5 = arith.constant 0 : index
    %c0_6 = arith.constant 0 : index
    %6 = vector.load %arg4[%c0_5, %c0_6] : memref<16x32xf32, #tpu.memory_space<vmem>>, vector<16x32xf32>
    %7 = arith.addf %5, %6 : vector<16x32xf32>
    %c0_7 = arith.constant 0 : index
    %c0_8 = arith.constant 0 : index
    %8 = vector.load %arg5[%c0_7, %c0_8] : memref<16x32xf32, #tpu.memory_space<vmem>>, vector<16x32xf32>
    tpu.vector_store %arg5[%c0_7, %c0_8], %7 {strides = array<i32>} : memref<16x32xf32, #tpu.memory_space<vmem>>, vector<16x32xf32>,
    return
  }
  func.func @transform_0(%arg0: i32) -> (i32, i32) {
    %c0_i32 = arith.constant 0 : i32
    %c0_i32_0 = arith.constant 0 : i32
    return %arg0, %c0_i32 : i32, i32
  }
  func.func @transform_1(%arg0: i32) -> (i32, i32) {
    %c0_i32 = arith.constant 0 : i32
    %c0_i32_0 = arith.constant 0 : i32
    %c0_i32_1 = arith.constant 0 : i32
    return %c0_i32, %c0_i32_0 : i32, i32
  }
  func.func @transform_2(%arg0: i32) -> (i32, i32) {
    %c0_i32 = arith.constant 0 : i32
    %c0_i32_0 = arith.constant 0 : i32
    %c0_i32_1 = arith.constant 0 : i32
    return %c0_i32, %c0_i32_0 : i32, i32
  }
  func.func @transform_3(%arg0: i32) -> (i32, i32) {
    %c0_i32 = arith.constant 0 : i32
    %c0_i32_0 = arith.constant 0 : i32
    return %arg0, %c0_i32 : i32, i32
  }
  func.func @transform_4(%arg0: i32) -> (i32, i32) {
    %c0_i32 = arith.constant 0 : i32
    %c0_i32_0 = arith.constant 0 : i32
    return %arg0, %c0_i32 : i32, i32
  }
}

module attributes {stable_mosaic.version = 11 : i64} {
  func.func @_ln_linear_kernel(%arg0: i32, %arg1: memref<16x32xf32, #tpu.memory_space<vmem>>, %arg2: memref<1x32xf32, #tpu.memory_space<vmem>>, %arg3: memref<1x32xf32, #tpu.memory_space<vmem>>, %arg4: memref<32x32xbf16, #tpu.memory_space<vmem>>, %arg5: memref<1x32xf32, #tpu.memory_space<vmem>>, %arg6: memref<16x32xbf16, #tpu.memory_space<vmem>>) attributes {dimension_semantics = [#tpu.dimension_semantics<parallel>], iteration_bounds = array<i64: 1>, scalar_prefetch = 0 : i64, scratch_operands = 0 : i64, tpu.core_type = #tpu.core_type<tc>, window_params = [{transform_indices = @transform_0, window_bounds = array<i64: 16, 32>}, {pipeline_mode = #tpu.pipeline_mode<synchronous>, transform_indices = @transform_1, window_bounds = array<i64: 1, 32>}, {pipeline_mode = #tpu.pipeline_mode<synchronous>, transform_indices = @transform_2, window_bounds = array<i64: 1, 32>}, {pipeline_mode = #tpu.pipeline_mode<synchronous>, transform_indices = @transform_3, window_bounds = array<i64: 32, 32>}, {pipeline_mode = #tpu.pipeline_mode<synchronous>, transform_indices = @transform_4, window_bounds = array<i64: 1, 32>}, {transform_indices = @transform_5, window_bounds = array<i64: 16, 32>}]} {
    %c0 = arith.constant 0 : index
    %c0_0 = arith.constant 0 : index
    %0 = vector.load %arg1[%c0, %c0_0] : memref<16x32xf32, #tpu.memory_space<vmem>>, vector<16x32xf32>
    %cst = arith.constant dense<0.000000e+00> : vector<16xf32>
    %1 = vector.multi_reduction <add>, %0, %cst [1] : vector<16x32xf32> to vector<16xf32>
    %2 = vector.shape_cast %1 : vector<16xf32> to vector<16x1xf32>
    %cst_1 = arith.constant 3.200000e+01 : f32
    %3 = vector.broadcast %cst_1 : f32 to vector<16x1xf32>
    %4 = arith.divf %2, %3 : vector<16x1xf32>
    %5 = vector.broadcast %4 : vector<16x1xf32> to vector<16x32xf32>
    %6 = arith.subf %0, %5 : vector<16x32xf32>
    %7 = arith.mulf %6, %6 : vector<16x32xf32>
    %cst_2 = arith.constant dense<0.000000e+00> : vector<16xf32>
    %8 = vector.multi_reduction <add>, %7, %cst_2 [1] : vector<16x32xf32> to vector<16xf32>
    %9 = vector.shape_cast %8 : vector<16xf32> to vector<16x1xf32>
    %cst_3 = arith.constant 3.200000e+01 : f32
    %10 = vector.broadcast %cst_3 : f32 to vector<16x1xf32>
    %11 = arith.divf %9, %10 : vector<16x1xf32>
    %12 = vector.broadcast %4 : vector<16x1xf32> to vector<16x32xf32>
    %13 = arith.subf %0, %12 : vector<16x32xf32>
    %cst_4 = arith.constant 9.99999997E-7 : f32
    %14 = vector.broadcast %cst_4 : f32 to vector<16x1xf32>
    %15 = arith.addf %11, %14 : vector<16x1xf32>
    %16 = math.rsqrt %15 : vector<16x1xf32>
    %17 = vector.broadcast %16 : vector<16x1xf32> to vector<16x32xf32>
    %18 = arith.mulf %13, %17 : vector<16x32xf32>
    %c0_5 = arith.constant 0 : index
    %c0_6 = arith.constant 0 : index
    %19 = vector.load %arg2[%c0_5, %c0_6] : memref<1x32xf32, #tpu.memory_space<vmem>>, vector<1x32xf32>
    %20 = vector.broadcast %19 : vector<1x32xf32> to vector<16x32xf32>
    %21 = arith.mulf %18, %20 : vector<16x32xf32>
    %c0_7 = arith.constant 0 : index
    %c0_8 = arith.constant 0 : index
    %22 = vector.load %arg3[%c0_7, %c0_8] : memref<1x32xf32, #tpu.memory_space<vmem>>, vector<1x32xf32>
    %23 = vector.broadcast %22 : vector<1x32xf32> to vector<16x32xf32>
    %24 = arith.addf %21, %23 : vector<16x32xf32>
    %25 = arith.truncf %24 : vector<16x32xf32> to vector<16x32xbf16>
    %c0_9 = arith.constant 0 : index
    %c0_10 = arith.constant 0 : index
    %26 = vector.load %arg4[%c0_9, %c0_10] : memref<32x32xbf16, #tpu.memory_space<vmem>>, vector<32x32xbf16>
    %cst_11 = arith.constant dense<0.000000e+00> : vector<16x32xf32>
    %27 = tpu.matmul %25, %26, %cst_11 {dimension_numbers = #tpu.dot_dimension_numbers<[1], [0], [0], [1], [0, 0, 1, 1], [], []>} : vector<16x32xbf16>, vector<32x32xbf16>, vector<16x32xf32> -> vector<16x32xf32>
    %c0_12 = arith.constant 0 : index
    %c0_13 = arith.constant 0 : index
    %28 = vector.load %arg5[%c0_12, %c0_13] : memref<1x32xf32, #tpu.memory_space<vmem>>, vector<1x32xf32>
    %29 = vector.broadcast %28 : vector<1x32xf32> to vector<16x32xf32>
    %30 = arith.addf %27, %29 : vector<16x32xf32>
    %31 = arith.truncf %30 : vector<16x32xf32> to vector<16x32xbf16>
    %c0_14 = arith.constant 0 : index
    %c0_15 = arith.constant 0 : index
    %32 = vector.load %arg6[%c0_14, %c0_15] : memref<16x32xbf16, #tpu.memory_space<vmem>>, vector<16x32xbf16>
    tpu.vector_store %arg6[%c0_14, %c0_15], %31 {strides = array<i32>} : memref<16x32xbf16, #tpu.memory_space<vmem>>, vector<16x32xbf16>,
    return
  }
  func.func @transform_0(%arg0: i32) -> (i32, i32) {
    %c0_i32 = arith.constant 0 : i32
    %c0_i32_0 = arith.constant 0 : i32
    return %arg0, %c0_i32 : i32, i32
  }
  func.func @transform_1(%arg0: i32) -> (i32, i32) {
    %c0_i32 = arith.constant 0 : i32
    %c0_i32_0 = arith.constant 0 : i32
    %c0_i32_1 = arith.constant 0 : i32
    return %c0_i32, %c0_i32_0 : i32, i32
  }
  func.func @transform_2(%arg0: i32) -> (i32, i32) {
    %c0_i32 = arith.constant 0 : i32
    %c0_i32_0 = arith.constant 0 : i32
    %c0_i32_1 = arith.constant 0 : i32
    return %c0_i32, %c0_i32_0 : i32, i32
  }
  func.func @transform_3(%arg0: i32) -> (i32, i32) {
    %c0_i32 = arith.constant 0 : i32
    %c0_i32_0 = arith.constant 0 : i32
    %c0_i32_1 = arith.constant 0 : i32
    return %c0_i32, %c0_i32_0 : i32, i32
  }
  func.func @transform_4(%arg0: i32) -> (i32, i32) {
    %c0_i32 = arith.constant 0 : i32
    %c0_i32_0 = arith.constant 0 : i32
    %c0_i32_1 = arith.constant 0 : i32
    return %c0_i32, %c0_i32_0 : i32, i32
  }
  func.func @transform_5(%arg0: i32) -> (i32, i32) {
    %c0_i32 = arith.constant 0 : i32
    %c0_i32_0 = arith.constant 0 : i32
    return %arg0, %c0_i32 : i32, i32
  }
}

module attributes {stable_mosaic.version = 11 : i64} {
  func.func @_ln_linear_kernel(%arg0: i32, %arg1: memref<16x32xf32, #tpu.memory_space<vmem>>, %arg2: memref<1x32xf32, #tpu.memory_space<vmem>>, %arg3: memref<1x32xf32, #tpu.memory_space<vmem>>, %arg4: memref<32x64xbf16, #tpu.memory_space<vmem>>, %arg5: memref<1x64xf32, #tpu.memory_space<vmem>>, %arg6: memref<16x64xbf16, #tpu.memory_space<vmem>>) attributes {dimension_semantics = [#tpu.dimension_semantics<parallel>], iteration_bounds = array<i64: 1>, scalar_prefetch = 0 : i64, scratch_operands = 0 : i64, tpu.core_type = #tpu.core_type<tc>, window_params = [{transform_indices = @transform_0, window_bounds = array<i64: 16, 32>}, {pipeline_mode = #tpu.pipeline_mode<synchronous>, transform_indices = @transform_1, window_bounds = array<i64: 1, 32>}, {pipeline_mode = #tpu.pipeline_mode<synchronous>, transform_indices = @transform_2, window_bounds = array<i64: 1, 32>}, {pipeline_mode = #tpu.pipeline_mode<synchronous>, transform_indices = @transform_3, window_bounds = array<i64: 32, 64>}, {pipeline_mode = #tpu.pipeline_mode<synchronous>, transform_indices = @transform_4, window_bounds = array<i64: 1, 64>}, {transform_indices = @transform_5, window_bounds = array<i64: 16, 64>}]} {
    %c0 = arith.constant 0 : index
    %c0_0 = arith.constant 0 : index
    %0 = vector.load %arg1[%c0, %c0_0] : memref<16x32xf32, #tpu.memory_space<vmem>>, vector<16x32xf32>
    %cst = arith.constant dense<0.000000e+00> : vector<16xf32>
    %1 = vector.multi_reduction <add>, %0, %cst [1] : vector<16x32xf32> to vector<16xf32>
    %2 = vector.shape_cast %1 : vector<16xf32> to vector<16x1xf32>
    %cst_1 = arith.constant 3.200000e+01 : f32
    %3 = vector.broadcast %cst_1 : f32 to vector<16x1xf32>
    %4 = arith.divf %2, %3 : vector<16x1xf32>
    %5 = vector.broadcast %4 : vector<16x1xf32> to vector<16x32xf32>
    %6 = arith.subf %0, %5 : vector<16x32xf32>
    %7 = arith.mulf %6, %6 : vector<16x32xf32>
    %cst_2 = arith.constant dense<0.000000e+00> : vector<16xf32>
    %8 = vector.multi_reduction <add>, %7, %cst_2 [1] : vector<16x32xf32> to vector<16xf32>
    %9 = vector.shape_cast %8 : vector<16xf32> to vector<16x1xf32>
    %cst_3 = arith.constant 3.200000e+01 : f32
    %10 = vector.broadcast %cst_3 : f32 to vector<16x1xf32>
    %11 = arith.divf %9, %10 : vector<16x1xf32>
    %12 = vector.broadcast %4 : vector<16x1xf32> to vector<16x32xf32>
    %13 = arith.subf %0, %12 : vector<16x32xf32>
    %cst_4 = arith.constant 9.99999974E-6 : f32
    %14 = vector.broadcast %cst_4 : f32 to vector<16x1xf32>
    %15 = arith.addf %11, %14 : vector<16x1xf32>
    %16 = math.rsqrt %15 : vector<16x1xf32>
    %17 = vector.broadcast %16 : vector<16x1xf32> to vector<16x32xf32>
    %18 = arith.mulf %13, %17 : vector<16x32xf32>
    %c0_5 = arith.constant 0 : index
    %c0_6 = arith.constant 0 : index
    %19 = vector.load %arg2[%c0_5, %c0_6] : memref<1x32xf32, #tpu.memory_space<vmem>>, vector<1x32xf32>
    %20 = vector.broadcast %19 : vector<1x32xf32> to vector<16x32xf32>
    %21 = arith.mulf %18, %20 : vector<16x32xf32>
    %c0_7 = arith.constant 0 : index
    %c0_8 = arith.constant 0 : index
    %22 = vector.load %arg3[%c0_7, %c0_8] : memref<1x32xf32, #tpu.memory_space<vmem>>, vector<1x32xf32>
    %23 = vector.broadcast %22 : vector<1x32xf32> to vector<16x32xf32>
    %24 = arith.addf %21, %23 : vector<16x32xf32>
    %25 = arith.truncf %24 : vector<16x32xf32> to vector<16x32xbf16>
    %c0_9 = arith.constant 0 : index
    %c0_10 = arith.constant 0 : index
    %26 = vector.load %arg4[%c0_9, %c0_10] : memref<32x64xbf16, #tpu.memory_space<vmem>>, vector<32x64xbf16>
    %cst_11 = arith.constant dense<0.000000e+00> : vector<16x64xf32>
    %27 = tpu.matmul %25, %26, %cst_11 {dimension_numbers = #tpu.dot_dimension_numbers<[1], [0], [0], [1], [0, 0, 1, 1], [], []>} : vector<16x32xbf16>, vector<32x64xbf16>, vector<16x64xf32> -> vector<16x64xf32>
    %c0_12 = arith.constant 0 : index
    %c0_13 = arith.constant 0 : index
    %28 = vector.load %arg5[%c0_12, %c0_13] : memref<1x64xf32, #tpu.memory_space<vmem>>, vector<1x64xf32>
    %29 = vector.broadcast %28 : vector<1x64xf32> to vector<16x64xf32>
    %30 = arith.addf %27, %29 : vector<16x64xf32>
    %31 = arith.truncf %30 : vector<16x64xf32> to vector<16x64xbf16>
    %c0_14 = arith.constant 0 : index
    %c0_15 = arith.constant 0 : index
    %32 = vector.load %arg6[%c0_14, %c0_15] : memref<16x64xbf16, #tpu.memory_space<vmem>>, vector<16x64xbf16>
    tpu.vector_store %arg6[%c0_14, %c0_15], %31 {strides = array<i32>} : memref<16x64xbf16, #tpu.memory_space<vmem>>, vector<16x64xbf16>,
    return
  }
  func.func @transform_0(%arg0: i32) -> (i32, i32) {
    %c0_i32 = arith.constant 0 : i32
    %c0_i32_0 = arith.constant 0 : i32
    return %arg0, %c0_i32 : i32, i32
  }
  func.func @transform_1(%arg0: i32) -> (i32, i32) {
    %c0_i32 = arith.constant 0 : i32
    %c0_i32_0 = arith.constant 0 : i32
    %c0_i32_1 = arith.constant 0 : i32
    return %c0_i32, %c0_i32_0 : i32, i32
  }
  func.func @transform_2(%arg0: i32) -> (i32, i32) {
    %c0_i32 = arith.constant 0 : i32
    %c0_i32_0 = arith.constant 0 : i32
    %c0_i32_1 = arith.constant 0 : i32
    return %c0_i32, %c0_i32_0 : i32, i32
  }
  func.func @transform_3(%arg0: i32) -> (i32, i32) {
    %c0_i32 = arith.constant 0 : i32
    %c0_i32_0 = arith.constant 0 : i32
    %c0_i32_1 = arith.constant 0 : i32
    return %c0_i32, %c0_i32_0 : i32, i32
  }
  func.func @transform_4(%arg0: i32) -> (i32, i32) {
    %c0_i32 = arith.constant 0 : i32
    %c0_i32_0 = arith.constant 0 : i32
    %c0_i32_1 = arith.constant 0 : i32
    return %c0_i32, %c0_i32_0 : i32, i32
  }
  func.func @transform_5(%arg0: i32) -> (i32, i32) {
    %c0_i32 = arith.constant 0 : i32
    %c0_i32_0 = arith.constant 0 : i32
    return %arg0, %c0_i32 : i32, i32
  }
}

module attributes {stable_mosaic.version = 11 : i64} {
  func.func @_attention_probs_kernel(%arg0: i32, %arg1: memref<1x8x8x4xbf16, #tpu.memory_space<vmem>>, %arg2: memref<1x8x8x4xbf16, #tpu.memory_space<vmem>>, %arg3: memref<1x8x8x4xbf16, #tpu.memory_space<vmem>>, %arg4: memref<1x8x8x4xbf16, #tpu.memory_space<vmem>>, %arg5: memref<1x8x8x8xf32, #tpu.memory_space<vmem>>) attributes {dimension_semantics = [#tpu.dimension_semantics<parallel>], iteration_bounds = array<i64: 2>, scalar_prefetch = 0 : i64, scratch_operands = 0 : i64, tpu.core_type = #tpu.core_type<tc>, window_params = [{transform_indices = @transform_0, window_bounds = array<i64: 1, 8, 8, 4>}, {transform_indices = @transform_1, window_bounds = array<i64: 1, 8, 8, 4>}, {transform_indices = @transform_2, window_bounds = array<i64: 1, 8, 8, 4>}, {transform_indices = @transform_3, window_bounds = array<i64: 1, 8, 8, 4>}, {transform_indices = @transform_4, window_bounds = array<i64: 1, 8, 8, 8>}]} {
    %c0 = arith.constant 0 : index
    %c0_0 = arith.constant 0 : index
    %c0_1 = arith.constant 0 : index
    %c0_2 = arith.constant 0 : index
    %0 = vector.load %arg1[%c0, %c0_0, %c0_1, %c0_2] : memref<1x8x8x4xbf16, #tpu.memory_space<vmem>>, vector<1x8x8x4xbf16>
    %1 = vector.shape_cast %0 : vector<1x8x8x4xbf16> to vector<8x8x4xbf16>
    %c0_3 = arith.constant 0 : index
    %c0_4 = arith.constant 0 : index
    %c0_5 = arith.constant 0 : index
    %c0_6 = arith.constant 0 : index
    %2 = vector.load %arg2[%c0_3, %c0_4, %c0_5, %c0_6] : memref<1x8x8x4xbf16, #tpu.memory_space<vmem>>, vector<1x8x8x4xbf16>
    %3 = vector.shape_cast %2 : vector<1x8x8x4xbf16> to vector<8x8x4xbf16>
    %c0_7 = arith.constant 0 : index
    %c0_8 = arith.constant 0 : index
    %c0_9 = arith.constant 0 : index
    %c0_10 = arith.constant 0 : index
    %4 = vector.load %arg3[%c0_7, %c0_8, %c0_9, %c0_10] : memref<1x8x8x4xbf16, #tpu.memory_space<vmem>>, vector<1x8x8x4xbf16>
    %5 = vector.shape_cast %4 : vector<1x8x8x4xbf16> to vector<8x8x4xbf16>
    "tpu.trace_start"() <{level = 10 : i32, message = "hqd,hkd->hqk"}> : () -> ()
    %cst = arith.constant dense<0.000000e+00> : vector<8x8x8xf32>
    %6 = tpu.matmul %1, %3, %cst {dimension_numbers = #tpu.dot_dimension_numbers<[2], [2], [1], [1], [0, 0, 0, 1, 1, 1], [0], [0]>} : vector<8x8x4xbf16>, vector<8x8x4xbf16>, vector<8x8x8xf32> -> vector<8x8x8xf32>
    "tpu.trace_stop"() : () -> ()
    %cst_11 = arith.constant 5.000000e-01 : f32
    %7 = vector.broadcast %cst_11 : f32 to vector<8x8x8xf32>
    %8 = arith.mulf %6, %7 : vector<8x8x8xf32>
    %cst_12 = arith.constant dense<0xFF800000> : vector<8x8xf32>
    %9 = vector.multi_reduction <maximumf>, %8, %cst_12 [2] : vector<8x8x8xf32> to vector<8x8xf32>
    %10 = vector.shape_cast %9 : vector<8x8xf32> to vector<8x8x1xf32>
    %11 = vector.broadcast %10 : vector<8x8x1xf32> to vector<8x8x8xf32>
    %12 = arith.subf %8, %11 : vector<8x8x8xf32>
    %13 = math.exp %12 : vector<8x8x8xf32>
    %cst_13 = arith.constant dense<0.000000e+00> : vector<8x8xf32>
    %14 = vector.multi_reduction <add>, %13, %cst_13 [2] : vector<8x8x8xf32> to vector<8x8xf32>
    %15 = vector.shape_cast %14 : vector<8x8xf32> to vector<8x8x1xf32>
    %16 = tpu.reciprocal %15 {approx = true} : vector<8x8x1xf32> -> vector<8x8x1xf32>
    %17 = vector.broadcast %16 : vector<8x8x1xf32> to vector<8x8x8xf32>
    %18 = arith.mulf %13, %17 : vector<8x8x8xf32>
    %19 = arith.truncf %18 : vector<8x8x8xf32> to vector<8x8x8xbf16>
    "tpu.trace_start"() <{level = 10 : i32, message = "hqk,hkd->hqd"}> : () -> ()
    %cst_14 = arith.constant dense<0.000000e+00> : vector<8x8x4xf32>
    %20 = tpu.matmul %19, %5, %cst_14 {dimension_numbers = #tpu.dot_dimension_numbers<[2], [1], [1], [2], [0, 0, 0, 1, 1, 2], [0], [0]>} : vector<8x8x8xbf16>, vector<8x8x4xbf16>, vector<8x8x4xf32> -> vector<8x8x4xf32>
    "tpu.trace_stop"() : () -> ()
    %21 = arith.truncf %20 : vector<8x8x4xf32> to vector<8x8x4xbf16>
    %c0_15 = arith.constant 0 : index
    %c0_16 = arith.constant 0 : index
    %c0_17 = arith.constant 0 : index
    %c0_18 = arith.constant 0 : index
    %22 = vector.load %arg4[%c0_15, %c0_16, %c0_17, %c0_18] : memref<1x8x8x4xbf16, #tpu.memory_space<vmem>>, vector<1x8x8x4xbf16>
    %23 = vector.shape_cast %22 : vector<1x8x8x4xbf16> to vector<8x8x4xbf16>
    %24 = vector.shape_cast %21 : vector<8x8x4xbf16> to vector<1x8x8x4xbf16>
    tpu.vector_store %arg4[%c0_15, %c0_16, %c0_17, %c0_18], %24 {strides = array<i32>} : memref<1x8x8x4xbf16, #tpu.memory_space<vmem>>, vector<1x8x8x4xbf16>,
    %c0_19 = arith.constant 0 : index
    %c0_20 = arith.constant 0 : index
    %c0_21 = arith.constant 0 : index
    %c0_22 = arith.constant 0 : index
    %25 = vector.load %arg5[%c0_19, %c0_20, %c0_21, %c0_22] : memref<1x8x8x8xf32, #tpu.memory_space<vmem>>, vector<1x8x8x8xf32>
    %26 = vector.shape_cast %25 : vector<1x8x8x8xf32> to vector<8x8x8xf32>
    %27 = vector.shape_cast %18 : vector<8x8x8xf32> to vector<1x8x8x8xf32>
    tpu.vector_store %arg5[%c0_19, %c0_20, %c0_21, %c0_22], %27 {strides = array<i32>} : memref<1x8x8x8xf32, #tpu.memory_space<vmem>>, vector<1x8x8x8xf32>,
    return
  }
  func.func @transform_0(%arg0: i32) -> (i32, i32, i32, i32) {
    %c0_i32 = arith.constant 0 : i32
    %c0_i32_0 = arith.constant 0 : i32
    %c0_i32_1 = arith.constant 0 : i32
    %c0_i32_2 = arith.constant 0 : i32
    return %arg0, %c0_i32, %c0_i32_0, %c0_i32_1 : i32, i32, i32, i32
  }
  func.func @transform_1(%arg0: i32) -> (i32, i32, i32, i32) {
    %c0_i32 = arith.constant 0 : i32
    %c0_i32_0 = arith.constant 0 : i32
    %c0_i32_1 = arith.constant 0 : i32
    %c0_i32_2 = arith.constant 0 : i32
    return %arg0, %c0_i32, %c0_i32_0, %c0_i32_1 : i32, i32, i32, i32
  }
  func.func @transform_2(%arg0: i32) -> (i32, i32, i32, i32) {
    %c0_i32 = arith.constant 0 : i32
    %c0_i32_0 = arith.constant 0 : i32
    %c0_i32_1 = arith.constant 0 : i32
    %c0_i32_2 = arith.constant 0 : i32
    return %arg0, %c0_i32, %c0_i32_0, %c0_i32_1 : i32, i32, i32, i32
  }
  func.func @transform_3(%arg0: i32) -> (i32, i32, i32, i32) {
    %c0_i32 = arith.constant 0 : i32
    %c0_i32_0 = arith.constant 0 : i32
    %c0_i32_1 = arith.constant 0 : i32
    %c0_i32_2 = arith.constant 0 : i32
    return %arg0, %c0_i32, %c0_i32_0, %c0_i32_1 : i32, i32, i32, i32
  }
  func.func @transform_4(%arg0: i32) -> (i32, i32, i32, i32) {
    %c0_i32 = arith.constant 0 : i32
    %c0_i32_0 = arith.constant 0 : i32
    %c0_i32_1 = arith.constant 0 : i32
    %c0_i32_2 = arith.constant 0 : i32
    return %arg0, %c0_i32, %c0_i32_0, %c0_i32_1 : i32, i32, i32, i32
  }
}

module attributes {stable_mosaic.version = 11 : i64} {
  func.func @_multiway_ffn_kernel(%arg0: i32, %arg1: i32, %arg2: memref<1x6xi32, #tpu.memory_space<smem>>, %arg3: memref<16x32xf32, #tpu.memory_space<vmem>>, %arg4: memref<16x1xi32, #tpu.memory_space<vmem>>, %arg5: memref<1x32x128xbf16, #tpu.memory_space<vmem>>, %arg6: memref<1x1x128xf32, #tpu.memory_space<vmem>>, %arg7: memref<1x128x32xbf16, #tpu.memory_space<vmem>>, %arg8: memref<1x1x32xf32, #tpu.memory_space<vmem>>, %arg9: memref<16x32xf32, #tpu.memory_space<vmem>>) attributes {dimension_semantics = [#tpu.dimension_semantics<parallel>, #tpu.dimension_semantics<arbitrary>], iteration_bounds = array<i64: 1, 6>, scalar_prefetch = 1 : i64, scratch_operands = 0 : i64, tpu.core_type = #tpu.core_type<tc>, window_params = [{transform_indices = @transform_0, window_bounds = array<i64: 16, 32>}, {transform_indices = @transform_1, window_bounds = array<i64: 16, 1>}, {transform_indices = @transform_2, window_bounds = array<i64: 1, 32, 128>}, {transform_indices = @transform_3, window_bounds = array<i64: 1, 1, 128>}, {transform_indices = @transform_4, window_bounds = array<i64: 1, 128, 32>}, {transform_indices = @transform_5, window_bounds = array<i64: 1, 1, 32>}, {transform_indices = @transform_6, window_bounds = array<i64: 16, 32>}]} {
    %0 = arith.index_cast %arg0 : i32 to index
    %1 = arith.index_cast %arg1 : i32 to index
    %2 = memref.load %arg2[%0, %1] : memref<1x6xi32, #tpu.memory_space<smem>>
    %c0_i32 = arith.constant 0 : i32
    %3 = arith.cmpi eq, %arg1, %c0_i32 : i32
    %4 = arith.extui %3 : i1 to i32
    %c0_i32_0 = arith.constant 0 : i32
    %5 = arith.cmpi ne, %4, %c0_i32_0 : i32
    scf.if %5 {
      %c0 = arith.constant 0 : index
      %c0_4 = arith.constant 0 : index
      %11 = vector.load %arg3[%c0, %c0_4] : memref<16x32xf32, #tpu.memory_space<vmem>>, vector<16x32xf32>
      %12 = arith.truncf %11 : vector<16x32xf32> to vector<16x32xbf16>
      %c0_5 = arith.constant 0 : index
      %c0_6 = arith.constant 0 : index
      %c0_7 = arith.constant 0 : index
      %13 = vector.load %arg5[%c0_5, %c0_6, %c0_7] : memref<1x32x128xbf16, #tpu.memory_space<vmem>>, vector<1x32x128xbf16>
      %14 = vector.shape_cast %13 : vector<1x32x128xbf16> to vector<32x128xbf16>
      %cst = arith.constant dense<0.000000e+00> : vector<16x128xf32>
      %15 = tpu.matmul %12, %14, %cst {dimension_numbers = #tpu.dot_dimension_numbers<[1], [0], [0], [1], [0, 0, 1, 1], [], []>} : vector<16x32xbf16>, vector<32x128xbf16>, vector<16x128xf32> -> vector<16x128xf32>
      %c0_8 = arith.constant 0 : index
      %c0_9 = arith.constant 0 : index
      %c0_10 = arith.constant 0 : index
      %16 = vector.load %arg6[%c0_8, %c0_9, %c0_10] : memref<1x1x128xf32, #tpu.memory_space<vmem>>, vector<1x1x128xf32>
      %17 = vector.shape_cast %16 : vector<1x1x128xf32> to vector<1x128xf32>
      %18 = vector.broadcast %17 : vector<1x128xf32> to vector<16x128xf32>
      %19 = arith.addf %15, %18 : vector<16x128xf32>
      %cst_11 = arith.constant 0.000000e+00 : f32
      %20 = vector.broadcast %cst_11 : f32 to vector<16x128xf32>
      %21 = arith.maximumf %19, %20 : vector<16x128xf32>
      %22 = arith.truncf %21 : vector<16x128xf32> to vector<16x128xbf16>
      %c0_12 = arith.constant 0 : index
      %c0_13 = arith.constant 0 : index
      %c0_14 = arith.constant 0 : index
      %23 = vector.load %arg7[%c0_12, %c0_13, %c0_14] : memref<1x128x32xbf16, #tpu.memory_space<vmem>>, vector<1x128x32xbf16>
      %24 = vector.shape_cast %23 : vector<1x128x32xbf16> to vector<128x32xbf16>
      %cst_15 = arith.constant dense<0.000000e+00> : vector<16x32xf32>
      %25 = tpu.matmul %22, %24, %cst_15 {dimension_numbers = #tpu.dot_dimension_numbers<[1], [0], [0], [1], [0, 0, 1, 1], [], []>} : vector<16x128xbf16>, vector<128x32xbf16>, vector<16x32xf32> -> vector<16x32xf32>
      %c0_16 = arith.constant 0 : index
      %c0_17 = arith.constant 0 : index
      %c0_18 = arith.constant 0 : index
      %26 = vector.load %arg8[%c0_16, %c0_17, %c0_18] : memref<1x1x32xf32, #tpu.memory_space<vmem>>, vector<1x1x32xf32>
      %27 = vector.shape_cast %26 : vector<1x1x32xf32> to vector<1x32xf32>
      %28 = vector.broadcast %27 : vector<1x32xf32> to vector<16x32xf32>
      %29 = arith.addf %25, %28 : vector<16x32xf32>
      %c0_19 = arith.constant 0 : index
      %c0_20 = arith.constant 0 : index
      %30 = vector.load %arg9[%c0_19, %c0_20] : memref<16x32xf32, #tpu.memory_space<vmem>>, vector<16x32xf32>
      tpu.vector_store %arg9[%c0_19, %c0_20], %29 {strides = array<i32>} : memref<16x32xf32, #tpu.memory_space<vmem>>, vector<16x32xf32>,
    } else {
    }
    %c0_i32_1 = arith.constant 0 : i32
    %6 = arith.cmpi sgt, %arg1, %c0_i32_1 : i32
    %c0_i32_2 = arith.constant 0 : i32
    %7 = arith.cmpi sgt, %2, %c0_i32_2 : i32
    %8 = arith.andi %6, %7 : i1
    %9 = arith.extui %8 : i1 to i32
    %c0_i32_3 = arith.constant 0 : i32
    %10 = arith.cmpi ne, %9, %c0_i32_3 : i32
    scf.if %10 {
      %c0 = arith.constant 0 : index
      %c0_4 = arith.constant 0 : index
      %11 = vector.load %arg3[%c0, %c0_4] : memref<16x32xf32, #tpu.memory_space<vmem>>, vector<16x32xf32>
      %12 = arith.truncf %11 : vector<16x32xf32> to vector<16x32xbf16>
      %c0_5 = arith.constant 0 : index
      %c0_6 = arith.constant 0 : index
      %c0_7 = arith.constant 0 : index
      %13 = vector.load %arg5[%c0_5, %c0_6, %c0_7] : memref<1x32x128xbf16, #tpu.memory_space<vmem>>, vector<1x32x128xbf16>
      %14 = vector.shape_cast %13 : vector<1x32x128xbf16> to vector<32x128xbf16>
      %cst = arith.constant dense<0.000000e+00> : vector<16x128xf32>
      %15 = tpu.matmul %12, %14, %cst {dimension_numbers = #tpu.dot_dimension_numbers<[1], [0], [0], [1], [0, 0, 1, 1], [], []>} : vector<16x32xbf16>, vector<32x128xbf16>, vector<16x128xf32> -> vector<16x128xf32>
      %c0_8 = arith.constant 0 : index
      %c0_9 = arith.constant 0 : index
      %c0_10 = arith.constant 0 : index
      %16 = vector.load %arg6[%c0_8, %c0_9, %c0_10] : memref<1x1x128xf32, #tpu.memory_space<vmem>>, vector<1x1x128xf32>
      %17 = vector.shape_cast %16 : vector<1x1x128xf32> to vector<1x128xf32>
      %18 = vector.broadcast %17 : vector<1x128xf32> to vector<16x128xf32>
      %19 = arith.addf %15, %18 : vector<16x128xf32>
      %cst_11 = arith.constant 0.000000e+00 : f32
      %20 = vector.broadcast %cst_11 : f32 to vector<16x128xf32>
      %21 = arith.maximumf %19, %20 : vector<16x128xf32>
      %22 = arith.truncf %21 : vector<16x128xf32> to vector<16x128xbf16>
      %c0_12 = arith.constant 0 : index
      %c0_13 = arith.constant 0 : index
      %c0_14 = arith.constant 0 : index
      %23 = vector.load %arg7[%c0_12, %c0_13, %c0_14] : memref<1x128x32xbf16, #tpu.memory_space<vmem>>, vector<1x128x32xbf16>
      %24 = vector.shape_cast %23 : vector<1x128x32xbf16> to vector<128x32xbf16>
      %cst_15 = arith.constant dense<0.000000e+00> : vector<16x32xf32>
      %25 = tpu.matmul %22, %24, %cst_15 {dimension_numbers = #tpu.dot_dimension_numbers<[1], [0], [0], [1], [0, 0, 1, 1], [], []>} : vector<16x128xbf16>, vector<128x32xbf16>, vector<16x32xf32> -> vector<16x32xf32>
      %c0_16 = arith.constant 0 : index
      %c0_17 = arith.constant 0 : index
      %c0_18 = arith.constant 0 : index
      %26 = vector.load %arg8[%c0_16, %c0_17, %c0_18] : memref<1x1x32xf32, #tpu.memory_space<vmem>>, vector<1x1x32xf32>
      %27 = vector.shape_cast %26 : vector<1x1x32xf32> to vector<1x32xf32>
      %28 = vector.broadcast %27 : vector<1x32xf32> to vector<16x32xf32>
      %29 = arith.addf %25, %28 : vector<16x32xf32>
      %c0_19 = arith.constant 0 : index
      %c0_20 = arith.constant 0 : index
      %30 = vector.load %arg4[%c0_19, %c0_20] : memref<16x1xi32, #tpu.memory_space<vmem>>, vector<16x1xi32>
      %31 = vector.broadcast %arg1 : i32 to vector<16x1xi32>
      %32 = arith.cmpi eq, %30, %31 : vector<16x1xi32>
      %c0_21 = arith.constant 0 : index
      %c0_22 = arith.constant 0 : index
      %33 = vector.load %arg9[%c0_21, %c0_22] : memref<16x32xf32, #tpu.memory_space<vmem>>, vector<16x32xf32>
      %34 = vector.shape_cast %32 : vector<16x1xi1> to vector<16x1xi1>
      %35 = vector.broadcast %34 : vector<16x1xi1> to vector<16x32xi1>
      %36 = arith.select %35, %29, %33 : vector<16x32xi1>, vector<16x32xf32>
      %c0_23 = arith.constant 0 : index
      %c0_24 = arith.constant 0 : index
      %37 = vector.load %arg9[%c0_23, %c0_24] : memref<16x32xf32, #tpu.memory_space<vmem>>, vector<16x32xf32>
      tpu.vector_store %arg9[%c0_23, %c0_24], %36 {strides = array<i32>} : memref<16x32xf32, #tpu.memory_space<vmem>>, vector<16x32xf32>,
    } else {
    }
    return
  }
  func.func @transform_0(%arg0: i32, %arg1: i32, %arg2: memref<1x6xi32, #tpu.memory_space<smem>>) -> (i32, i32) {
    %c0_i32 = arith.constant 0 : i32
    %c0_i32_0 = arith.constant 0 : i32
    return %arg0, %c0_i32 : i32, i32
  }
  func.func @transform_1(%arg0: i32, %arg1: i32, %arg2: memref<1x6xi32, #tpu.memory_space<smem>>) -> (i32, i32) {
    %c0_i32 = arith.constant 0 : i32
    %c0_i32_0 = arith.constant 0 : i32
    return %arg0, %c0_i32 : i32, i32
  }
  func.func @transform_2(%arg0: i32, %arg1: i32, %arg2: memref<1x6xi32, #tpu.memory_space<smem>>) -> (i32, i32, i32) {
    %c0_i32 = arith.constant 0 : i32
    %c0_i32_0 = arith.constant 0 : i32
    %c0_i32_1 = arith.constant 0 : i32
    return %arg1, %c0_i32, %c0_i32_0 : i32, i32, i32
  }
  func.func @transform_3(%arg0: i32, %arg1: i32, %arg2: memref<1x6xi32, #tpu.memory_space<smem>>) -> (i32, i32, i32) {
    %c0_i32 = arith.constant 0 : i32
    %c0_i32_0 = arith.constant 0 : i32
    %c0_i32_1 = arith.constant 0 : i32
    return %arg1, %c0_i32, %c0_i32_0 : i32, i32, i32
  }
  func.func @transform_4(%arg0: i32, %arg1: i32, %arg2: memref<1x6xi32, #tpu.memory_space<smem>>) -> (i32, i32, i32) {
    %c0_i32 = arith.constant 0 : i32
    %c0_i32_0 = arith.constant 0 : i32
    %c0_i32_1 = arith.constant 0 : i32
    return %arg1, %c0_i32, %c0_i32_0 : i32, i32, i32
  }
  func.func @transform_5(%arg0: i32, %arg1: i32, %arg2: memref<1x6xi32, #tpu.memory_space<smem>>) -> (i32, i32, i32) {
    %c0_i32 = arith.constant 0 : i32
    %c0_i32_0 = arith.constant 0 : i32
    %c0_i32_1 = arith.constant 0 : i32
    return %arg1, %c0_i32, %c0_i32_0 : i32, i32, i32
  }
  func.func @transform_6(%arg0: i32, %arg1: i32, %arg2: memref<1x6xi32, #tpu.memory_space<smem>>) -> (i32, i32) {
    %c0_i32 = arith.constant 0 : i32
    %c0_i32_0 = arith.constant 0 : i32
    return %arg0, %c0_i32 : i32, i32
  }
}

module attributes {stable_mosaic.version = 11 : i64} {
  func.func @_linear_kernel(%arg0: i32, %arg1: memref<16x32xf32, #tpu.memory_space<vmem>>, %arg2: memref<32x6xbf16, #tpu.memory_space<vmem>>, %arg3: memref<1x6xf32, #tpu.memory_space<vmem>>, %arg4: memref<16x6xf32, #tpu.memory_space<vmem>>) attributes {dimension_semantics = [#tpu.dimension_semantics<parallel>], iteration_bounds = array<i64: 1>, scalar_prefetch = 0 : i64, scratch_operands = 0 : i64, tpu.core_type = #tpu.core_type<tc>, window_params = [{transform_indices = @transform_0, window_bounds = array<i64: 16, 32>}, {pipeline_mode = #tpu.pipeline_mode<synchronous>, transform_indices = @transform_1, window_bounds = array<i64: 32, 6>}, {pipeline_mode = #tpu.pipeline_mode<synchronous>, transform_indices = @transform_2, window_bounds = array<i64: 1, 6>}, {transform_indices = @transform_3, window_bounds = array<i64: 16, 6>}]} {
    %c0 = arith.constant 0 : index
    %c0_0 = arith.constant 0 : index
    %0 = vector.load %arg1[%c0, %c0_0] : memref<16x32xf32, #tpu.memory_space<vmem>>, vector<16x32xf32>
    %1 = arith.truncf %0 : vector<16x32xf32> to vector<16x32xbf16>
    %c0_1 = arith.constant 0 : index
    %c0_2 = arith.constant 0 : index
    %2 = vector.load %arg2[%c0_1, %c0_2] : memref<32x6xbf16, #tpu.memory_space<vmem>>, vector<32x6xbf16>
    %cst = arith.constant dense<0.000000e+00> : vector<16x6xf32>
    %3 = tpu.matmul %1, %2, %cst {dimension_numbers = #tpu.dot_dimension_numbers<[1], [0], [0], [1], [0, 0, 1, 1], [], []>} : vector<16x32xbf16>, vector<32x6xbf16>, vector<16x6xf32> -> vector<16x6xf32>
    %c0_3 = arith.constant 0 : index
    %c0_4 = arith.constant 0 : index
    %4 = vector.load %arg3[%c0_3, %c0_4] : memref<1x6xf32, #tpu.memory_space<vmem>>, vector<1x6xf32>
    %5 = vector.broadcast %4 : vector<1x6xf32> to vector<16x6xf32>
    %6 = arith.addf %3, %5 : vector<16x6xf32>
    %c0_5 = arith.constant 0 : index
    %c0_6 = arith.constant 0 : index
    %7 = vector.load %arg4[%c0_5, %c0_6] : memref<16x6xf32, #tpu.memory_space<vmem>>, vector<16x6xf32>
    tpu.vector_store %arg4[%c0_5, %c0_6], %6 {strides = array<i32>} : memref<16x6xf32, #tpu.memory_space<vmem>>, vector<16x6xf32>,
    return
  }
  func.func @transform_0(%arg0: i32) -> (i32, i32) {
    %c0_i32 = arith.constant 0 : i32
    %c0_i32_0 = arith.constant 0 : i32
    return %arg0, %c0_i32 : i32, i32
  }
  func.func @transform_1(%arg0: i32) -> (i32, i32) {
    %c0_i32 = arith.constant 0 : i32
    %c0_i32_0 = arith.constant 0 : i32
    %c0_i32_1 = arith.constant 0 : i32
    return %c0_i32, %c0_i32_0 : i32, i32
  }
  func.func @transform_2(%arg0: i32) -> (i32, i32) {
    %c0_i32 = arith.constant 0 : i32
    %c0_i32_0 = arith.constant 0 : i32
    %c0_i32_1 = arith.constant 0 : i32
    return %c0_i32, %c0_i32_0 : i32, i32
  }
  func.func @transform_3(%arg0: i32) -> (i32, i32) {
    %c0_i32 = arith.constant 0 : i32
    %c0_i32_0 = arith.constant 0 : i32
    return %arg0, %c0_i32 : i32, i32
  }
}

</mosaic_0001>

<llo_original>
// kernel: multiway_contextual_attention.9
$region0: #{multiway_contextual_attention.9}
  #allocation0 [shape = 'u32[]', space=smem, size = 0x4, offset = 0x4, fixed_abs, tag = 'smem constant byte address 0x4 - core index']
  #allocation1 [shape = 'u32[144,128]{1,0:T(1,128)}', space=vmem, size = 0x12000, scoped, tag = 'internal scratch']
  %s0 = inlined_call_operand.vmem [shape: f32[16,32], index: 0, kind: input, shape index: {}]
  %s1 = inlined_call_operand.vmem [shape: f32[1,32], index: 1, kind: input, shape index: {}]
  %s2 = inlined_call_operand.vmem [shape: f32[1,32], index: 2, kind: input, shape index: {}]
  %s3 = inlined_call_operand.vmem [shape: bf16[32,96], index: 3, kind: input, shape index: {}]
  %s4 = inlined_call_operand.vmem [shape: f32[1,96], index: 4, kind: input, shape index: {}]
  %s5 = inlined_call_operand.vmem [shape: bf16[16,96], index: 5, kind: output, shape index: {}]
  %s6 = sld [smem:[#allocation0]]
  $region30: #{multiway_contextual_attention.9} parent=0
    _
  %s8 = ssub.s32 1, %s6
  %s9 = scalar_select 0, %s8, %s6
  // Predicated region
  $region2: #{multiway_contextual_attention.9} parent=0 // pred_check
    _
  $region3: #{multiway_contextual_attention.9} parent=0 // pred_check_branch
    %11 = sbr.rel (0) target = $region5
  $region4: #{multiway_contextual_attention.9} parent=0 // pred_region
    _
  $region5: #{multiway_contextual_attention.9} parent=0 // pred_fallthru
    _
  // Predicated region
  $region6: #{multiway_contextual_attention.9} parent=0 // pred_check
    _
  $region7: #{multiway_contextual_attention.9} parent=0 // pred_check_branch
    %13 = sbr.rel (0) target = $region9
  $region8: #{multiway_contextual_attention.9} parent=0 // pred_region
    _
  $region9: #{multiway_contextual_attention.9} parent=0 // pred_fallthru
    _
  // Predicated region
  $region10: #{multiway_contextual_attention.9} parent=0 // pred_check
    _
  $region11: #{multiway_contextual_attention.9} parent=0 // pred_check_branch
    %15 = sbr.rel (0) target = $region13
  $region12: #{multiway_contextual_attention.9} parent=0 // pred_region
    _
  $region13: #{multiway_contextual_attention.9} parent=0 // pred_fallthru
    _
  // Predicated region
  $region14: #{multiway_contextual_attention.9} parent=0 // pred_check
    _
  $region15: #{multiway_contextual_attention.9} parent=0 // pred_check_branch
    %17 = sbr.rel (0) target = $region17
  $region16: #{multiway_contextual_attention.9} parent=0 // pred_region
    _
  $region17: #{multiway_contextual_attention.9} parent=0 // pred_fallthru
    _
  // Predicated region
  $region18: #{multiway_contextual_attention.9} parent=0 // pred_check
    _
  $region19: #{multiway_contextual_attention.9} parent=0 // pred_check_branch
    %19 = sbr.rel (0) target = $region21
  $region20: #{multiway_contextual_attention.9} parent=0 // pred_region
    _
  $region21: #{multiway_contextual_attention.9} parent=0 // pred_fallthru
    _
  %v21 = vld [vmem:[%s0] sm:$0xff]
  %v22 = vld [vmem:[%s0 + $0x8] sm:$0xff]
  %vm23 = vcmask 261120
  %v24 = vsel %vm23, %v21, 0.0
  %25 = vadd.xlane.f32.xlu0 %v24
  %v26 = vpop.xlane.xlu0 %25
  %v27 = vsel %vm23, %v22, 0.0
  %28 = vadd.xlane.f32.xlu0 %v27
  %v29 = vpop.xlane.xlu0 %28
  %v30 = vrcp.pop 32.0
  %v31 = vmul.f32 %v26, %v30
  %v32 = vmul.f32 %v29, %v30
  %v33 = vsub.f32 %v21, %v31
  %v34 = vsub.f32 %v22, %v32
  %v35 = vmul.f32 %v33, %v33
  %v36 = vmul.f32 %v34, %v34
  %v37 = vsel %vm23, %v35, 0.0
  %38 = vadd.xlane.f32.xlu0 %v37
  %v39 = vpop.xlane.xlu0 %38
  %v40 = vsel %vm23, %v36, 0.0
  %41 = vadd.xlane.f32.xlu0 %v40
  %v42 = vpop.xlane.xlu0 %41
  %v43 = vmul.f32 %v39, %v30
  %v44 = vmul.f32 %v42, %v30
  %v45 = vadd.f32 %v43, 1e-06
  %v46 = vadd.f32 %v44, 1e-06
  %v47 = vrsqrt.pop %v45
  %v48 = vrsqrt.pop %v46
  %v49 = vmul.f32 %v33, %v47
  %v50 = vmul.f32 %v34, %v48
  %v51 = vld [vmem:[%s1] sm:$0x1]
  %v53 = vlaneseq
  %v54 = vshrl.u32 %v53, 7
  %v55 = vsub.s32 0, %v54
  %v56 = vrot.slane %v51, %v55
  %v58 = vmul.f32 %v49, %v56
  %v59 = vmul.f32 %v50, %v56
  %v60 = vld [vmem:[%s2] sm:$0x1]
  %v62 = vlaneseq
  %v63 = vshrl.u32 %v62, 7
  %v64 = vsub.s32 0, %v63
  %v65 = vrot.slane %v60, %v64
  %v67 = vadd.f32 %v58, %v65
  %v68 = vadd.f32 %v59, %v65
  %v69 = vpack.c.bf16 %v68, %v67
  %v70 = vld [vmem:[%s3] sm:$0xf]
  %v71 = vld [vmem:[%s3 + $0x4] sm:$0xf]
  %v72 = vld [vmem:[%s3 + $0x8] sm:$0xf]
  %v73 = vld [vmem:[%s3 + $0xc] sm:$0xf]
  %v74 = vld [vmem:[%s4] sm:$0x1]
  %v76 = vlaneseq
  %v77 = vshrl.u32 %v76, 7
  %v78 = vsub.s32 0, %v77
  %v79 = vrot.slane %v74, %v78
  %v85 = vunpack.c.l.b16 %v70
  %v86 = vunpack.c.l.b16 %v71
  %v87 = vunpack.c.l.b16 %v72
  %v88 = vunpack.c.l.b16 %v73
  %v89 = vpack.c.b16 %v86, %v85
  %v90 = vpack.c.b16 %v88, %v87
  %v94 = vsel %vm23, %v69, 0
  %96 = vmatprep.subr.bf16.mxu0 0
  %97 = vmatpush1.bf16.msra.mxu0 %v89
  %98 = vmatprep.subr.bf16.mxu0 0
  %99 = vmatpush1.bf16.msra.mxu0 %v90
  %100 = vmatprep.subr.bf16.mxu0 0
  %101 = vmatpush1.bf16.msra.mxu0 0
  %102 = vmatprep.subr.bf16.mxu0 0
  %103 = vmatpush1.bf16.msra.mxu0 0
  %104 = vmatprep.subr.bf16.mxu0 0
  %105 = vmatpush1.bf16.msra.mxu0 0
  %106 = vmatprep.subr.bf16.mxu0 0
  %107 = vmatpush1.bf16.msra.mxu0 0
  %108 = vmatprep.subr.bf16.mxu0 0
  %109 = vmatpush1.bf16.msra.mxu0 0
  %110 = vmatprep.subr.bf16.mxu0 0
  %111 = vmatpush1.bf16.msra.mxu0 0
  %112 = vmatprep.subr.bf16.mxu0 0
  %113 = vmatpush1.bf16.msra.mxu0 0
  %114 = vmatprep.subr.bf16.mxu0 0
  %115 = vmatpush1.bf16.msra.mxu0 0
  %116 = vmatprep.subr.bf16.mxu0 0
  %117 = vmatpush1.bf16.msra.mxu0 0
  %118 = vmatprep.subr.bf16.mxu0 0
  %119 = vmatpush1.bf16.msra.mxu0 0
  %120 = vmatprep.subr.bf16.mxu0 0
  %121 = vmatpush1.bf16.msra.mxu0 0
  %122 = vmatprep.subr.bf16.mxu0 0
  %123 = vmatpush1.bf16.msra.mxu0 0
  %124 = vmatprep.subr.bf16.mxu0 0
  %125 = vmatpush1.bf16.msra.mxu0 0
  %126 = vmatprep.subr.bf16.mxu0 0
  %127 = vmatpush1.bf16.msra.mxu0 0
  %128 = vmatprep.mubr.bf16.mxu0 0
  %129 = vmatmul.mubr.bf16.gmra.mrb[0].mxu0 %v94
  %v130 = vpop.f32.mrb[0].mxu0
  %v131 = vadd.f32 %v79, %v130
  %v132 = vpop.f32.mrb[0].mxu0
  %v133 = vpop.f32.mrb[0].mxu0
  %v134 = vadd.f32 %v79, %v133
  %v135 = vpop.f32.mrb[0].mxu0
  %136 = vdwg.mxu0
  %v137 = vpack.c.bf16 %v134, %v131
  %v139 = vunpack.c.l.b16 %v137
  %v140 = vunpack.c.h.b16 %v137
  %v141 = vpack.c.b16 %v139, %v139
  %v142 = vpack.c.b16 %v140, %v140
  %vm145 = vcmask 781312
  %146 = vst.msk [vmem:[%s5] sm:$0xf] %vm145, %v141
  %147 = vst.msk [vmem:[%s5 + $0x4] sm:$0xf] %vm145, %v142
  // Predicated region
  $region22: #{multiway_contextual_attention.9} parent=0 // pred_check
    _
  $region23: #{multiway_contextual_attention.9} parent=0 // pred_check_branch
    %149 = sbr.rel (0) target = $region25
  $region24: #{multiway_contextual_attention.9} parent=0 // pred_region
    _
  $region25: #{multiway_contextual_attention.9} parent=0 // pred_fallthru
    _
  // Predicated region
  $region26: #{multiway_contextual_attention.9} parent=0 // pred_check
    _
  $region27: #{multiway_contextual_attention.9} parent=0 // pred_check_branch
    %151 = sbr.rel (0) target = $region29
  $region28: #{multiway_contextual_attention.9} parent=0 // pred_region
    _
  $region29: #{multiway_contextual_attention.9} parent=0 // pred_fallthru
    _

// kernel: multiway_contextual_attention.11
$region0: #{multiway_contextual_attention.11}
  #allocation0 [shape = 'u32[]', space=smem, size = 0x4, offset = 0x4, fixed_abs, tag = 'smem constant byte address 0x4 - core index']
  #allocation1 [shape = 'u32[144,128]{1,0:T(1,128)}', space=vmem, size = 0x12000, scoped, tag = 'internal scratch']
  %s0 = inlined_call_operand.vmem [shape: bf16[16,32], index: 0, kind: input, shape index: {}]
  %s1 = inlined_call_operand.vmem [shape: bf16[32,32], index: 1, kind: input, shape index: {}]
  %s2 = inlined_call_operand.vmem [shape: f32[1,32], index: 2, kind: input, shape index: {}]
  %s3 = inlined_call_operand.vmem [shape: f32[16,32], index: 3, kind: input, shape index: {}]
  %s4 = inlined_call_operand.vmem [shape: f32[16,32], index: 4, kind: output, shape index: {}]
  %s5 = sld [smem:[#allocation0]]
  $region26: #{multiway_contextual_attention.11} parent=0
    _
  %s7 = ssub.s32 1, %s5
  %s8 = scalar_select 0, %s7, %s5
  // Predicated region
  $region2: #{multiway_contextual_attention.11} parent=0 // pred_check
    _
  $region3: #{multiway_contextual_attention.11} parent=0 // pred_check_branch
    %10 = sbr.rel (0) target = $region5
  $region4: #{multiway_contextual_attention.11} parent=0 // pred_region
    _
  $region5: #{multiway_contextual_attention.11} parent=0 // pred_fallthru
    _
  // Predicated region
  $region6: #{multiway_contextual_attention.11} parent=0 // pred_check
    _
  $region7: #{multiway_contextual_attention.11} parent=0 // pred_check_branch
    %12 = sbr.rel (0) target = $region9
  $region8: #{multiway_contextual_attention.11} parent=0 // pred_region
    _
  $region9: #{multiway_contextual_attention.11} parent=0 // pred_fallthru
    _
  // Predicated region
  $region10: #{multiway_contextual_attention.11} parent=0 // pred_check
    _
  $region11: #{multiway_contextual_attention.11} parent=0 // pred_check_branch
    %14 = sbr.rel (0) target = $region13
  $region12: #{multiway_contextual_attention.11} parent=0 // pred_region
    _
  $region13: #{multiway_contextual_attention.11} parent=0 // pred_fallthru
    _
  // Predicated region
  $region14: #{multiway_contextual_attention.11} parent=0 // pred_check
    _
  $region15: #{multiway_contextual_attention.11} parent=0 // pred_check_branch
    %16 = sbr.rel (0) target = $region17
  $region16: #{multiway_contextual_attention.11} parent=0 // pred_region
    _
  $region17: #{multiway_contextual_attention.11} parent=0 // pred_fallthru
    _
  %v18 = vld [vmem:[%s0] sm:$0xf]
  %v19 = vld [vmem:[%s0 + $0x4] sm:$0xf]
  %v20 = vld [vmem:[%s1] sm:$0xf]
  %v21 = vld [vmem:[%s1 + $0x4] sm:$0xf]
  %v22 = vld [vmem:[%s1 + $0x8] sm:$0xf]
  %v23 = vld [vmem:[%s1 + $0xc] sm:$0xf]
  %v24 = vld [vmem:[%s2] sm:$0x1]
  %v26 = vlaneseq
  %v27 = vshrl.u32 %v26, 7
  %v28 = vsub.s32 0, %v27
  %v29 = vrot.slane %v24, %v28
  %v33 = vunpack.c.l.b16 %v18
  %v34 = vunpack.c.l.b16 %v19
  %v35 = vpack.c.b16 %v34, %v33
  %v40 = vunpack.c.l.b16 %v20
  %v41 = vunpack.c.l.b16 %v21
  %v42 = vunpack.c.l.b16 %v22
  %v43 = vunpack.c.l.b16 %v23
  %v44 = vpack.c.b16 %v41, %v40
  %v45 = vpack.c.b16 %v43, %v42
  %vm48 = vcmask 261120
  %v50 = vsel %vm48, %v35, 0
  %52 = vmatprep.subr.bf16.mxu0 0
  %53 = vmatpush1.bf16.msra.mxu0 %v44
  %54 = vmatprep.subr.bf16.mxu0 0
  %55 = vmatpush1.bf16.msra.mxu0 %v45
  %56 = vmatprep.subr.bf16.mxu0 0
  %57 = vmatpush1.bf16.msra.mxu0 0
  %58 = vmatprep.subr.bf16.mxu0 0
  %59 = vmatpush1.bf16.msra.mxu0 0
  %60 = vmatprep.subr.bf16.mxu0 0
  %61 = vmatpush1.bf16.msra.mxu0 0
  %62 = vmatprep.subr.bf16.mxu0 0
  %63 = vmatpush1.bf16.msra.mxu0 0
  %64 = vmatprep.subr.bf16.mxu0 0
  %65 = vmatpush1.bf16.msra.mxu0 0
  %66 = vmatprep.subr.bf16.mxu0 0
  %67 = vmatpush1.bf16.msra.mxu0 0
  %68 = vmatprep.subr.bf16.mxu0 0
  %69 = vmatpush1.bf16.msra.mxu0 0
  %70 = vmatprep.subr.bf16.mxu0 0
  %71 = vmatpush1.bf16.msra.mxu0 0
  %72 = vmatprep.subr.bf16.mxu0 0
  %73 = vmatpush1.bf16.msra.mxu0 0
  %74 = vmatprep.subr.bf16.mxu0 0
  %75 = vmatpush1.bf16.msra.mxu0 0
  %76 = vmatprep.subr.bf16.mxu0 0
  %77 = vmatpush1.bf16.msra.mxu0 0
  %78 = vmatprep.subr.bf16.mxu0 0
  %79 = vmatpush1.bf16.msra.mxu0 0
  %80 = vmatprep.subr.bf16.mxu0 0
  %81 = vmatpush1.bf16.msra.mxu0 0
  %82 = vmatprep.subr.bf16.mxu0 0
  %83 = vmatpush1.bf16.msra.mxu0 0
  %84 = vmatprep.mubr.bf16.mxu0 0
  %85 = vmatmul.mubr.bf16.gmra.mrb[0].mxu0 %v50
  %v86 = vpop.f32.mrb[0].mxu0
  %v87 = vadd.f32 %v29, %v86
  %v88 = vpop.f32.mrb[0].mxu0
  %v89 = vpop.f32.mrb[0].mxu0
  %v90 = vadd.f32 %v29, %v89
  %v91 = vpop.f32.mrb[0].mxu0
  %92 = vdwg.mxu0
  %v93 = vld [vmem:[%s3] sm:$0xff]
  %v94 = vld [vmem:[%s3 + $0x8] sm:$0xff]
  %v95 = vadd.f32 %v87, %v93
  %v96 = vadd.f32 %v90, %v94
  %97 = vst.msk [vmem:[%s4] sm:$0xff] %vm48, %v95
  %98 = vst.msk [vmem:[%s4 + $0x8] sm:$0xff] %vm48, %v96
  // Predicated region
  $region18: #{multiway_contextual_attention.11} parent=0 // pred_check
    _
  $region19: #{multiway_contextual_attention.11} parent=0 // pred_check_branch
    %100 = sbr.rel (0) target = $region21
  $region20: #{multiway_contextual_attention.11} parent=0 // pred_region
    _
  $region21: #{multiway_contextual_attention.11} parent=0 // pred_fallthru
    _
  // Predicated region
  $region22: #{multiway_contextual_attention.11} parent=0 // pred_check
    _
  $region23: #{multiway_contextual_attention.11} parent=0 // pred_check_branch
    %102 = sbr.rel (0) target = $region25
  $region24: #{multiway_contextual_attention.11} parent=0 // pred_region
    _
  $region25: #{multiway_contextual_attention.11} parent=0 // pred_fallthru
    _

// kernel: multiway_contextual_attention.12
$region0: #{multiway_contextual_attention.12}
  #allocation0 [shape = 'u32[]', space=smem, size = 0x4, offset = 0x4, fixed_abs, tag = 'smem constant byte address 0x4 - core index']
  #allocation1 [shape = 'u32[144,128]{1,0:T(1,128)}', space=vmem, size = 0x12000, scoped, tag = 'internal scratch']
  %s0 = inlined_call_operand.vmem [shape: f32[16,32], index: 0, kind: input, shape index: {}]
  %s1 = inlined_call_operand.vmem [shape: f32[1,32], index: 1, kind: input, shape index: {}]
  %s2 = inlined_call_operand.vmem [shape: f32[1,32], index: 2, kind: input, shape index: {}]
  %s3 = inlined_call_operand.vmem [shape: bf16[32,32], index: 3, kind: input, shape index: {}]
  %s4 = inlined_call_operand.vmem [shape: f32[1,32], index: 4, kind: input, shape index: {}]
  %s5 = inlined_call_operand.vmem [shape: bf16[16,32], index: 5, kind: output, shape index: {}]
  %s6 = sld [smem:[#allocation0]]
  $region30: #{multiway_contextual_attention.12} parent=0
    _
  %s8 = ssub.s32 1, %s6
  %s9 = scalar_select 0, %s8, %s6
  // Predicated region
  $region2: #{multiway_contextual_attention.12} parent=0 // pred_check
    _
  $region3: #{multiway_contextual_attention.12} parent=0 // pred_check_branch
    %11 = sbr.rel (0) target = $region5
  $region4: #{multiway_contextual_attention.12} parent=0 // pred_region
    _
  $region5: #{multiway_contextual_attention.12} parent=0 // pred_fallthru
    _
  // Predicated region
  $region6: #{multiway_contextual_attention.12} parent=0 // pred_check
    _
  $region7: #{multiway_contextual_attention.12} parent=0 // pred_check_branch
    %13 = sbr.rel (0) target = $region9
  $region8: #{multiway_contextual_attention.12} parent=0 // pred_region
    _
  $region9: #{multiway_contextual_attention.12} parent=0 // pred_fallthru
    _
  // Predicated region
  $region10: #{multiway_contextual_attention.12} parent=0 // pred_check
    _
  $region11: #{multiway_contextual_attention.12} parent=0 // pred_check_branch
    %15 = sbr.rel (0) target = $region13
  $region12: #{multiway_contextual_attention.12} parent=0 // pred_region
    _
  $region13: #{multiway_contextual_attention.12} parent=0 // pred_fallthru
    _
  // Predicated region
  $region14: #{multiway_contextual_attention.12} parent=0 // pred_check
    _
  $region15: #{multiway_contextual_attention.12} parent=0 // pred_check_branch
    %17 = sbr.rel (0) target = $region17
  $region16: #{multiway_contextual_attention.12} parent=0 // pred_region
    _
  $region17: #{multiway_contextual_attention.12} parent=0 // pred_fallthru
    _
  // Predicated region
  $region18: #{multiway_contextual_attention.12} parent=0 // pred_check
    _
  $region19: #{multiway_contextual_attention.12} parent=0 // pred_check_branch
    %19 = sbr.rel (0) target = $region21
  $region20: #{multiway_contextual_attention.12} parent=0 // pred_region
    _
  $region21: #{multiway_contextual_attention.12} parent=0 // pred_fallthru
    _
  %v21 = vld [vmem:[%s0] sm:$0xff]
  %v22 = vld [vmem:[%s0 + $0x8] sm:$0xff]
  %vm23 = vcmask 261120
  %v24 = vsel %vm23, %v21, 0.0
  %25 = vadd.xlane.f32.xlu0 %v24
  %v26 = vpop.xlane.xlu0 %25
  %v27 = vsel %vm23, %v22, 0.0
  %28 = vadd.xlane.f32.xlu0 %v27
  %v29 = vpop.xlane.xlu0 %28
  %v30 = vrcp.pop 32.0
  %v31 = vmul.f32 %v26, %v30
  %v32 = vmul.f32 %v29, %v30
  %v33 = vsub.f32 %v21, %v31
  %v34 = vsub.f32 %v22, %v32
  %v35 = vmul.f32 %v33, %v33
  %v36 = vmul.f32 %v34, %v34
  %v37 = vsel %vm23, %v35, 0.0
  %38 = vadd.xlane.f32.xlu0 %v37
  %v39 = vpop.xlane.xlu0 %38
  %v40 = vsel %vm23, %v36, 0.0
  %41 = vadd.xlane.f32.xlu0 %v40
  %v42 = vpop.xlane.xlu0 %41
  %v43 = vmul.f32 %v39, %v30
  %v44 = vmul.f32 %v42, %v30
  %v45 = vadd.f32 %v43, 1e-06
  %v46 = vadd.f32 %v44, 1e-06
  %v47 = vrsqrt.pop %v45
  %v48 = vrsqrt.pop %v46
  %v49 = vmul.f32 %v33, %v47
  %v50 = vmul.f32 %v34, %v48
  %v51 = vld [vmem:[%s1] sm:$0x1]
  %v53 = vlaneseq
  %v54 = vshrl.u32 %v53, 7
  %v55 = vsub.s32 0, %v54
  %v56 = vrot.slane %v51, %v55
  %v58 = vmul.f32 %v49, %v56
  %v59 = vmul.f32 %v50, %v56
  %v60 = vld [vmem:[%s2] sm:$0x1]
  %v62 = vlaneseq
  %v63 = vshrl.u32 %v62, 7
  %v64 = vsub.s32 0, %v63
  %v65 = vrot.slane %v60, %v64
  %v67 = vadd.f32 %v58, %v65
  %v68 = vadd.f32 %v59, %v65
  %v69 = vpack.c.bf16 %v68, %v67
  %v70 = vld [vmem:[%s3] sm:$0xf]
  %v71 = vld [vmem:[%s3 + $0x4] sm:$0xf]
  %v72 = vld [vmem:[%s3 + $0x8] sm:$0xf]
  %v73 = vld [vmem:[%s3 + $0xc] sm:$0xf]
  %v74 = vld [vmem:[%s4] sm:$0x1]
  %v76 = vlaneseq
  %v77 = vshrl.u32 %v76, 7
  %v78 = vsub.s32 0, %v77
  %v79 = vrot.slane %v74, %v78
  %v85 = vunpack.c.l.b16 %v70
  %v86 = vunpack.c.l.b16 %v71
  %v87 = vunpack.c.l.b16 %v72
  %v88 = vunpack.c.l.b16 %v73
  %v89 = vpack.c.b16 %v86, %v85
  %v90 = vpack.c.b16 %v88, %v87
  %v94 = vsel %vm23, %v69, 0
  %96 = vmatprep.subr.bf16.mxu0 0
  %97 = vmatpush1.bf16.msra.mxu0 %v89
  %98 = vmatprep.subr.bf16.mxu0 0
  %99 = vmatpush1.bf16.msra.mxu0 %v90
  %100 = vmatprep.subr.bf16.mxu0 0
  %101 = vmatpush1.bf16.msra.mxu0 0
  %102 = vmatprep.subr.bf16.mxu0 0
  %103 = vmatpush1.bf16.msra.mxu0 0
  %104 = vmatprep.subr.bf16.mxu0 0
  %105 = vmatpush1.bf16.msra.mxu0 0
  %106 = vmatprep.subr.bf16.mxu0 0
  %107 = vmatpush1.bf16.msra.mxu0 0
  %108 = vmatprep.subr.bf16.mxu0 0
  %109 = vmatpush1.bf16.msra.mxu0 0
  %110 = vmatprep.subr.bf16.mxu0 0
  %111 = vmatpush1.bf16.msra.mxu0 0
  %112 = vmatprep.subr.bf16.mxu0 0
  %113 = vmatpush1.bf16.msra.mxu0 0
  %114 = vmatprep.subr.bf16.mxu0 0
  %115 = vmatpush1.bf16.msra.mxu0 0
  %116 = vmatprep.subr.bf16.mxu0 0
  %117 = vmatpush1.bf16.msra.mxu0 0
  %118 = vmatprep.subr.bf16.mxu0 0
  %119 = vmatpush1.bf16.msra.mxu0 0
  %120 = vmatprep.subr.bf16.mxu0 0
  %121 = vmatpush1.bf16.msra.mxu0 0
  %122 = vmatprep.subr.bf16.mxu0 0
  %123 = vmatpush1.bf16.msra.mxu0 0
  %124 = vmatprep.subr.bf16.mxu0 0
  %125 = vmatpush1.bf16.msra.mxu0 0
  %126 = vmatprep.subr.bf16.mxu0 0
  %127 = vmatpush1.bf16.msra.mxu0 0
  %128 = vmatprep.mubr.bf16.mxu0 0
  %129 = vmatmul.mubr.bf16.gmra.mrb[0].mxu0 %v94
  %v130 = vpop.f32.mrb[0].mxu0
  %v131 = vadd.f32 %v79, %v130
  %v132 = vpop.f32.mrb[0].mxu0
  %v133 = vpop.f32.mrb[0].mxu0
  %v134 = vadd.f32 %v79, %v133
  %v135 = vpop.f32.mrb[0].mxu0
  %136 = vdwg.mxu0
  %v137 = vpack.c.bf16 %v134, %v131
  %v139 = vunpack.c.l.b16 %v137
  %v140 = vunpack.c.h.b16 %v137
  %v141 = vpack.c.b16 %v139, %v139
  %v142 = vpack.c.b16 %v140, %v140
  %vm145 = vcmask 257024
  %146 = vst.msk [vmem:[%s5] sm:$0xf] %vm145, %v141
  %147 = vst.msk [vmem:[%s5 + $0x4] sm:$0xf] %vm145, %v142
  // Predicated region
  $region22: #{multiway_contextual_attention.12} parent=0 // pred_check
    _
  $region23: #{multiway_contextual_attention.12} parent=0 // pred_check_branch
    %149 = sbr.rel (0) target = $region25
  $region24: #{multiway_contextual_attention.12} parent=0 // pred_region
    _
  $region25: #{multiway_contextual_attention.12} parent=0 // pred_fallthru
    _
  // Predicated region
  $region26: #{multiway_contextual_attention.12} parent=0 // pred_check
    _
  $region27: #{multiway_contextual_attention.12} parent=0 // pred_check_branch
    %151 = sbr.rel (0) target = $region29
  $region28: #{multiway_contextual_attention.12} parent=0 // pred_region
    _
  $region29: #{multiway_contextual_attention.12} parent=0 // pred_fallthru
    _

// kernel: multiway_contextual_attention.10
$region0: #{multiway_contextual_attention.10}
  #allocation0 [shape = 'u32[]', space=smem, size = 0x4, offset = 0x4, fixed_abs, tag = 'smem constant byte address 0x4 - core index']
  #allocation1 [shape = 'u32[144,128]{1,0:T(1,128)}', space=vmem, size = 0x12000, scoped, tag = 'internal scratch']
  %s0 = inlined_call_operand.vmem [shape: bf16[2,8,8,4], index: 0, kind: input, shape index: {}]
  %s1 = inlined_call_operand.vmem [shape: bf16[2,8,8,4], index: 1, kind: input, shape index: {}]
  %s2 = inlined_call_operand.vmem [shape: bf16[2,8,8,4], index: 2, kind: input, shape index: {}]
  %s3 = inlined_call_operand.vmem [shape: bf16[2,8,8,4], index: 3, kind: output, shape index: {}]
  %s4 = sld [smem:[#allocation0]]
  $region45: #{multiway_contextual_attention.10} parent=0
    _
  %s6 = ssub.s32 1, %s4
  %s7 = scalar_select 0, %s6, %s4
  loop: start=0, step=1, limit=4
  $region2: #{multiway_contextual_attention.10} parent=0 // loop_pre_header
    _
  $region3: #{multiway_contextual_attention.10} parent=0 // loop_header
    %s9 = sphi 0, %s13
    %p10 = scmp.ge.s32.totalorder %s9, 4
    %s19 = sphi 0, %s21
    %s22 = sphi 0, %s19
    %s23 = sphi 0, %s22
    %s39 = sphi 0, %s23
    %s45 = sphi 0, %s47
    %s48 = sphi 0, %s45
    %s49 = sphi 0, %s48
    %s65 = sphi 0, %s49
    %s71 = sphi 0, %s73
    %s74 = sphi 0, %s71
    %s75 = sphi 0, %s74
    %s91 = sphi 0, %s75
    %s97 = sphi 0, %s99
    %s100 = sphi 0, %s97
    %s101 = sphi 0, %s100
    %s117 = sphi 0, %s101
  $region4: #{multiway_contextual_attention.10} parent=0 // loop_header_branch
    %12 = sbr.rel (%p10) target = $region8
  $region5: #{multiway_contextual_attention.10} parent=0 // loop_body
    %s14 = ssub.s32 %s9, 1
    %s15 = ssub.s32 %s9, 2
    %s16 = sadd.s32 %s9, 1
    %s17 = ssub.s32 %s9, %s16
    %p18 = scmp.eq.s32.totalorder %s17, 0
    %s20 = sadd.s32 %s19, 1
    %s21 = scalar_select %p18, %s19, %s20
    %p24 = pneg %p18
    %p25 = scmp.eq.s32.totalorder %s9, 1
    %p26 = por %p24, %p25
    %p27 = scmp.ne.s32.totalorder %s19, %s22
    %p28 = scmp.eq.s32.totalorder %s9, 0
    %p29 = por %p27, %p28
    %p30 = scmp.ne.s32.totalorder %s19, %s22
    %p31 = scmp.eq.s32.totalorder %s14, 1
    %p32 = por %p30, %p31
    %p33 = scmp.ne.s32.totalorder %s22, %s23
    %p34 = scmp.eq.s32.totalorder %s14, 0
    %p35 = por %p33, %p34
    %p36 = scmp.ne.s32.totalorder %s22, %s23
    %p37 = scmp.eq.s32.totalorder %s15, 1
    %p38 = por %p36, %p37
    %p40 = scmp.ne.s32.totalorder %s23, %s39
    %p41 = scmp.eq.s32.totalorder %s15, 0
    %p42 = por %p40, %p41
    %s43 = ssub.s32 %s9, %s16
    %p44 = scmp.eq.s32.totalorder %s43, 0
    %s46 = sadd.s32 %s45, 1
    %s47 = scalar_select %p44, %s45, %s46
    %p50 = pneg %p44
    %p51 = scmp.eq.s32.totalorder %s9, 1
    %p52 = por %p50, %p51
    %p53 = scmp.ne.s32.totalorder %s45, %s48
    %p54 = scmp.eq.s32.totalorder %s9, 0
    %p55 = por %p53, %p54
    %p56 = scmp.ne.s32.totalorder %s45, %s48
    %p57 = scmp.eq.s32.totalorder %s14, 1
    %p58 = por %p56, %p57
    %p59 = scmp.ne.s32.totalorder %s48, %s49
    %p60 = scmp.eq.s32.totalorder %s14, 0
    %p61 = por %p59, %p60
    %p62 = scmp.ne.s32.totalorder %s48, %s49
    %p63 = scmp.eq.s32.totalorder %s15, 1
    %p64 = por %p62, %p63
    %p66 = scmp.ne.s32.totalorder %s49, %s65
    %p67 = scmp.eq.s32.totalorder %s15, 0
    %p68 = por %p66, %p67
    %s69 = ssub.s32 %s9, %s16
    %p70 = scmp.eq.s32.totalorder %s69, 0
    %s72 = sadd.s32 %s71, 1
    %s73 = scalar_select %p70, %s71, %s72
    %p76 = pneg %p70
    %p77 = scmp.eq.s32.totalorder %s9, 1
    %p78 = por %p76, %p77
    %p79 = scmp.ne.s32.totalorder %s71, %s74
    %p80 = scmp.eq.s32.totalorder %s9, 0
    %p81 = por %p79, %p80
    %p82 = scmp.ne.s32.totalorder %s71, %s74
    %p83 = scmp.eq.s32.totalorder %s14, 1
    %p84 = por %p82, %p83
    %p85 = scmp.ne.s32.totalorder %s74, %s75
    %p86 = scmp.eq.s32.totalorder %s14, 0
    %p87 = por %p85, %p86
    %p88 = scmp.ne.s32.totalorder %s74, %s75
    %p89 = scmp.eq.s32.totalorder %s15, 1
    %p90 = por %p88, %p89
    %p92 = scmp.ne.s32.totalorder %s75, %s91
    %p93 = scmp.eq.s32.totalorder %s15, 0
    %p94 = por %p92, %p93
    %s95 = ssub.s32 %s9, %s16
    %p96 = scmp.eq.s32.totalorder %s95, 0
    %s98 = sadd.s32 %s97, 1
    %s99 = scalar_select %p96, %s97, %s98
    %p102 = pneg %p96
    %p103 = scmp.eq.s32.totalorder %s9, 1
    %p104 = por %p102, %p103
    %p105 = scmp.ne.s32.totalorder %s97, %s100
    %p106 = scmp.eq.s32.totalorder %s9, 0
    %p107 = por %p105, %p106
    %p108 = scmp.ne.s32.totalorder %s97, %s100
    %p109 = scmp.eq.s32.totalorder %s14, 1
    %p110 = por %p108, %p109
    %p111 = scmp.ne.s32.totalorder %s100, %s101
    %p112 = scmp.eq.s32.totalorder %s14, 0
    %p113 = por %p111, %p112
    %p114 = scmp.ne.s32.totalorder %s100, %s101
    %p115 = scmp.eq.s32.totalorder %s15, 1
    %p116 = por %p114, %p115
    %p118 = scmp.ne.s32.totalorder %s101, %s117
    %p119 = scmp.eq.s32.totalorder %s15, 0
    %p120 = por %p118, %p119
    %p121 = scmp.le.s32.totalorder 1, %s9
    %p122 = scmp.lt.s32.totalorder %s9, 3
    %p123 = pnand %p121, %p122
    %p124 = pneg %p123
    // Predicated region
    $region9: #{multiway_contextual_attention.10} parent=5 // pred_check
      _
    $region10: #{multiway_contextual_attention.10} parent=5 // pred_check_branch
      %126 = sbr.rel (%p123) target = $region12
    $region11: #{multiway_contextual_attention.10} parent=5 // pred_region
      %s127 = ssub.s32 %s9, 1
    $region12: #{multiway_contextual_attention.10} parent=5 // pred_fallthru
      _
    %p128 = scmp.lt.s32.totalorder %s9, 2
    // Predicated region
    $region13: #{multiway_contextual_attention.10} parent=5 // pred_check
      %p129 = pneg %p128
    $region14: #{multiway_contextual_attention.10} parent=5 // pred_check_branch
      %131 = sbr.rel (%p129) target = $region16
    $region15: #{multiway_contextual_attention.10} parent=5 // pred_region
      // Predicated region
      $region17: #{multiway_contextual_attention.10} parent=15 // pred_check
        %p132 = pneg %p29
      $region18: #{multiway_contextual_attention.10} parent=15 // pred_check_branch
        %134 = sbr.rel (%p132) target = $region20
      $region19: #{multiway_contextual_attention.10} parent=15 // pred_region
        %p135 = scmp.lt.s32.totalorder %s9, 1
        %s136 = scalar_select %p135, %s9, 1
        %s137 = smul.addr %s136, 8
        %s138 = smul.addr %s137, 4
        %s139 = scalar_lea.vmem %s0, %s138
      $region20: #{multiway_contextual_attention.10} parent=15 // pred_fallthru
        _
      // Predicated region
      $region21: #{multiway_contextual_attention.10} parent=15 // pred_check
        %p140 = pneg %p55
      $region22: #{multiway_contextual_attention.10} parent=15 // pred_check_branch
        %142 = sbr.rel (%p140) target = $region24
      $region23: #{multiway_contextual_attention.10} parent=15 // pred_region
        %p143 = scmp.lt.s32.totalorder %s9, 1
        %s144 = scalar_select %p143, %s9, 1
        %s145 = smul.addr %s144, 8
        %s146 = smul.addr %s145, 4
        %s147 = scalar_lea.vmem %s1, %s146
      $region24: #{multiway_contextual_attention.10} parent=15 // pred_fallthru
        _
      // Predicated region
      $region25: #{multiway_contextual_attention.10} parent=15 // pred_check
        %p148 = pneg %p81
      $region26: #{multiway_contextual_attention.10} parent=15 // pred_check_branch
        %150 = sbr.rel (%p148) target = $region28
      $region27: #{multiway_contextual_attention.10} parent=15 // pred_region
        %p151 = scmp.lt.s32.totalorder %s9, 1
        %s152 = scalar_select %p151, %s9, 1
        %s153 = smul.addr %s152, 8
        %s154 = smul.addr %s153, 4
        %s155 = scalar_lea.vmem %s2, %s154
      $region28: #{multiway_contextual_attention.10} parent=15 // pred_fallthru
        _
    $region16: #{multiway_contextual_attention.10} parent=5 // pred_fallthru
      _
    %p156 = scmp.le.s32.totalorder 1, %s9
    %p157 = scmp.lt.s32.totalorder %s9, 3
    %p158 = pnand %p156, %p157
    %p159 = pneg %p158
    // Predicated region
    $region29: #{multiway_contextual_attention.10} parent=5 // pred_check
      _
    $region30: #{multiway_contextual_attention.10} parent=5 // pred_check_branch
      %161 = sbr.rel (%p158) target = $region32
    $region31: #{multiway_contextual_attention.10} parent=5 // pred_region
      %s162 = ssub.s32 %s9, 1
      %p163 = scmp.lt.s32.totalorder %s14, 1
      %s164 = scalar_select %p163, %s14, 1
      %s165 = smul.addr %s164, 8
      %s166 = smul.addr %s165, 4
      %s167 = scalar_lea.vmem %s0, %s166
      %p168 = pneg %p35
      %p169 = pneg %p32
      %p170 = scmp.lt.s32.totalorder %s14, 1
      %s171 = scalar_select %p170, %s14, 1
      %s172 = smul.addr %s171, 8
      %s173 = smul.addr %s172, 4
      %s174 = scalar_lea.vmem %s1, %s173
      %p175 = pneg %p61
      %p176 = pneg %p58
      %p177 = scmp.lt.s32.totalorder %s14, 1
      %s178 = scalar_select %p177, %s14, 1
      %s179 = smul.addr %s178, 8
      %s180 = smul.addr %s179, 4
      %s181 = scalar_lea.vmem %s2, %s180
      %p182 = pneg %p87
      %p183 = pneg %p84
      %p184 = pneg %p113
      %p185 = pneg %p110
      %p186 = scmp.lt.s32.totalorder %s14, 1
      %s187 = scalar_select %p186, %s14, 1
      %s188 = smul.addr %s187, 8
      %s189 = smul.addr %s188, 4
      %s190 = scalar_lea.vmem %s3, %s189
      %p191 = scmp.lt.s32.totalorder %s14, 1
      %s192 = scalar_select %p191, %s14, 1
      %s193 = smul.addr %s192, 8
      %s194 = smul.addr %s193, 4
      %s195 = scalar_lea.vmem %s0, %s194
      %p196 = scmp.lt.s32.totalorder %s14, 1
      %s197 = scalar_select %p196, %s14, 1
      %s198 = smul.addr %s197, 8
      %s199 = smul.addr %s198, 4
      %s200 = scalar_lea.vmem %s1, %s199
      %p201 = scmp.lt.s32.totalorder %s14, 1
      %s202 = scalar_select %p201, %s14, 1
      %s203 = smul.addr %s202, 8
      %s204 = smul.addr %s203, 4
      %s205 = scalar_lea.vmem %s2, %s204
      %p206 = scmp.lt.s32.totalorder %s14, 1
      %s207 = scalar_select %p206, %s14, 1
      %s208 = smul.addr %s207, 8
      %s209 = smul.addr %s208, 4
      %s210 = scalar_lea.vmem %s3, %s209
      %v212 = vld [vmem:[%s195] sm:$0xf]
      %v213 = vld [vmem:[%s195 + $0x4] sm:$0xf]
      %v214 = vld [vmem:[%s195 + $0x8] sm:$0xf]
      %v215 = vld [vmem:[%s195 + $0xc] sm:$0xf]
      %v216 = vld [vmem:[%s195 + $0x10] sm:$0xf]
      %v217 = vld [vmem:[%s195 + $0x14] sm:$0xf]
      %v218 = vld [vmem:[%s195 + $0x18] sm:$0xf]
      %v219 = vld [vmem:[%s195 + $0x1c] sm:$0xf]
      %v220 = vld [vmem:[%s200] sm:$0xf]
      %v221 = vld [vmem:[%s200 + $0x4] sm:$0xf]
      %v222 = vld [vmem:[%s200 + $0x8] sm:$0xf]
      %v223 = vld [vmem:[%s200 + $0xc] sm:$0xf]
      %v224 = vld [vmem:[%s200 + $0x10] sm:$0xf]
      %v225 = vld [vmem:[%s200 + $0x14] sm:$0xf]
      %v226 = vld [vmem:[%s200 + $0x18] sm:$0xf]
      %v227 = vld [vmem:[%s200 + $0x1c] sm:$0xf]
      %v228 = vld [vmem:[%s205] sm:$0xf]
      %v229 = vld [vmem:[%s205 + $0x4] sm:$0xf]
      %v230 = vld [vmem:[%s205 + $0x8] sm:$0xf]
      %v231 = vld [vmem:[%s205 + $0xc] sm:$0xf]
      %v232 = vld [vmem:[%s205 + $0x10] sm:$0xf]
      %v233 = vld [vmem:[%s205 + $0x14] sm:$0xf]
      %v234 = vld [vmem:[%s205 + $0x18] sm:$0xf]
      %v235 = vld [vmem:[%s205 + $0x1c] sm:$0xf]
      %vm236 = vcmask 31744
      %v238 = vsel %vm236, %v212, 0
      %v241 = vsel %vm236, %v220, 0
      %243 = vmatprep.subr.bf16.mxu0 0
      %244 = vmatpush1.bf16.xpose.msra.mxu0 %v241
      %245 = vmatprep.subr.bf16.mxu0 0
      %246 = vmatpush1.bf16.xpose.msra.mxu0 0
      %247 = vmatprep.subr.bf16.mxu0 0
      %248 = vmatpush1.bf16.xpose.msra.mxu0 0
      %249 = vmatprep.subr.bf16.mxu0 0
      %250 = vmatpush1.bf16.xpose.msra.mxu0 0
      %251 = vmatprep.subr.bf16.mxu0 0
      %252 = vmatpush1.bf16.xpose.msra.mxu0 0
      %253 = vmatprep.subr.bf16.mxu0 0
      %254 = vmatpush1.bf16.xpose.msra.mxu0 0
      %255 = vmatprep.subr.bf16.mxu0 0
      %256 = vmatpush1.bf16.xpose.msra.mxu0 0
      %257 = vmatprep.subr.bf16.mxu0 0
      %258 = vmatpush1.bf16.xpose.msra.mxu0 0
      %259 = vmatprep.subr.bf16.mxu0 0
      %260 = vmatpush1.bf16.xpose.msra.mxu0 0
      %261 = vmatprep.subr.bf16.mxu0 0
      %262 = vmatpush1.bf16.xpose.msra.mxu0 0
      %263 = vmatprep.subr.bf16.mxu0 0
      %264 = vmatpush1.bf16.xpose.msra.mxu0 0
      %265 = vmatprep.subr.bf16.mxu0 0
      %266 = vmatpush1.bf16.xpose.msra.mxu0 0
      %267 = vmatprep.subr.bf16.mxu0 0
      %268 = vmatpush1.bf16.xpose.msra.mxu0 0
      %269 = vmatprep.subr.bf16.mxu0 0
      %270 = vmatpush1.bf16.xpose.msra.mxu0 0
      %271 = vmatprep.subr.bf16.mxu0 0
      %272 = vmatpush1.bf16.xpose.msra.mxu0 0
      %273 = vmatprep.subr.bf16.mxu0 0
      %274 = vmatpush1.bf16.xpose.msra.mxu0 0
      %275 = vmatprep.mubr.bf16.mxu0 0
      %276 = vmatmul.mubr.bf16.gmra.mrb[0].mxu0 %v238
      %v277 = vpop.f32.mrb[0].mxu0
      %v278 = vadd.f32 0.0, %v277
      %v279 = vpop.f32.mrb[0].mxu0
      %v280 = vpop.f32.mrb[0].mxu0
      %v281 = vpop.f32.mrb[0].mxu0
      %282 = vdwg.mxu0
      %v284 = vsel %vm236, %v213, 0
      %v287 = vsel %vm236, %v221, 0
      %289 = vmatprep.subr.bf16.mxu0 0
      %290 = vmatpush1.bf16.xpose.msra.mxu0 %v287
      %291 = vmatprep.subr.bf16.mxu0 0
      %292 = vmatpush1.bf16.xpose.msra.mxu0 0
      %293 = vmatprep.subr.bf16.mxu0 0
      %294 = vmatpush1.bf16.xpose.msra.mxu0 0
      %295 = vmatprep.subr.bf16.mxu0 0
      %296 = vmatpush1.bf16.xpose.msra.mxu0 0
      %297 = vmatprep.subr.bf16.mxu0 0
      %298 = vmatpush1.bf16.xpose.msra.mxu0 0
      %299 = vmatprep.subr.bf16.mxu0 0
      %300 = vmatpush1.bf16.xpose.msra.mxu0 0
      %301 = vmatprep.subr.bf16.mxu0 0
      %302 = vmatpush1.bf16.xpose.msra.mxu0 0
      %303 = vmatprep.subr.bf16.mxu0 0
      %304 = vmatpush1.bf16.xpose.msra.mxu0 0
      %305 = vmatprep.subr.bf16.mxu0 0
      %306 = vmatpush1.bf16.xpose.msra.mxu0 0
      %307 = vmatprep.subr.bf16.mxu0 0
      %308 = vmatpush1.bf16.xpose.msra.mxu0 0
      %309 = vmatprep.subr.bf16.mxu0 0
      %310 = vmatpush1.bf16.xpose.msra.mxu0 0
      %311 = vmatprep.subr.bf16.mxu0 0
      %312 = vmatpush1.bf16.xpose.msra.mxu0 0
      %313 = vmatprep.subr.bf16.mxu0 0
      %314 = vmatpush1.bf16.xpose.msra.mxu0 0
      %315 = vmatprep.subr.bf16.mxu0 0
      %316 = vmatpush1.bf16.xpose.msra.mxu0 0
      %317 = vmatprep.subr.bf16.mxu0 0
      %318 = vmatpush1.bf16.xpose.msra.mxu0 0
      %319 = vmatprep.subr.bf16.mxu0 0
      %320 = vmatpush1.bf16.xpose.msra.mxu0 0
      %321 = vmatprep.mubr.bf16.mxu0 0
      %322 = vmatmul.mubr.bf16.gmra.mrb[0].mxu0 %v284
      %v323 = vpop.f32.mrb[0].mxu0
      %v324 = vadd.f32 0.0, %v323
      %v325 = vpop.f32.mrb[0].mxu0
      %v326 = vpop.f32.mrb[0].mxu0
      %v327 = vpop.f32.mrb[0].mxu0
      %328 = vdwg.mxu0
      %v330 = vsel %vm236, %v214, 0
      %v333 = vsel %vm236, %v222, 0
      %335 = vmatprep.subr.bf16.mxu0 0
      %336 = vmatpush1.bf16.xpose.msra.mxu0 %v333
      %337 = vmatprep.subr.bf16.mxu0 0
      %338 = vmatpush1.bf16.xpose.msra.mxu0 0
      %339 = vmatprep.subr.bf16.mxu0 0
      %340 = vmatpush1.bf16.xpose.msra.mxu0 0
      %341 = vmatprep.subr.bf16.mxu0 0
      %342 = vmatpush1.bf16.xpose.msra.mxu0 0
      %343 = vmatprep.subr.bf16.mxu0 0
      %344 = vmatpush1.bf16.xpose.msra.mxu0 0
      %345 = vmatprep.subr.bf16.mxu0 0
      %346 = vmatpush1.bf16.xpose.msra.mxu0 0
      %347 = vmatprep.subr.bf16.mxu0 0
      %348 = vmatpush1.bf16.xpose.msra.mxu0 0
      %349 = vmatprep.subr.bf16.mxu0 0
      %350 = vmatpush1.bf16.xpose.msra.mxu0 0
      %351 = vmatprep.subr.bf16.mxu0 0
      %352 = vmatpush1.bf16.xpose.msra.mxu0 0
      %353 = vmatprep.subr.bf16.mxu0 0
      %354 = vmatpush1.bf16.xpose.msra.mxu0 0
      %355 = vmatprep.subr.bf16.mxu0 0
      %356 = vmatpush1.bf16.xpose.msra.mxu0 0
      %357 = vmatprep.subr.bf16.mxu0 0
      %358 = vmatpush1.bf16.xpose.msra.mxu0 0
      %359 = vmatprep.subr.bf16.mxu0 0
      %360 = vmatpush1.bf16.xpose.msra.mxu0 0
      %361 = vmatprep.subr.bf16.mxu0 0
      %362 = vmatpush1.bf16.xpose.msra.mxu0 0
      %363 = vmatprep.subr.bf16.mxu0 0
      %364 = vmatpush1.bf16.xpose.msra.mxu0 0
      %365 = vmatprep.subr.bf16.mxu0 0
      %366 = vmatpush1.bf16.xpose.msra.mxu0 0
      %367 = vmatprep.mubr.bf16.mxu0 0
      %368 = vmatmul.mubr.bf16.gmra.mrb[0].mxu0 %v330
      %v369 = vpop.f32.mrb[0].mxu0
      %v370 = vadd.f32 0.0, %v369
      %v371 = vpop.f32.mrb[0].mxu0
      %v372 = vpop.f32.mrb[0].mxu0
      %v373 = vpop.f32.mrb[0].mxu0
      %374 = vdwg.mxu0
      %v376 = vsel %vm236, %v215, 0
      %v379 = vsel %vm236, %v223, 0
      %381 = vmatprep.subr.bf16.mxu0 0
      %382 = vmatpush1.bf16.xpose.msra.mxu0 %v379
      %383 = vmatprep.subr.bf16.mxu0 0
      %384 = vmatpush1.bf16.xpose.msra.mxu0 0
      %385 = vmatprep.subr.bf16.mxu0 0
      %386 = vmatpush1.bf16.xpose.msra.mxu0 0
      %387 = vmatprep.subr.bf16.mxu0 0
      %388 = vmatpush1.bf16.xpose.msra.mxu0 0
      %389 = vmatprep.subr.bf16.mxu0 0
      %390 = vmatpush1.bf16.xpose.msra.mxu0 0
      %391 = vmatprep.subr.bf16.mxu0 0
      %392 = vmatpush1.bf16.xpose.msra.mxu0 0
      %393 = vmatprep.subr.bf16.mxu0 0
      %394 = vmatpush1.bf16.xpose.msra.mxu0 0
      %395 = vmatprep.subr.bf16.mxu0 0
      %396 = vmatpush1.bf16.xpose.msra.mxu0 0
      %397 = vmatprep.subr.bf16.mxu0 0
      %398 = vmatpush1.bf16.xpose.msra.mxu0 0
      %399 = vmatprep.subr.bf16.mxu0 0
      %400 = vmatpush1.bf16.xpose.msra.mxu0 0
      %401 = vmatprep.subr.bf16.mxu0 0
      %402 = vmatpush1.bf16.xpose.msra.mxu0 0
      %403 = vmatprep.subr.bf16.mxu0 0
      %404 = vmatpush1.bf16.xpose.msra.mxu0 0
      %405 = vmatprep.subr.bf16.mxu0 0
      %406 = vmatpush1.bf16.xpose.msra.mxu0 0
      %407 = vmatprep.subr.bf16.mxu0 0
      %408 = vmatpush1.bf16.xpose.msra.mxu0 0
      %409 = vmatprep.subr.bf16.mxu0 0
      %410 = vmatpush1.bf16.xpose.msra.mxu0 0
      %411 = vmatprep.subr.bf16.mxu0 0
      %412 = vmatpush1.bf16.xpose.msra.mxu0 0
      %413 = vmatprep.mubr.bf16.mxu0 0
      %414 = vmatmul.mubr.bf16.gmra.mrb[0].mxu0 %v376
      %v415 = vpop.f32.mrb[0].mxu0
      %v416 = vadd.f32 0.0, %v415
      %v417 = vpop.f32.mrb[0].mxu0
      %v418 = vpop.f32.mrb[0].mxu0
      %v419 = vpop.f32.mrb[0].mxu0
      %420 = vdwg.mxu0
      %v422 = vsel %vm236, %v216, 0
      %v425 = vsel %vm236, %v224, 0
      %427 = vmatprep.subr.bf16.mxu0 0
      %428 = vmatpush1.bf16.xpose.msra.mxu0 %v425
      %429 = vmatprep.subr.bf16.mxu0 0
      %430 = vmatpush1.bf16.xpose.msra.mxu0 0
      %431 = vmatprep.subr.bf16.mxu0 0
      %432 = vmatpush1.bf16.xpose.msra.mxu0 0
      %433 = vmatprep.subr.bf16.mxu0 0
      %434 = vmatpush1.bf16.xpose.msra.mxu0 0
      %435 = vmatprep.subr.bf16.mxu0 0
      %436 = vmatpush1.bf16.xpose.msra.mxu0 0
      %437 = vmatprep.subr.bf16.mxu0 0
      %438 = vmatpush1.bf16.xpose.msra.mxu0 0
      %439 = vmatprep.subr.bf16.mxu0 0
      %440 = vmatpush1.bf16.xpose.msra.mxu0 0
      %441 = vmatprep.subr.bf16.mxu0 0
      %442 = vmatpush1.bf16.xpose.msra.mxu0 0
      %443 = vmatprep.subr.bf16.mxu0 0
      %444 = vmatpush1.bf16.xpose.msra.mxu0 0
      %445 = vmatprep.subr.bf16.mxu0 0
      %446 = vmatpush1.bf16.xpose.msra.mxu0 0
      %447 = vmatprep.subr.bf16.mxu0 0
      %448 = vmatpush1.bf16.xpose.msra.mxu0 0
      %449 = vmatprep.subr.bf16.mxu0 0
      %450 = vmatpush1.bf16.xpose.msra.mxu0 0
      %451 = vmatprep.subr.bf16.mxu0 0
      %452 = vmatpush1.bf16.xpose.msra.mxu0 0
      %453 = vmatprep.subr.bf16.mxu0 0
      %454 = vmatpush1.bf16.xpose.msra.mxu0 0
      %455 = vmatprep.subr.bf16.mxu0 0
      %456 = vmatpush1.bf16.xpose.msra.mxu0 0
      %457 = vmatprep.subr.bf16.mxu0 0
      %458 = vmatpush1.bf16.xpose.msra.mxu0 0
      %459 = vmatprep.mubr.bf16.mxu0 0
      %460 = vmatmul.mubr.bf16.gmra.mrb[0].mxu0 %v422
      %v461 = vpop.f32.mrb[0].mxu0
      %v462 = vadd.f32 0.0, %v461
      %v463 = vpop.f32.mrb[0].mxu0
      %v464 = vpop.f32.mrb[0].mxu0
      %v465 = vpop.f32.mrb[0].mxu0
      %466 = vdwg.mxu0
      %v468 = vsel %vm236, %v217, 0
      %v471 = vsel %vm236, %v225, 0
      %473 = vmatprep.subr.bf16.mxu0 0
      %474 = vmatpush1.bf16.xpose.msra.mxu0 %v471
      %475 = vmatprep.subr.bf16.mxu0 0
      %476 = vmatpush1.bf16.xpose.msra.mxu0 0
      %477 = vmatprep.subr.bf16.mxu0 0
      %478 = vmatpush1.bf16.xpose.msra.mxu0 0
      %479 = vmatprep.subr.bf16.mxu0 0
      %480 = vmatpush1.bf16.xpose.msra.mxu0 0
      %481 = vmatprep.subr.bf16.mxu0 0
      %482 = vmatpush1.bf16.xpose.msra.mxu0 0
      %483 = vmatprep.subr.bf16.mxu0 0
      %484 = vmatpush1.bf16.xpose.msra.mxu0 0
      %485 = vmatprep.subr.bf16.mxu0 0
      %486 = vmatpush1.bf16.xpose.msra.mxu0 0
      %487 = vmatprep.subr.bf16.mxu0 0
      %488 = vmatpush1.bf16.xpose.msra.mxu0 0
      %489 = vmatprep.subr.bf16.mxu0 0
      %490 = vmatpush1.bf16.xpose.msra.mxu0 0
      %491 = vmatprep.subr.bf16.mxu0 0
      %492 = vmatpush1.bf16.xpose.msra.mxu0 0
      %493 = vmatprep.subr.bf16.mxu0 0
      %494 = vmatpush1.bf16.xpose.msra.mxu0 0
      %495 = vmatprep.subr.bf16.mxu0 0
      %496 = vmatpush1.bf16.xpose.msra.mxu0 0
      %497 = vmatprep.subr.bf16.mxu0 0
      %498 = vmatpush1.bf16.xpose.msra.mxu0 0
      %499 = vmatprep.subr.bf16.mxu0 0
      %500 = vmatpush1.bf16.xpose.msra.mxu0 0
      %501 = vmatprep.subr.bf16.mxu0 0
      %502 = vmatpush1.bf16.xpose.msra.mxu0 0
      %503 = vmatprep.subr.bf16.mxu0 0
      %504 = vmatpush1.bf16.xpose.msra.mxu0 0
      %505 = vmatprep.mubr.bf16.mxu0 0
      %506 = vmatmul.mubr.bf16.gmra.mrb[0].mxu0 %v468
      %v507 = vpop.f32.mrb[0].mxu0
      %v508 = vadd.f32 0.0, %v507
      %v509 = vpop.f32.mrb[0].mxu0
      %v510 = vpop.f32.mrb[0].mxu0
      %v511 = vpop.f32.mrb[0].mxu0
      %512 = vdwg.mxu0
      %v514 = vsel %vm236, %v218, 0
      %v517 = vsel %vm236, %v226, 0
      %519 = vmatprep.subr.bf16.mxu0 0
      %520 = vmatpush1.bf16.xpose.msra.mxu0 %v517
      %521 = vmatprep.subr.bf16.mxu0 0
      %522 = vmatpush1.bf16.xpose.msra.mxu0 0
      %523 = vmatprep.subr.bf16.mxu0 0
      %524 = vmatpush1.bf16.xpose.msra.mxu0 0
      %525 = vmatprep.subr.bf16.mxu0 0
      %526 = vmatpush1.bf16.xpose.msra.mxu0 0
      %527 = vmatprep.subr.bf16.mxu0 0
      %528 = vmatpush1.bf16.xpose.msra.mxu0 0
      %529 = vmatprep.subr.bf16.mxu0 0
      %530 = vmatpush1.bf16.xpose.msra.mxu0 0
      %531 = vmatprep.subr.bf16.mxu0 0
      %532 = vmatpush1.bf16.xpose.msra.mxu0 0
      %533 = vmatprep.subr.bf16.mxu0 0
      %534 = vmatpush1.bf16.xpose.msra.mxu0 0
      %535 = vmatprep.subr.bf16.mxu0 0
      %536 = vmatpush1.bf16.xpose.msra.mxu0 0
      %537 = vmatprep.subr.bf16.mxu0 0
      %538 = vmatpush1.bf16.xpose.msra.mxu0 0
      %539 = vmatprep.subr.bf16.mxu0 0
      %540 = vmatpush1.bf16.xpose.msra.mxu0 0
      %541 = vmatprep.subr.bf16.mxu0 0
      %542 = vmatpush1.bf16.xpose.msra.mxu0 0
      %543 = vmatprep.subr.bf16.mxu0 0
      %544 = vmatpush1.bf16.xpose.msra.mxu0 0
      %545 = vmatprep.subr.bf16.mxu0 0
      %546 = vmatpush1.bf16.xpose.msra.mxu0 0
      %547 = vmatprep.subr.bf16.mxu0 0
      %548 = vmatpush1.bf16.xpose.msra.mxu0 0
      %549 = vmatprep.subr.bf16.mxu0 0
      %550 = vmatpush1.bf16.xpose.msra.mxu0 0
      %551 = vmatprep.mubr.bf16.mxu0 0
      %552 = vmatmul.mubr.bf16.gmra.mrb[0].mxu0 %v514
      %v553 = vpop.f32.mrb[0].mxu0
      %v554 = vadd.f32 0.0, %v553
      %v555 = vpop.f32.mrb[0].mxu0
      %v556 = vpop.f32.mrb[0].mxu0
      %v557 = vpop.f32.mrb[0].mxu0
      %558 = vdwg.mxu0
      %v560 = vsel %vm236, %v219, 0
      %v563 = vsel %vm236, %v227, 0
      %565 = vmatprep.subr.bf16.mxu0 0
      %566 = vmatpush1.bf16.xpose.msra.mxu0 %v563
      %567 = vmatprep.subr.bf16.mxu0 0
      %568 = vmatpush1.bf16.xpose.msra.mxu0 0
      %569 = vmatprep.subr.bf16.mxu0 0
      %570 = vmatpush1.bf16.xpose.msra.mxu0 0
      %571 = vmatprep.subr.bf16.mxu0 0
      %572 = vmatpush1.bf16.xpose.msra.mxu0 0
      %573 = vmatprep.subr.bf16.mxu0 0
      %574 = vmatpush1.bf16.xpose.msra.mxu0 0
      %575 = vmatprep.subr.bf16.mxu0 0
      %576 = vmatpush1.bf16.xpose.msra.mxu0 0
      %577 = vmatprep.subr.bf16.mxu0 0
      %578 = vmatpush1.bf16.xpose.msra.mxu0 0
      %579 = vmatprep.subr.bf16.mxu0 0
      %580 = vmatpush1.bf16.xpose.msra.mxu0 0
      %581 = vmatprep.subr.bf16.mxu0 0
      %582 = vmatpush1.bf16.xpose.msra.mxu0 0
      %583 = vmatprep.subr.bf16.mxu0 0
      %584 = vmatpush1.bf16.xpose.msra.mxu0 0
      %585 = vmatprep.subr.bf16.mxu0 0
      %586 = vmatpush1.bf16.xpose.msra.mxu0 0
      %587 = vmatprep.subr.bf16.mxu0 0
      %588 = vmatpush1.bf16.xpose.msra.mxu0 0
      %589 = vmatprep.subr.bf16.mxu0 0
      %590 = vmatpush1.bf16.xpose.msra.mxu0 0
      %591 = vmatprep.subr.bf16.mxu0 0
      %592 = vmatpush1.bf16.xpose.msra.mxu0 0
      %593 = vmatprep.subr.bf16.mxu0 0
      %594 = vmatpush1.bf16.xpose.msra.mxu0 0
      %595 = vmatprep.subr.bf16.mxu0 0
      %596 = vmatpush1.bf16.xpose.msra.mxu0 0
      %597 = vmatprep.mubr.bf16.mxu0 0
      %598 = vmatmul.mubr.bf16.gmra.mrb[0].mxu0 %v560
      %v599 = vpop.f32.mrb[0].mxu0
      %v600 = vadd.f32 0.0, %v599
      %v601 = vpop.f32.mrb[0].mxu0
      %v602 = vpop.f32.mrb[0].mxu0
      %v603 = vpop.f32.mrb[0].mxu0
      %604 = vdwg.mxu0
      %v605 = vmul.f32 %v278, 0.5
      %v606 = vmul.f32 %v324, 0.5
      %v607 = vmul.f32 %v370, 0.5
      %v608 = vmul.f32 %v416, 0.5
      %v609 = vmul.f32 %v462, 0.5
      %v610 = vmul.f32 %v508, 0.5
      %v611 = vmul.f32 %v554, 0.5
      %v612 = vmul.f32 %v600, 0.5
      %vm613 = vcmask 64512
      %v614 = vsel %vm613, %v605, -inf
      %615 = vmax.xlane.f32.xlu0 %v614
      %v616 = vpop.xlane.xlu0 %615
      %v617 = vsel %vm613, %v606, -inf
      %618 = vmax.xlane.f32.xlu0 %v617
      %v619 = vpop.xlane.xlu0 %618
      %v620 = vsel %vm613, %v607, -inf
      %621 = vmax.xlane.f32.xlu0 %v620
      %v622 = vpop.xlane.xlu0 %621
      %v623 = vsel %vm613, %v608, -inf
      %624 = vmax.xlane.f32.xlu0 %v623
      %v625 = vpop.xlane.xlu0 %624
      %v626 = vsel %vm613, %v609, -inf
      %627 = vmax.xlane.f32.xlu0 %v626
      %v628 = vpop.xlane.xlu0 %627
      %v629 = vsel %vm613, %v610, -inf
      %630 = vmax.xlane.f32.xlu0 %v629
      %v631 = vpop.xlane.xlu0 %630
      %v632 = vsel %vm613, %v611, -inf
      %633 = vmax.xlane.f32.xlu0 %v632
      %v634 = vpop.xlane.xlu0 %633
      %v635 = vsel %vm613, %v612, -inf
      %636 = vmax.xlane.f32.xlu0 %v635
      %v637 = vpop.xlane.xlu0 %636
      %v638 = vsub.f32 %v605, %v616
      %v639 = vsub.f32 %v606, %v619
      %v640 = vsub.f32 %v607, %v622
      %v641 = vsub.f32 %v608, %v625
      %v642 = vsub.f32 %v609, %v628
      %v643 = vsub.f32 %v610, %v631
      %v644 = vsub.f32 %v611, %v634
      %v645 = vsub.f32 %v612, %v637
      %v646 = vmul.f32 %v638, 1.442695
      %v647 = vpow.pop %v646
      %v648 = vmul.f32 %v639, 1.442695
      %v649 = vpow.pop %v648
      %v650 = vmul.f32 %v640, 1.442695
      %v651 = vpow.pop %v650
      %v652 = vmul.f32 %v641, 1.442695
      %v653 = vpow.pop %v652
      %v654 = vmul.f32 %v642, 1.442695
      %v655 = vpow.pop %v654
      %v656 = vmul.f32 %v643, 1.442695
      %v657 = vpow.pop %v656
      %v658 = vmul.f32 %v644, 1.442695
      %v659 = vpow.pop %v658
      %v660 = vmul.f32 %v645, 1.442695
      %v661 = vpow.pop %v660
      %v662 = vsel %vm613, %v647, 0.0
      %663 = vadd.xlane.f32.xlu0 %v662
      %v664 = vpop.xlane.xlu0 %663
      %v665 = vsel %vm613, %v649, 0.0
      %666 = vadd.xlane.f32.xlu0 %v665
      %v667 = vpop.xlane.xlu0 %666
      %v668 = vsel %vm613, %v651, 0.0
      %669 = vadd.xlane.f32.xlu0 %v668
      %v670 = vpop.xlane.xlu0 %669
      %v671 = vsel %vm613, %v653, 0.0
      %672 = vadd.xlane.f32.xlu0 %v671
      %v673 = vpop.xlane.xlu0 %672
      %v674 = vsel %vm613, %v655, 0.0
      %675 = vadd.xlane.f32.xlu0 %v674
      %v676 = vpop.xlane.xlu0 %675
      %v677 = vsel %vm613, %v657, 0.0
      %678 = vadd.xlane.f32.xlu0 %v677
      %v679 = vpop.xlane.xlu0 %678
      %v680 = vsel %vm613, %v659, 0.0
      %681 = vadd.xlane.f32.xlu0 %v680
      %v682 = vpop.xlane.xlu0 %681
      %v683 = vsel %vm613, %v661, 0.0
      %684 = vadd.xlane.f32.xlu0 %v683
      %v685 = vpop.xlane.xlu0 %684
      %v686 = vrcp.pop %v664
      %v687 = vrcp.pop %v667
      %v688 = vrcp.pop %v670
      %v689 = vrcp.pop %v673
      %v690 = vrcp.pop %v676
      %v691 = vrcp.pop %v679
      %v692 = vrcp.pop %v682
      %v693 = vrcp.pop %v685
      %v694 = vmul.f32 %v647, %v686
      %v695 = vmul.f32 %v649, %v687
      %v696 = vmul.f32 %v651, %v688
      %v697 = vmul.f32 %v653, %v689
      %v698 = vmul.f32 %v655, %v690
      %v699 = vmul.f32 %v657, %v691
      %v700 = vmul.f32 %v659, %v692
      %v701 = vmul.f32 %v661, %v693
      %v702 = vpack.c.bf16 %v694, %v694
      %v703 = vpack.c.bf16 %v695, %v695
      %v704 = vpack.c.bf16 %v696, %v696
      %v705 = vpack.c.bf16 %v697, %v697
      %v706 = vpack.c.bf16 %v698, %v698
      %v707 = vpack.c.bf16 %v699, %v699
      %v708 = vpack.c.bf16 %v700, %v700
      %v709 = vpack.c.bf16 %v701, %v701
      %v711 = vsel %vm613, %v702, 0
      %vm713 = vcmask 1043456
      %v715 = vsel %vm713, %v228, 0
      %717 = vmatprep.subr.bf16.mxu0 0
      %718 = vmatpush1.bf16.msra.mxu0 %v715
      %719 = vmatprep.subr.bf16.mxu0 0
      %720 = vmatpush1.bf16.msra.mxu0 0
      %721 = vmatprep.subr.bf16.mxu0 0
      %722 = vmatpush1.bf16.msra.mxu0 0
      %723 = vmatprep.subr.bf16.mxu0 0
      %724 = vmatpush1.bf16.msra.mxu0 0
      %725 = vmatprep.subr.bf16.mxu0 0
      %726 = vmatpush1.bf16.msra.mxu0 0
      %727 = vmatprep.subr.bf16.mxu0 0
      %728 = vmatpush1.bf16.msra.mxu0 0
      %729 = vmatprep.subr.bf16.mxu0 0
      %730 = vmatpush1.bf16.msra.mxu0 0
      %731 = vmatprep.subr.bf16.mxu0 0
      %732 = vmatpush1.bf16.msra.mxu0 0
      %733 = vmatprep.subr.bf16.mxu0 0
      %734 = vmatpush1.bf16.msra.mxu0 0
      %735 = vmatprep.subr.bf16.mxu0 0
      %736 = vmatpush1.bf16.msra.mxu0 0
      %737 = vmatprep.subr.bf16.mxu0 0
      %738 = vmatpush1.bf16.msra.mxu0 0
      %739 = vmatprep.subr.bf16.mxu0 0
      %740 = vmatpush1.bf16.msra.mxu0 0
      %741 = vmatprep.subr.bf16.mxu0 0
      %742 = vmatpush1.bf16.msra.mxu0 0
      %743 = vmatprep.subr.bf16.mxu0 0
      %744 = vmatpush1.bf16.msra.mxu0 0
      %745 = vmatprep.subr.bf16.mxu0 0
      %746 = vmatpush1.bf16.msra.mxu0 0
      %747 = vmatprep.subr.bf16.mxu0 0
      %748 = vmatpush1.bf16.msra.mxu0 0
      %749 = vmatprep.mubr.bf16.mxu0 0
      %750 = vmatmul.mubr.bf16.gmra.mrb[0].mxu0 %v711
      %v751 = vpop.f32.mrb[0].mxu0
      %v752 = vadd.f32 0.0, %v751
      %v753 = vpop.f32.mrb[0].mxu0
      %v754 = vpop.f32.mrb[0].mxu0
      %v755 = vpop.f32.mrb[0].mxu0
      %756 = vdwg.mxu0
      %v758 = vsel %vm613, %v703, 0
      %v761 = vsel %vm713, %v229, 0
      %763 = vmatprep.subr.bf16.mxu0 0
      %764 = vmatpush1.bf16.msra.mxu0 %v761
      %765 = vmatprep.subr.bf16.mxu0 0
      %766 = vmatpush1.bf16.msra.mxu0 0
      %767 = vmatprep.subr.bf16.mxu0 0
      %768 = vmatpush1.bf16.msra.mxu0 0
      %769 = vmatprep.subr.bf16.mxu0 0
      %770 = vmatpush1.bf16.msra.mxu0 0
      %771 = vmatprep.subr.bf16.mxu0 0
      %772 = vmatpush1.bf16.msra.mxu0 0
      %773 = vmatprep.subr.bf16.mxu0 0
      %774 = vmatpush1.bf16.msra.mxu0 0
      %775 = vmatprep.subr.bf16.mxu0 0
      %776 = vmatpush1.bf16.msra.mxu0 0
      %777 = vmatprep.subr.bf16.mxu0 0
      %778 = vmatpush1.bf16.msra.mxu0 0
      %779 = vmatprep.subr.bf16.mxu0 0
      %780 = vmatpush1.bf16.msra.mxu0 0
      %781 = vmatprep.subr.bf16.mxu0 0
      %782 = vmatpush1.bf16.msra.mxu0 0
      %783 = vmatprep.subr.bf16.mxu0 0
      %784 = vmatpush1.bf16.msra.mxu0 0
      %785 = vmatprep.subr.bf16.mxu0 0
      %786 = vmatpush1.bf16.msra.mxu0 0
      %787 = vmatprep.subr.bf16.mxu0 0
      %788 = vmatpush1.bf16.msra.mxu0 0
      %789 = vmatprep.subr.bf16.mxu0 0
      %790 = vmatpush1.bf16.msra.mxu0 0
      %791 = vmatprep.subr.bf16.mxu0 0
      %792 = vmatpush1.bf16.msra.mxu0 0
      %793 = vmatprep.subr.bf16.mxu0 0
      %794 = vmatpush1.bf16.msra.mxu0 0
      %795 = vmatprep.mubr.bf16.mxu0 0
      %796 = vmatmul.mubr.bf16.gmra.mrb[0].mxu0 %v758
      %v797 = vpop.f32.mrb[0].mxu0
      %v798 = vadd.f32 0.0, %v797
      %v799 = vpop.f32.mrb[0].mxu0
      %v800 = vpop.f32.mrb[0].mxu0
      %v801 = vpop.f32.mrb[0].mxu0
      %802 = vdwg.mxu0
      %v804 = vsel %vm613, %v704, 0
      %v807 = vsel %vm713, %v230, 0
      %809 = vmatprep.subr.bf16.mxu0 0
      %810 = vmatpush1.bf16.msra.mxu0 %v807
      %811 = vmatprep.subr.bf16.mxu0 0
      %812 = vmatpush1.bf16.msra.mxu0 0
      %813 = vmatprep.subr.bf16.mxu0 0
      %814 = vmatpush1.bf16.msra.mxu0 0
      %815 = vmatprep.subr.bf16.mxu0 0
      %816 = vmatpush1.bf16.msra.mxu0 0
      %817 = vmatprep.subr.bf16.mxu0 0
      %818 = vmatpush1.bf16.msra.mxu0 0
      %819 = vmatprep.subr.bf16.mxu0 0
      %820 = vmatpush1.bf16.msra.mxu0 0
      %821 = vmatprep.subr.bf16.mxu0 0
      %822 = vmatpush1.bf16.msra.mxu0 0
      %823 = vmatprep.subr.bf16.mxu0 0
      %824 = vmatpush1.bf16.msra.mxu0 0
      %825 = vmatprep.subr.bf16.mxu0 0
      %826 = vmatpush1.bf16.msra.mxu0 0
      %827 = vmatprep.subr.bf16.mxu0 0
      %828 = vmatpush1.bf16.msra.mxu0 0
      %829 = vmatprep.subr.bf16.mxu0 0
      %830 = vmatpush1.bf16.msra.mxu0 0
      %831 = vmatprep.subr.bf16.mxu0 0
      %832 = vmatpush1.bf16.msra.mxu0 0
      %833 = vmatprep.subr.bf16.mxu0 0
      %834 = vmatpush1.bf16.msra.mxu0 0
      %835 = vmatprep.subr.bf16.mxu0 0
      %836 = vmatpush1.bf16.msra.mxu0 0
      %837 = vmatprep.subr.bf16.mxu0 0
      %838 = vmatpush1.bf16.msra.mxu0 0
      %839 = vmatprep.subr.bf16.mxu0 0
      %840 = vmatpush1.bf16.msra.mxu0 0
      %841 = vmatprep.mubr.bf16.mxu0 0
      %842 = vmatmul.mubr.bf16.gmra.mrb[0].mxu0 %v804
      %v843 = vpop.f32.mrb[0].mxu0
      %v844 = vadd.f32 0.0, %v843
      %v845 = vpop.f32.mrb[0].mxu0
      %v846 = vpop.f32.mrb[0].mxu0
      %v847 = vpop.f32.mrb[0].mxu0
      %848 = vdwg.mxu0
      %v850 = vsel %vm613, %v705, 0
      %v853 = vsel %vm713, %v231, 0
      %855 = vmatprep.subr.bf16.mxu0 0
      %856 = vmatpush1.bf16.msra.mxu0 %v853
      %857 = vmatprep.subr.bf16.mxu0 0
      %858 = vmatpush1.bf16.msra.mxu0 0
      %859 = vmatprep.subr.bf16.mxu0 0
      %860 = vmatpush1.bf16.msra.mxu0 0
      %861 = vmatprep.subr.bf16.mxu0 0
      %862 = vmatpush1.bf16.msra.mxu0 0
      %863 = vmatprep.subr.bf16.mxu0 0
      %864 = vmatpush1.bf16.msra.mxu0 0
      %865 = vmatprep.subr.bf16.mxu0 0
      %866 = vmatpush1.bf16.msra.mxu0 0
      %867 = vmatprep.subr.bf16.mxu0 0
      %868 = vmatpush1.bf16.msra.mxu0 0
      %869 = vmatprep.subr.bf16.mxu0 0
      %870 = vmatpush1.bf16.msra.mxu0 0
      %871 = vmatprep.subr.bf16.mxu0 0
      %872 = vmatpush1.bf16.msra.mxu0 0
      %873 = vmatprep.subr.bf16.mxu0 0
      %874 = vmatpush1.bf16.msra.mxu0 0
      %875 = vmatprep.subr.bf16.mxu0 0
      %876 = vmatpush1.bf16.msra.mxu0 0
      %877 = vmatprep.subr.bf16.mxu0 0
      %878 = vmatpush1.bf16.msra.mxu0 0
      %879 = vmatprep.subr.bf16.mxu0 0
      %880 = vmatpush1.bf16.msra.mxu0 0
      %881 = vmatprep.subr.bf16.mxu0 0
      %882 = vmatpush1.bf16.msra.mxu0 0
      %883 = vmatprep.subr.bf16.mxu0 0
      %884 = vmatpush1.bf16.msra.mxu0 0
      %885 = vmatprep.subr.bf16.mxu0 0
      %886 = vmatpush1.bf16.msra.mxu0 0
      %887 = vmatprep.mubr.bf16.mxu0 0
      %888 = vmatmul.mubr.bf16.gmra.mrb[0].mxu0 %v850
      %v889 = vpop.f32.mrb[0].mxu0
      %v890 = vadd.f32 0.0, %v889
      %v891 = vpop.f32.mrb[0].mxu0
      %v892 = vpop.f32.mrb[0].mxu0
      %v893 = vpop.f32.mrb[0].mxu0
      %894 = vdwg.mxu0
      %v896 = vsel %vm613, %v706, 0
      %v899 = vsel %vm713, %v232, 0
      %901 = vmatprep.subr.bf16.mxu0 0
      %902 = vmatpush1.bf16.msra.mxu0 %v899
      %903 = vmatprep.subr.bf16.mxu0 0
      %904 = vmatpush1.bf16.msra.mxu0 0
      %905 = vmatprep.subr.bf16.mxu0 0
      %906 = vmatpush1.bf16.msra.mxu0 0
      %907 = vmatprep.subr.bf16.mxu0 0
      %908 = vmatpush1.bf16.msra.mxu0 0
      %909 = vmatprep.subr.bf16.mxu0 0
      %910 = vmatpush1.bf16.msra.mxu0 0
      %911 = vmatprep.subr.bf16.mxu0 0
      %912 = vmatpush1.bf16.msra.mxu0 0
      %913 = vmatprep.subr.bf16.mxu0 0
      %914 = vmatpush1.bf16.msra.mxu0 0
      %915 = vmatprep.subr.bf16.mxu0 0
      %916 = vmatpush1.bf16.msra.mxu0 0
      %917 = vmatprep.subr.bf16.mxu0 0
      %918 = vmatpush1.bf16.msra.mxu0 0
      %919 = vmatprep.subr.bf16.mxu0 0
      %920 = vmatpush1.bf16.msra.mxu0 0
      %921 = vmatprep.subr.bf16.mxu0 0
      %922 = vmatpush1.bf16.msra.mxu0 0
      %923 = vmatprep.subr.bf16.mxu0 0
      %924 = vmatpush1.bf16.msra.mxu0 0
      %925 = vmatprep.subr.bf16.mxu0 0
      %926 = vmatpush1.bf16.msra.mxu0 0
      %927 = vmatprep.subr.bf16.mxu0 0
      %928 = vmatpush1.bf16.msra.mxu0 0
      %929 = vmatprep.subr.bf16.mxu0 0
      %930 = vmatpush1.bf16.msra.mxu0 0
      %931 = vmatprep.subr.bf16.mxu0 0
      %932 = vmatpush1.bf16.msra.mxu0 0
      %933 = vmatprep.mubr.bf16.mxu0 0
      %934 = vmatmul.mubr.bf16.gmra.mrb[0].mxu0 %v896
      %v935 = vpop.f32.mrb[0].mxu0
      %v936 = vadd.f32 0.0, %v935
      %v937 = vpop.f32.mrb[0].mxu0
      %v938 = vpop.f32.mrb[0].mxu0
      %v939 = vpop.f32.mrb[0].mxu0
      %940 = vdwg.mxu0
      %v942 = vsel %vm613, %v707, 0
      %v945 = vsel %vm713, %v233, 0
      %947 = vmatprep.subr.bf16.mxu0 0
      %948 = vmatpush1.bf16.msra.mxu0 %v945
      %949 = vmatprep.subr.bf16.mxu0 0
      %950 = vmatpush1.bf16.msra.mxu0 0
      %951 = vmatprep.subr.bf16.mxu0 0
      %952 = vmatpush1.bf16.msra.mxu0 0
      %953 = vmatprep.subr.bf16.mxu0 0
      %954 = vmatpush1.bf16.msra.mxu0 0
      %955 = vmatprep.subr.bf16.mxu0 0
      %956 = vmatpush1.bf16.msra.mxu0 0
      %957 = vmatprep.subr.bf16.mxu0 0
      %958 = vmatpush1.bf16.msra.mxu0 0
      %959 = vmatprep.subr.bf16.mxu0 0
      %960 = vmatpush1.bf16.msra.mxu0 0
      %961 = vmatprep.subr.bf16.mxu0 0
      %962 = vmatpush1.bf16.msra.mxu0 0
      %963 = vmatprep.subr.bf16.mxu0 0
      %964 = vmatpush1.bf16.msra.mxu0 0
      %965 = vmatprep.subr.bf16.mxu0 0
      %966 = vmatpush1.bf16.msra.mxu0 0
      %967 = vmatprep.subr.bf16.mxu0 0
      %968 = vmatpush1.bf16.msra.mxu0 0
      %969 = vmatprep.subr.bf16.mxu0 0
      %970 = vmatpush1.bf16.msra.mxu0 0
      %971 = vmatprep.subr.bf16.mxu0 0
      %972 = vmatpush1.bf16.msra.mxu0 0
      %973 = vmatprep.subr.bf16.mxu0 0
      %974 = vmatpush1.bf16.msra.mxu0 0
      %975 = vmatprep.subr.bf16.mxu0 0
      %976 = vmatpush1.bf16.msra.mxu0 0
      %977 = vmatprep.subr.bf16.mxu0 0
      %978 = vmatpush1.bf16.msra.mxu0 0
      %979 = vmatprep.mubr.bf16.mxu0 0
      %980 = vmatmul.mubr.bf16.gmra.mrb[0].mxu0 %v942
      %v981 = vpop.f32.mrb[0].mxu0
      %v982 = vadd.f32 0.0, %v981
      %v983 = vpop.f32.mrb[0].mxu0
      %v984 = vpop.f32.mrb[0].mxu0
      %v985 = vpop.f32.mrb[0].mxu0
      %986 = vdwg.mxu0
      %v988 = vsel %vm613, %v708, 0
      %v991 = vsel %vm713, %v234, 0
      %993 = vmatprep.subr.bf16.mxu0 0
      %994 = vmatpush1.bf16.msra.mxu0 %v991
      %995 = vmatprep.subr.bf16.mxu0 0
      %996 = vmatpush1.bf16.msra.mxu0 0
      %997 = vmatprep.subr.bf16.mxu0 0
      %998 = vmatpush1.bf16.msra.mxu0 0
      %999 = vmatprep.subr.bf16.mxu0 0
      %1000 = vmatpush1.bf16.msra.mxu0 0
      %1001 = vmatprep.subr.bf16.mxu0 0
      %1002 = vmatpush1.bf16.msra.mxu0 0
      %1003 = vmatprep.subr.bf16.mxu0 0
      %1004 = vmatpush1.bf16.msra.mxu0 0
      %1005 = vmatprep.subr.bf16.mxu0 0
      %1006 = vmatpush1.bf16.msra.mxu0 0
      %1007 = vmatprep.subr.bf16.mxu0 0
      %1008 = vmatpush1.bf16.msra.mxu0 0
      %1009 = vmatprep.subr.bf16.mxu0 0
      %1010 = vmatpush1.bf16.msra.mxu0 0
      %1011 = vmatprep.subr.bf16.mxu0 0
      %1012 = vmatpush1.bf16.msra.mxu0 0
      %1013 = vmatprep.subr.bf16.mxu0 0
      %1014 = vmatpush1.bf16.msra.mxu0 0
      %1015 = vmatprep.subr.bf16.mxu0 0
      %1016 = vmatpush1.bf16.msra.mxu0 0
      %1017 = vmatprep.subr.bf16.mxu0 0
      %1018 = vmatpush1.bf16.msra.mxu0 0
      %1019 = vmatprep.subr.bf16.mxu0 0
      %1020 = vmatpush1.bf16.msra.mxu0 0
      %1021 = vmatprep.subr.bf16.mxu0 0
      %1022 = vmatpush1.bf16.msra.mxu0 0
      %1023 = vmatprep.subr.bf16.mxu0 0
      %1024 = vmatpush1.bf16.msra.mxu0 0
      %1025 = vmatprep.mubr.bf16.mxu0 0
      %1026 = vmatmul.mubr.bf16.gmra.mrb[0].mxu0 %v988
      %v1027 = vpop.f32.mrb[0].mxu0
      %v1028 = vadd.f32 0.0, %v1027
      %v1029 = vpop.f32.mrb[0].mxu0
      %v1030 = vpop.f32.mrb[0].mxu0
      %v1031 = vpop.f32.mrb[0].mxu0
      %1032 = vdwg.mxu0
      %v1034 = vsel %vm613, %v709, 0
      %v1037 = vsel %vm713, %v235, 0
      %1039 = vmatprep.subr.bf16.mxu0 0
      %1040 = vmatpush1.bf16.msra.mxu0 %v1037
      %1041 = vmatprep.subr.bf16.mxu0 0
      %1042 = vmatpush1.bf16.msra.mxu0 0
      %1043 = vmatprep.subr.bf16.mxu0 0
      %1044 = vmatpush1.bf16.msra.mxu0 0
      %1045 = vmatprep.subr.bf16.mxu0 0
      %1046 = vmatpush1.bf16.msra.mxu0 0
      %1047 = vmatprep.subr.bf16.mxu0 0
      %1048 = vmatpush1.bf16.msra.mxu0 0
      %1049 = vmatprep.subr.bf16.mxu0 0
      %1050 = vmatpush1.bf16.msra.mxu0 0
      %1051 = vmatprep.subr.bf16.mxu0 0
      %1052 = vmatpush1.bf16.msra.mxu0 0
      %1053 = vmatprep.subr.bf16.mxu0 0
      %1054 = vmatpush1.bf16.msra.mxu0 0
      %1055 = vmatprep.subr.bf16.mxu0 0
      %1056 = vmatpush1.bf16.msra.mxu0 0
      %1057 = vmatprep.subr.bf16.mxu0 0
      %1058 = vmatpush1.bf16.msra.mxu0 0
      %1059 = vmatprep.subr.bf16.mxu0 0
      %1060 = vmatpush1.bf16.msra.mxu0 0
      %1061 = vmatprep.subr.bf16.mxu0 0
      %1062 = vmatpush1.bf16.msra.mxu0 0
      %1063 = vmatprep.subr.bf16.mxu0 0
      %1064 = vmatpush1.bf16.msra.mxu0 0
      %1065 = vmatprep.subr.bf16.mxu0 0
      %1066 = vmatpush1.bf16.msra.mxu0 0
      %1067 = vmatprep.subr.bf16.mxu0 0
      %1068 = vmatpush1.bf16.msra.mxu0 0
      %1069 = vmatprep.subr.bf16.mxu0 0
      %1070 = vmatpush1.bf16.msra.mxu0 0
      %1071 = vmatprep.mubr.bf16.mxu0 0
      %1072 = vmatmul.mubr.bf16.gmra.mrb[0].mxu0 %v1034
      %v1073 = vpop.f32.mrb[0].mxu0
      %v1074 = vadd.f32 0.0, %v1073
      %v1075 = vpop.f32.mrb[0].mxu0
      %v1076 = vpop.f32.mrb[0].mxu0
      %v1077 = vpop.f32.mrb[0].mxu0
      %1078 = vdwg.mxu0
      %v1079 = vpack.c.bf16 %v752, %v752
      %v1080 = vpack.c.bf16 %v798, %v798
      %v1081 = vpack.c.bf16 %v844, %v844
      %v1082 = vpack.c.bf16 %v890, %v890
      %v1083 = vpack.c.bf16 %v936, %v936
      %v1084 = vpack.c.bf16 %v982, %v982
      %v1085 = vpack.c.bf16 %v1028, %v1028
      %v1086 = vpack.c.bf16 %v1074, %v1074
      %vm1087 = vcmask 27648
      %1088 = vst.msk [vmem:[%s210] sm:$0xf] %vm1087, %v1079
      %1089 = vst.msk [vmem:[%s210 + $0x4] sm:$0xf] %vm1087, %v1080
      %1090 = vst.msk [vmem:[%s210 + $0x8] sm:$0xf] %vm1087, %v1081
      %1091 = vst.msk [vmem:[%s210 + $0xc] sm:$0xf] %vm1087, %v1082
      %1092 = vst.msk [vmem:[%s210 + $0x10] sm:$0xf] %vm1087, %v1083
      %1093 = vst.msk [vmem:[%s210 + $0x14] sm:$0xf] %vm1087, %v1084
      %1094 = vst.msk [vmem:[%s210 + $0x18] sm:$0xf] %vm1087, %v1085
      %1095 = vst.msk [vmem:[%s210 + $0x1c] sm:$0xf] %vm1087, %v1086
      %p1096 = scmp.lt.s32.totalorder %s14, 1
      %s1097 = scalar_select %p1096, %s14, 1
      %s1098 = smul.addr %s1097, 8
      %s1099 = smul.addr %s1098, 4
      %s1100 = scalar_lea.vmem %s3, %s1099
      // Predicated region
      $region33: #{multiway_contextual_attention.10} parent=31 // pred_check
        %p1101 = pneg %p110
      $region34: #{multiway_contextual_attention.10} parent=31 // pred_check_branch
        %1103 = sbr.rel (%p1101) target = $region36
      $region35: #{multiway_contextual_attention.10} parent=31 // pred_region
        _
      $region36: #{multiway_contextual_attention.10} parent=31 // pred_fallthru
        _
    $region32: #{multiway_contextual_attention.10} parent=5 // pred_fallthru
      _
    %p1104 = scmp.le.s32.totalorder 2, %s9
    // Predicated region
    $region37: #{multiway_contextual_attention.10} parent=5 // pred_check
      %p1105 = pneg %p1104
    $region38: #{multiway_contextual_attention.10} parent=5 // pred_check_branch
      %1107 = sbr.rel (%p1105) target = $region40
    $region39: #{multiway_contextual_attention.10} parent=5 // pred_region
      %s1108 = ssub.s32 %s9, 2
      // Predicated region
      $region41: #{multiway_contextual_attention.10} parent=39 // pred_check
        %p1109 = pneg %p116
      $region42: #{multiway_contextual_attention.10} parent=39 // pred_check_branch
        %1111 = sbr.rel (%p1109) target = $region44
      $region43: #{multiway_contextual_attention.10} parent=39 // pred_region
        %p1112 = scmp.lt.s32.totalorder %s15, 1
        %s1113 = scalar_select %p1112, %s15, 1
        %s1114 = smul.addr %s1113, 8
        %s1115 = smul.addr %s1114, 4
        %s1116 = scalar_lea.vmem %s3, %s1115
      $region44: #{multiway_contextual_attention.10} parent=39 // pred_fallthru
        _
    $region40: #{multiway_contextual_attention.10} parent=5 // pred_fallthru
      _
  $region6: #{multiway_contextual_attention.10} parent=0 // loop_footer
    %s13 = sadd.s32 1, %s9
  $region7: #{multiway_contextual_attention.10} parent=0 // loop_footer_branch
    %8 = sbr.rel target = $region3
  $region8: #{multiway_contextual_attention.10} parent=0 // loop_exit
    _

// kernel: multiway_contextual_attention.13
$region0: #{multiway_contextual_attention.13}
  #allocation0 [shape = 'u32[]', space=smem, size = 0x4, offset = 0x4, fixed_abs, tag = 'smem constant byte address 0x4 - core index']
  #allocation1 [shape = 'u32[144,128]{1,0:T(1,128)}', space=vmem, size = 0x12000, scoped, tag = 'internal scratch']
  %s0 = inlined_call_operand.vmem [shape: f32[16,32], index: 0, kind: input, shape index: {}]
  %s1 = inlined_call_operand.vmem [shape: f32[1,32], index: 1, kind: input, shape index: {}]
  %s2 = inlined_call_operand.vmem [shape: f32[1,32], index: 2, kind: input, shape index: {}]
  %s3 = inlined_call_operand.vmem [shape: bf16[32,64], index: 3, kind: input, shape index: {}]
  %s4 = inlined_call_operand.vmem [shape: f32[1,64], index: 4, kind: input, shape index: {}]
  %s5 = inlined_call_operand.vmem [shape: bf16[16,64], index: 5, kind: output, shape index: {}]
  %s6 = sld [smem:[#allocation0]]
  $region30: #{multiway_contextual_attention.13} parent=0
    _
  %s8 = ssub.s32 1, %s6
  %s9 = scalar_select 0, %s8, %s6
  // Predicated region
  $region2: #{multiway_contextual_attention.13} parent=0 // pred_check
    _
  $region3: #{multiway_contextual_attention.13} parent=0 // pred_check_branch
    %11 = sbr.rel (0) target = $region5
  $region4: #{multiway_contextual_attention.13} parent=0 // pred_region
    _
  $region5: #{multiway_contextual_attention.13} parent=0 // pred_fallthru
    _
  // Predicated region
  $region6: #{multiway_contextual_attention.13} parent=0 // pred_check
    _
  $region7: #{multiway_contextual_attention.13} parent=0 // pred_check_branch
    %13 = sbr.rel (0) target = $region9
  $region8: #{multiway_contextual_attention.13} parent=0 // pred_region
    _
  $region9: #{multiway_contextual_attention.13} parent=0 // pred_fallthru
    _
  // Predicated region
  $region10: #{multiway_contextual_attention.13} parent=0 // pred_check
    _
  $region11: #{multiway_contextual_attention.13} parent=0 // pred_check_branch
    %15 = sbr.rel (0) target = $region13
  $region12: #{multiway_contextual_attention.13} parent=0 // pred_region
    _
  $region13: #{multiway_contextual_attention.13} parent=0 // pred_fallthru
    _
  // Predicated region
  $region14: #{multiway_contextual_attention.13} parent=0 // pred_check
    _
  $region15: #{multiway_contextual_attention.13} parent=0 // pred_check_branch
    %17 = sbr.rel (0) target = $region17
  $region16: #{multiway_contextual_attention.13} parent=0 // pred_region
    _
  $region17: #{multiway_contextual_attention.13} parent=0 // pred_fallthru
    _
  // Predicated region
  $region18: #{multiway_contextual_attention.13} parent=0 // pred_check
    _
  $region19: #{multiway_contextual_attention.13} parent=0 // pred_check_branch
    %19 = sbr.rel (0) target = $region21
  $region20: #{multiway_contextual_attention.13} parent=0 // pred_region
    _
  $region21: #{multiway_contextual_attention.13} parent=0 // pred_fallthru
    _
  %v21 = vld [vmem:[%s0] sm:$0xff]
  %v22 = vld [vmem:[%s0 + $0x8] sm:$0xff]
  %vm23 = vcmask 261120
  %v24 = vsel %vm23, %v21, 0.0
  %25 = vadd.xlane.f32.xlu0 %v24
  %v26 = vpop.xlane.xlu0 %25
  %v27 = vsel %vm23, %v22, 0.0
  %28 = vadd.xlane.f32.xlu0 %v27
  %v29 = vpop.xlane.xlu0 %28
  %v30 = vrcp.pop 32.0
  %v31 = vmul.f32 %v26, %v30
  %v32 = vmul.f32 %v29, %v30
  %v33 = vsub.f32 %v21, %v31
  %v34 = vsub.f32 %v22, %v32
  %v35 = vmul.f32 %v33, %v33
  %v36 = vmul.f32 %v34, %v34
  %v37 = vsel %vm23, %v35, 0.0
  %38 = vadd.xlane.f32.xlu0 %v37
  %v39 = vpop.xlane.xlu0 %38
  %v40 = vsel %vm23, %v36, 0.0
  %41 = vadd.xlane.f32.xlu0 %v40
  %v42 = vpop.xlane.xlu0 %41
  %v43 = vmul.f32 %v39, %v30
  %v44 = vmul.f32 %v42, %v30
  %v45 = vadd.f32 %v43, 1e-05
  %v46 = vadd.f32 %v44, 1e-05
  %v47 = vrsqrt.pop %v45
  %v48 = vrsqrt.pop %v46
  %v49 = vmul.f32 %v33, %v47
  %v50 = vmul.f32 %v34, %v48
  %v51 = vld [vmem:[%s1] sm:$0x1]
  %v53 = vlaneseq
  %v54 = vshrl.u32 %v53, 7
  %v55 = vsub.s32 0, %v54
  %v56 = vrot.slane %v51, %v55
  %v58 = vmul.f32 %v49, %v56
  %v59 = vmul.f32 %v50, %v56
  %v60 = vld [vmem:[%s2] sm:$0x1]
  %v62 = vlaneseq
  %v63 = vshrl.u32 %v62, 7
  %v64 = vsub.s32 0, %v63
  %v65 = vrot.slane %v60, %v64
  %v67 = vadd.f32 %v58, %v65
  %v68 = vadd.f32 %v59, %v65
  %v69 = vpack.c.bf16 %v68, %v67
  %v70 = vld [vmem:[%s3] sm:$0xf]
  %v71 = vld [vmem:[%s3 + $0x4] sm:$0xf]
  %v72 = vld [vmem:[%s3 + $0x8] sm:$0xf]
  %v73 = vld [vmem:[%s3 + $0xc] sm:$0xf]
  %v74 = vld [vmem:[%s4] sm:$0x1]
  %v76 = vlaneseq
  %v77 = vshrl.u32 %v76, 7
  %v78 = vsub.s32 0, %v77
  %v79 = vrot.slane %v74, %v78
  %v85 = vunpack.c.l.b16 %v70
  %v86 = vunpack.c.l.b16 %v71
  %v87 = vunpack.c.l.b16 %v72
  %v88 = vunpack.c.l.b16 %v73
  %v89 = vpack.c.b16 %v86, %v85
  %v90 = vpack.c.b16 %v88, %v87
  %v94 = vsel %vm23, %v69, 0
  %96 = vmatprep.subr.bf16.mxu0 0
  %97 = vmatpush1.bf16.msra.mxu0 %v89
  %98 = vmatprep.subr.bf16.mxu0 0
  %99 = vmatpush1.bf16.msra.mxu0 %v90
  %100 = vmatprep.subr.bf16.mxu0 0
  %101 = vmatpush1.bf16.msra.mxu0 0
  %102 = vmatprep.subr.bf16.mxu0 0
  %103 = vmatpush1.bf16.msra.mxu0 0
  %104 = vmatprep.subr.bf16.mxu0 0
  %105 = vmatpush1.bf16.msra.mxu0 0
  %106 = vmatprep.subr.bf16.mxu0 0
  %107 = vmatpush1.bf16.msra.mxu0 0
  %108 = vmatprep.subr.bf16.mxu0 0
  %109 = vmatpush1.bf16.msra.mxu0 0
  %110 = vmatprep.subr.bf16.mxu0 0
  %111 = vmatpush1.bf16.msra.mxu0 0
  %112 = vmatprep.subr.bf16.mxu0 0
  %113 = vmatpush1.bf16.msra.mxu0 0
  %114 = vmatprep.subr.bf16.mxu0 0
  %115 = vmatpush1.bf16.msra.mxu0 0
  %116 = vmatprep.subr.bf16.mxu0 0
  %117 = vmatpush1.bf16.msra.mxu0 0
  %118 = vmatprep.subr.bf16.mxu0 0
  %119 = vmatpush1.bf16.msra.mxu0 0
  %120 = vmatprep.subr.bf16.mxu0 0
  %121 = vmatpush1.bf16.msra.mxu0 0
  %122 = vmatprep.subr.bf16.mxu0 0
  %123 = vmatpush1.bf16.msra.mxu0 0
  %124 = vmatprep.subr.bf16.mxu0 0
  %125 = vmatpush1.bf16.msra.mxu0 0
  %126 = vmatprep.subr.bf16.mxu0 0
  %127 = vmatpush1.bf16.msra.mxu0 0
  %128 = vmatprep.mubr.bf16.mxu0 0
  %129 = vmatmul.mubr.bf16.gmra.mrb[0].mxu0 %v94
  %v130 = vpop.f32.mrb[0].mxu0
  %v131 = vadd.f32 %v79, %v130
  %v132 = vpop.f32.mrb[0].mxu0
  %v133 = vpop.f32.mrb[0].mxu0
  %v134 = vadd.f32 %v79, %v133
  %v135 = vpop.f32.mrb[0].mxu0
  %136 = vdwg.mxu0
  %v137 = vpack.c.bf16 %v134, %v131
  %v139 = vunpack.c.l.b16 %v137
  %v140 = vunpack.c.h.b16 %v137
  %v141 = vpack.c.b16 %v139, %v139
  %v142 = vpack.c.b16 %v140, %v140
  %vm145 = vcmask 519168
  %146 = vst.msk [vmem:[%s5] sm:$0xf] %vm145, %v141
  %147 = vst.msk [vmem:[%s5 + $0x4] sm:$0xf] %vm145, %v142
  // Predicated region
  $region22: #{multiway_contextual_attention.13} parent=0 // pred_check
    _
  $region23: #{multiway_contextual_attention.13} parent=0 // pred_check_branch
    %149 = sbr.rel (0) target = $region25
  $region24: #{multiway_contextual_attention.13} parent=0 // pred_region
    _
  $region25: #{multiway_contextual_attention.13} parent=0 // pred_fallthru
    _
  // Predicated region
  $region26: #{multiway_contextual_attention.13} parent=0 // pred_check
    _
  $region27: #{multiway_contextual_attention.13} parent=0 // pred_check_branch
    %151 = sbr.rel (0) target = $region29
  $region28: #{multiway_contextual_attention.13} parent=0 // pred_region
    _
  $region29: #{multiway_contextual_attention.13} parent=0 // pred_fallthru
    _

// kernel: multiway_contextual_attention.14
$region0: #{multiway_contextual_attention.14}
  #allocation0 [shape = 'u32[]', space=smem, size = 0x4, offset = 0x4, fixed_abs, tag = 'smem constant byte address 0x4 - core index']
  #allocation1 [shape = 'u32[144,128]{1,0:T(1,128)}', space=vmem, size = 0x12000, scoped, tag = 'internal scratch']
  %s0 = inlined_call_operand.vmem [shape: bf16[2,8,8,4], index: 0, kind: input, shape index: {}]
  %s1 = inlined_call_operand.vmem [shape: bf16[2,8,8,4], index: 1, kind: input, shape index: {}]
  %s2 = inlined_call_operand.vmem [shape: bf16[2,8,8,4], index: 2, kind: input, shape index: {}]
  %s3 = inlined_call_operand.vmem [shape: bf16[2,8,8,4], index: 3, kind: output, shape index: {0}]
  %s4 = inlined_call_operand.hbm [shape: f32[2,8,8,8], index: 4, kind: output, shape index: {1}]
  %5 = xla_tuple %s3, %s4
  %s6 = sld [smem:[#allocation0]]
  $region53: #{multiway_contextual_attention.14} parent=0
    _
  %s8 = ssub.s32 1, %s6
  %s9 = scalar_select 0, %s8, %s6
  $region1: #{multiway_contextual_attention.14} parent=0
    #allocation2 [shape = 'u8[65536]{0}', space=vmem, size = 0x10000, scoped, tag = 'output window, operand 1']
    #allocation3 [shape = 's32[2]{0}', space=sflag, size = 0x8, scoped, tag = 'scoped memory for multiway_contextual_attention.14']
    %10 = vsyncpa [#allocation3], 0
    %s11 = scalar_lea.sflag [#allocation3], 1
    %12 = vsyncpa %s11, 0
    loop: start=0, step=1, limit=4
    $region2: #{multiway_contextual_attention.14} parent=1 // loop_pre_header
      _
    $region3: #{multiway_contextual_attention.14} parent=1 // loop_header
      %s14 = sphi 0, %s18
      %p15 = scmp.ge.s32.totalorder %s14, 4
      %s24 = sphi 0, %s26
      %s27 = sphi 0, %s24
      %s28 = sphi 0, %s27
      %s44 = sphi 0, %s28
      %s50 = sphi 0, %s52
      %s53 = sphi 0, %s50
      %s54 = sphi 0, %s53
      %s70 = sphi 0, %s54
      %s76 = sphi 0, %s78
      %s79 = sphi 0, %s76
      %s80 = sphi 0, %s79
      %s96 = sphi 0, %s80
      %s102 = sphi 0, %s104
      %s105 = sphi 0, %s102
      %s106 = sphi 0, %s105
      %s122 = sphi 0, %s106
      %s128 = sphi 0, %s130
      %s131 = sphi 0, %s128
      %s132 = sphi 0, %s131
      %s148 = sphi 0, %s132
    $region4: #{multiway_contextual_attention.14} parent=1 // loop_header_branch
      %17 = sbr.rel (%p15) target = $region8
    $region5: #{multiway_contextual_attention.14} parent=1 // loop_body
      %s19 = ssub.s32 %s14, 1
      %s20 = ssub.s32 %s14, 2
      %s21 = sadd.s32 %s14, 1
      %s22 = ssub.s32 %s14, %s21
      %p23 = scmp.eq.s32.totalorder %s22, 0
      %s25 = sadd.s32 %s24, 1
      %s26 = scalar_select %p23, %s24, %s25
      %p29 = pneg %p23
      %p30 = scmp.eq.s32.totalorder %s14, 1
      %p31 = por %p29, %p30
      %p32 = scmp.ne.s32.totalorder %s24, %s27
      %p33 = scmp.eq.s32.totalorder %s14, 0
      %p34 = por %p32, %p33
      %p35 = scmp.ne.s32.totalorder %s24, %s27
      %p36 = scmp.eq.s32.totalorder %s19, 1
      %p37 = por %p35, %p36
      %p38 = scmp.ne.s32.totalorder %s27, %s28
      %p39 = scmp.eq.s32.totalorder %s19, 0
      %p40 = por %p38, %p39
      %p41 = scmp.ne.s32.totalorder %s27, %s28
      %p42 = scmp.eq.s32.totalorder %s20, 1
      %p43 = por %p41, %p42
      %p45 = scmp.ne.s32.totalorder %s28, %s44
      %p46 = scmp.eq.s32.totalorder %s20, 0
      %p47 = por %p45, %p46
      %s48 = ssub.s32 %s14, %s21
      %p49 = scmp.eq.s32.totalorder %s48, 0
      %s51 = sadd.s32 %s50, 1
      %s52 = scalar_select %p49, %s50, %s51
      %p55 = pneg %p49
      %p56 = scmp.eq.s32.totalorder %s14, 1
      %p57 = por %p55, %p56
      %p58 = scmp.ne.s32.totalorder %s50, %s53
      %p59 = scmp.eq.s32.totalorder %s14, 0
      %p60 = por %p58, %p59
      %p61 = scmp.ne.s32.totalorder %s50, %s53
      %p62 = scmp.eq.s32.totalorder %s19, 1
      %p63 = por %p61, %p62
      %p64 = scmp.ne.s32.totalorder %s53, %s54
      %p65 = scmp.eq.s32.totalorder %s19, 0
      %p66 = por %p64, %p65
      %p67 = scmp.ne.s32.totalorder %s53, %s54
      %p68 = scmp.eq.s32.totalorder %s20, 1
      %p69 = por %p67, %p68
      %p71 = scmp.ne.s32.totalorder %s54, %s70
      %p72 = scmp.eq.s32.totalorder %s20, 0
      %p73 = por %p71, %p72
      %s74 = ssub.s32 %s14, %s21
      %p75 = scmp.eq.s32.totalorder %s74, 0
      %s77 = sadd.s32 %s76, 1
      %s78 = scalar_select %p75, %s76, %s77
      %p81 = pneg %p75
      %p82 = scmp.eq.s32.totalorder %s14, 1
      %p83 = por %p81, %p82
      %p84 = scmp.ne.s32.totalorder %s76, %s79
      %p85 = scmp.eq.s32.totalorder %s14, 0
      %p86 = por %p84, %p85
      %p87 = scmp.ne.s32.totalorder %s76, %s79
      %p88 = scmp.eq.s32.totalorder %s19, 1
      %p89 = por %p87, %p88
      %p90 = scmp.ne.s32.totalorder %s79, %s80
      %p91 = scmp.eq.s32.totalorder %s19, 0
      %p92 = por %p90, %p91
      %p93 = scmp.ne.s32.totalorder %s79, %s80
      %p94 = scmp.eq.s32.totalorder %s20, 1
      %p95 = por %p93, %p94
      %p97 = scmp.ne.s32.totalorder %s80, %s96
      %p98 = scmp.eq.s32.totalorder %s20, 0
      %p99 = por %p97, %p98
      %s100 = ssub.s32 %s14, %s21
      %p101 = scmp.eq.s32.totalorder %s100, 0
      %s103 = sadd.s32 %s102, 1
      %s104 = scalar_select %p101, %s102, %s103
      %p107 = pneg %p101
      %p108 = scmp.eq.s32.totalorder %s14, 1
      %p109 = por %p107, %p108
      %p110 = scmp.ne.s32.totalorder %s102, %s105
      %p111 = scmp.eq.s32.totalorder %s14, 0
      %p112 = por %p110, %p111
      %p113 = scmp.ne.s32.totalorder %s102, %s105
      %p114 = scmp.eq.s32.totalorder %s19, 1
      %p115 = por %p113, %p114
      %p116 = scmp.ne.s32.totalorder %s105, %s106
      %p117 = scmp.eq.s32.totalorder %s19, 0
      %p118 = por %p116, %p117
      %p119 = scmp.ne.s32.totalorder %s105, %s106
      %p120 = scmp.eq.s32.totalorder %s20, 1
      %p121 = por %p119, %p120
      %p123 = scmp.ne.s32.totalorder %s106, %s122
      %p124 = scmp.eq.s32.totalorder %s20, 0
      %p125 = por %p123, %p124
      %s126 = ssub.s32 %s14, %s21
      %p127 = scmp.eq.s32.totalorder %s126, 0
      %s129 = sadd.s32 %s128, 1
      %s130 = scalar_select %p127, %s128, %s129
      %p133 = pneg %p127
      %p134 = scmp.eq.s32.totalorder %s14, 1
      %p135 = por %p133, %p134
      %p136 = scmp.ne.s32.totalorder %s128, %s131
      %p137 = scmp.eq.s32.totalorder %s14, 0
      %p138 = por %p136, %p137
      %p139 = scmp.ne.s32.totalorder %s128, %s131
      %p140 = scmp.eq.s32.totalorder %s19, 1
      %p141 = por %p139, %p140
      %p142 = scmp.ne.s32.totalorder %s131, %s132
      %p143 = scmp.eq.s32.totalorder %s19, 0
      %p144 = por %p142, %p143
      %p145 = scmp.ne.s32.totalorder %s131, %s132
      %p146 = scmp.eq.s32.totalorder %s20, 1
      %p147 = por %p145, %p146
      %p149 = scmp.ne.s32.totalorder %s132, %s148
      %p150 = scmp.eq.s32.totalorder %s20, 0
      %p151 = por %p149, %p150
      %p152 = scmp.le.s32.totalorder 1, %s14
      %p153 = scmp.lt.s32.totalorder %s14, 3
      %p154 = pnand %p152, %p153
      %p155 = pneg %p154
      // Predicated region
      $region9: #{multiway_contextual_attention.14} parent=5 // pred_check
        _
      $region10: #{multiway_contextual_attention.14} parent=5 // pred_check_branch
        %157 = sbr.rel (%p154) target = $region12
      $region11: #{multiway_contextual_attention.14} parent=5 // pred_region
        %s158 = ssub.s32 %s14, 1
      $region12: #{multiway_contextual_attention.14} parent=5 // pred_fallthru
        _
      %p159 = scmp.lt.s32.totalorder %s14, 2
      // Predicated region
      $region13: #{multiway_contextual_attention.14} parent=5 // pred_check
        %p160 = pneg %p159
      $region14: #{multiway_contextual_attention.14} parent=5 // pred_check_branch
        %162 = sbr.rel (%p160) target = $region16
      $region15: #{multiway_contextual_attention.14} parent=5 // pred_region
        // Predicated region
        $region17: #{multiway_contextual_attention.14} parent=15 // pred_check
          %p163 = pneg %p34
        $region18: #{multiway_contextual_attention.14} parent=15 // pred_check_branch
          %165 = sbr.rel (%p163) target = $region20
        $region19: #{multiway_contextual_attention.14} parent=15 // pred_region
          %p166 = scmp.lt.s32.totalorder %s14, 1
          %s167 = scalar_select %p166, %s14, 1
          %s168 = smul.addr %s167, 8
          %s169 = smul.addr %s168, 4
          %s170 = scalar_lea.vmem %s0, %s169
        $region20: #{multiway_contextual_attention.14} parent=15 // pred_fallthru
          _
        // Predicated region
        $region21: #{multiway_contextual_attention.14} parent=15 // pred_check
          %p171 = pneg %p60
        $region22: #{multiway_contextual_attention.14} parent=15 // pred_check_branch
          %173 = sbr.rel (%p171) target = $region24
        $region23: #{multiway_contextual_attention.14} parent=15 // pred_region
          %p174 = scmp.lt.s32.totalorder %s14, 1
          %s175 = scalar_select %p174, %s14, 1
          %s176 = smul.addr %s175, 8
          %s177 = smul.addr %s176, 4
          %s178 = scalar_lea.vmem %s1, %s177
        $region24: #{multiway_contextual_attention.14} parent=15 // pred_fallthru
          _
        // Predicated region
        $region25: #{multiway_contextual_attention.14} parent=15 // pred_check
          %p179 = pneg %p86
        $region26: #{multiway_contextual_attention.14} parent=15 // pred_check_branch
          %181 = sbr.rel (%p179) target = $region28
        $region27: #{multiway_contextual_attention.14} parent=15 // pred_region
          %p182 = scmp.lt.s32.totalorder %s14, 1
          %s183 = scalar_select %p182, %s14, 1
          %s184 = smul.addr %s183, 8
          %s185 = smul.addr %s184, 4
          %s186 = scalar_lea.vmem %s2, %s185
        $region28: #{multiway_contextual_attention.14} parent=15 // pred_fallthru
          _
      $region16: #{multiway_contextual_attention.14} parent=5 // pred_fallthru
        _
      %p187 = scmp.le.s32.totalorder 1, %s14
      %p188 = scmp.lt.s32.totalorder %s14, 3
      %p189 = pnand %p187, %p188
      %p190 = pneg %p189
      // Predicated region
      $region29: #{multiway_contextual_attention.14} parent=5 // pred_check
        _
      $region30: #{multiway_contextual_attention.14} parent=5 // pred_check_branch
        %192 = sbr.rel (%p189) target = $region32
      $region31: #{multiway_contextual_attention.14} parent=5 // pred_region
        %s193 = ssub.s32 %s14, 1
        %p194 = scmp.lt.s32.totalorder %s19, 1
        %s195 = scalar_select %p194, %s19, 1
        %s196 = smul.addr %s195, 8
        %s197 = smul.addr %s196, 4
        %s198 = scalar_lea.vmem %s0, %s197
        %p199 = pneg %p40
        %p200 = pneg %p37
        %p201 = scmp.lt.s32.totalorder %s19, 1
        %s202 = scalar_select %p201, %s19, 1
        %s203 = smul.addr %s202, 8
        %s204 = smul.addr %s203, 4
        %s205 = scalar_lea.vmem %s1, %s204
        %p206 = pneg %p66
        %p207 = pneg %p63
        %p208 = scmp.lt.s32.totalorder %s19, 1
        %s209 = scalar_select %p208, %s19, 1
        %s210 = smul.addr %s209, 8
        %s211 = smul.addr %s210, 4
        %s212 = scalar_lea.vmem %s2, %s211
        %p213 = pneg %p92
        %p214 = pneg %p89
        %p215 = pneg %p118
        %p216 = pneg %p115
        %p217 = scmp.lt.s32.totalorder %s19, 1
        %s218 = scalar_select %p217, %s19, 1
        %s219 = smul.addr %s218, 8
        %s220 = smul.addr %s219, 4
        %s221 = scalar_lea.vmem %s3, %s220
        %p222 = pneg %p144
        %p223 = pneg %p141
        %s224 = sand.u32 %s131, 1
        %s225 = scalar_lea.sflag [#allocation3], %s224
        %s226 = sand.u32 %s131, 1
        %s227 = smul.addr %s226, 64
        %s228 = scalar_lea.vmem [#allocation2], %s227
        %p229 = scmp.lt.s32.totalorder %s19, 1
        %s230 = scalar_select %p229, %s19, 1
        %s231 = smul.addr %s230, 8
        %s232 = smul.addr %s231, 4
        %s233 = scalar_lea.vmem %s0, %s232
        %p234 = scmp.lt.s32.totalorder %s19, 1
        %s235 = scalar_select %p234, %s19, 1
        %s236 = smul.addr %s235, 8
        %s237 = smul.addr %s236, 4
        %s238 = scalar_lea.vmem %s1, %s237
        %p239 = scmp.lt.s32.totalorder %s19, 1
        %s240 = scalar_select %p239, %s19, 1
        %s241 = smul.addr %s240, 8
        %s242 = smul.addr %s241, 4
        %s243 = scalar_lea.vmem %s2, %s242
        %p244 = scmp.lt.s32.totalorder %s19, 1
        %s245 = scalar_select %p244, %s19, 1
        %s246 = smul.addr %s245, 8
        %s247 = smul.addr %s246, 4
        %s248 = scalar_lea.vmem %s3, %s247
        %v250 = vld [vmem:[%s233] sm:$0xf]
        %v251 = vld [vmem:[%s233 + $0x4] sm:$0xf]
        %v252 = vld [vmem:[%s233 + $0x8] sm:$0xf]
        %v253 = vld [vmem:[%s233 + $0xc] sm:$0xf]
        %v254 = vld [vmem:[%s233 + $0x10] sm:$0xf]
        %v255 = vld [vmem:[%s233 + $0x14] sm:$0xf]
        %v256 = vld [vmem:[%s233 + $0x18] sm:$0xf]
        %v257 = vld [vmem:[%s233 + $0x1c] sm:$0xf]
        %v258 = vld [vmem:[%s238] sm:$0xf]
        %v259 = vld [vmem:[%s238 + $0x4] sm:$0xf]
        %v260 = vld [vmem:[%s238 + $0x8] sm:$0xf]
        %v261 = vld [vmem:[%s238 + $0xc] sm:$0xf]
        %v262 = vld [vmem:[%s238 + $0x10] sm:$0xf]
        %v263 = vld [vmem:[%s238 + $0x14] sm:$0xf]
        %v264 = vld [vmem:[%s238 + $0x18] sm:$0xf]
        %v265 = vld [vmem:[%s238 + $0x1c] sm:$0xf]
        %v266 = vld [vmem:[%s243] sm:$0xf]
        %v267 = vld [vmem:[%s243 + $0x4] sm:$0xf]
        %v268 = vld [vmem:[%s243 + $0x8] sm:$0xf]
        %v269 = vld [vmem:[%s243 + $0xc] sm:$0xf]
        %v270 = vld [vmem:[%s243 + $0x10] sm:$0xf]
        %v271 = vld [vmem:[%s243 + $0x14] sm:$0xf]
        %v272 = vld [vmem:[%s243 + $0x18] sm:$0xf]
        %v273 = vld [vmem:[%s243 + $0x1c] sm:$0xf]
        %vm274 = vcmask 31744
        %v276 = vsel %vm274, %v250, 0
        %v279 = vsel %vm274, %v258, 0
        %281 = vmatprep.subr.bf16.mxu0 0
        %282 = vmatpush1.bf16.xpose.msra.mxu0 %v279
        %283 = vmatprep.subr.bf16.mxu0 0
        %284 = vmatpush1.bf16.xpose.msra.mxu0 0
        %285 = vmatprep.subr.bf16.mxu0 0
        %286 = vmatpush1.bf16.xpose.msra.mxu0 0
        %287 = vmatprep.subr.bf16.mxu0 0
        %288 = vmatpush1.bf16.xpose.msra.mxu0 0
        %289 = vmatprep.subr.bf16.mxu0 0
        %290 = vmatpush1.bf16.xpose.msra.mxu0 0
        %291 = vmatprep.subr.bf16.mxu0 0
        %292 = vmatpush1.bf16.xpose.msra.mxu0 0
        %293 = vmatprep.subr.bf16.mxu0 0
        %294 = vmatpush1.bf16.xpose.msra.mxu0 0
        %295 = vmatprep.subr.bf16.mxu0 0
        %296 = vmatpush1.bf16.xpose.msra.mxu0 0
        %297 = vmatprep.subr.bf16.mxu0 0
        %298 = vmatpush1.bf16.xpose.msra.mxu0 0
        %299 = vmatprep.subr.bf16.mxu0 0
        %300 = vmatpush1.bf16.xpose.msra.mxu0 0
        %301 = vmatprep.subr.bf16.mxu0 0
        %302 = vmatpush1.bf16.xpose.msra.mxu0 0
        %303 = vmatprep.subr.bf16.mxu0 0
        %304 = vmatpush1.bf16.xpose.msra.mxu0 0
        %305 = vmatprep.subr.bf16.mxu0 0
        %306 = vmatpush1.bf16.xpose.msra.mxu0 0
        %307 = vmatprep.subr.bf16.mxu0 0
        %308 = vmatpush1.bf16.xpose.msra.mxu0 0
        %309 = vmatprep.subr.bf16.mxu0 0
        %310 = vmatpush1.bf16.xpose.msra.mxu0 0
        %311 = vmatprep.subr.bf16.mxu0 0
        %312 = vmatpush1.bf16.xpose.msra.mxu0 0
        %313 = vmatprep.mubr.bf16.mxu0 0
        %314 = vmatmul.mubr.bf16.gmra.mrb[0].mxu0 %v276
        %v315 = vpop.f32.mrb[0].mxu0
        %v316 = vadd.f32 0.0, %v315
        %v317 = vpop.f32.mrb[0].mxu0
        %v318 = vpop.f32.mrb[0].mxu0
        %v319 = vpop.f32.mrb[0].mxu0
        %320 = vdwg.mxu0
        %v322 = vsel %vm274, %v251, 0
        %v325 = vsel %vm274, %v259, 0
        %327 = vmatprep.subr.bf16.mxu0 0
        %328 = vmatpush1.bf16.xpose.msra.mxu0 %v325
        %329 = vmatprep.subr.bf16.mxu0 0
        %330 = vmatpush1.bf16.xpose.msra.mxu0 0
        %331 = vmatprep.subr.bf16.mxu0 0
        %332 = vmatpush1.bf16.xpose.msra.mxu0 0
        %333 = vmatprep.subr.bf16.mxu0 0
        %334 = vmatpush1.bf16.xpose.msra.mxu0 0
        %335 = vmatprep.subr.bf16.mxu0 0
        %336 = vmatpush1.bf16.xpose.msra.mxu0 0
        %337 = vmatprep.subr.bf16.mxu0 0
        %338 = vmatpush1.bf16.xpose.msra.mxu0 0
        %339 = vmatprep.subr.bf16.mxu0 0
        %340 = vmatpush1.bf16.xpose.msra.mxu0 0
        %341 = vmatprep.subr.bf16.mxu0 0
        %342 = vmatpush1.bf16.xpose.msra.mxu0 0
        %343 = vmatprep.subr.bf16.mxu0 0
        %344 = vmatpush1.bf16.xpose.msra.mxu0 0
        %345 = vmatprep.subr.bf16.mxu0 0
        %346 = vmatpush1.bf16.xpose.msra.mxu0 0
        %347 = vmatprep.subr.bf16.mxu0 0
        %348 = vmatpush1.bf16.xpose.msra.mxu0 0
        %349 = vmatprep.subr.bf16.mxu0 0
        %350 = vmatpush1.bf16.xpose.msra.mxu0 0
        %351 = vmatprep.subr.bf16.mxu0 0
        %352 = vmatpush1.bf16.xpose.msra.mxu0 0
        %353 = vmatprep.subr.bf16.mxu0 0
        %354 = vmatpush1.bf16.xpose.msra.mxu0 0
        %355 = vmatprep.subr.bf16.mxu0 0
        %356 = vmatpush1.bf16.xpose.msra.mxu0 0
        %357 = vmatprep.subr.bf16.mxu0 0
        %358 = vmatpush1.bf16.xpose.msra.mxu0 0
        %359 = vmatprep.mubr.bf16.mxu0 0
        %360 = vmatmul.mubr.bf16.gmra.mrb[0].mxu0 %v322
        %v361 = vpop.f32.mrb[0].mxu0
        %v362 = vadd.f32 0.0, %v361
        %v363 = vpop.f32.mrb[0].mxu0
        %v364 = vpop.f32.mrb[0].mxu0
        %v365 = vpop.f32.mrb[0].mxu0
        %366 = vdwg.mxu0
        %v368 = vsel %vm274, %v252, 0
        %v371 = vsel %vm274, %v260, 0
        %373 = vmatprep.subr.bf16.mxu0 0
        %374 = vmatpush1.bf16.xpose.msra.mxu0 %v371
        %375 = vmatprep.subr.bf16.mxu0 0
        %376 = vmatpush1.bf16.xpose.msra.mxu0 0
        %377 = vmatprep.subr.bf16.mxu0 0
        %378 = vmatpush1.bf16.xpose.msra.mxu0 0
        %379 = vmatprep.subr.bf16.mxu0 0
        %380 = vmatpush1.bf16.xpose.msra.mxu0 0
        %381 = vmatprep.subr.bf16.mxu0 0
        %382 = vmatpush1.bf16.xpose.msra.mxu0 0
        %383 = vmatprep.subr.bf16.mxu0 0
        %384 = vmatpush1.bf16.xpose.msra.mxu0 0
        %385 = vmatprep.subr.bf16.mxu0 0
        %386 = vmatpush1.bf16.xpose.msra.mxu0 0
        %387 = vmatprep.subr.bf16.mxu0 0
        %388 = vmatpush1.bf16.xpose.msra.mxu0 0
        %389 = vmatprep.subr.bf16.mxu0 0
        %390 = vmatpush1.bf16.xpose.msra.mxu0 0
        %391 = vmatprep.subr.bf16.mxu0 0
        %392 = vmatpush1.bf16.xpose.msra.mxu0 0
        %393 = vmatprep.subr.bf16.mxu0 0
        %394 = vmatpush1.bf16.xpose.msra.mxu0 0
        %395 = vmatprep.subr.bf16.mxu0 0
        %396 = vmatpush1.bf16.xpose.msra.mxu0 0
        %397 = vmatprep.subr.bf16.mxu0 0
        %398 = vmatpush1.bf16.xpose.msra.mxu0 0
        %399 = vmatprep.subr.bf16.mxu0 0
        %400 = vmatpush1.bf16.xpose.msra.mxu0 0
        %401 = vmatprep.subr.bf16.mxu0 0
        %402 = vmatpush1.bf16.xpose.msra.mxu0 0
        %403 = vmatprep.subr.bf16.mxu0 0
        %404 = vmatpush1.bf16.xpose.msra.mxu0 0
        %405 = vmatprep.mubr.bf16.mxu0 0
        %406 = vmatmul.mubr.bf16.gmra.mrb[0].mxu0 %v368
        %v407 = vpop.f32.mrb[0].mxu0
        %v408 = vadd.f32 0.0, %v407
        %v409 = vpop.f32.mrb[0].mxu0
        %v410 = vpop.f32.mrb[0].mxu0
        %v411 = vpop.f32.mrb[0].mxu0
        %412 = vdwg.mxu0
        %v414 = vsel %vm274, %v253, 0
        %v417 = vsel %vm274, %v261, 0
        %419 = vmatprep.subr.bf16.mxu0 0
        %420 = vmatpush1.bf16.xpose.msra.mxu0 %v417
        %421 = vmatprep.subr.bf16.mxu0 0
        %422 = vmatpush1.bf16.xpose.msra.mxu0 0
        %423 = vmatprep.subr.bf16.mxu0 0
        %424 = vmatpush1.bf16.xpose.msra.mxu0 0
        %425 = vmatprep.subr.bf16.mxu0 0
        %426 = vmatpush1.bf16.xpose.msra.mxu0 0
        %427 = vmatprep.subr.bf16.mxu0 0
        %428 = vmatpush1.bf16.xpose.msra.mxu0 0
        %429 = vmatprep.subr.bf16.mxu0 0
        %430 = vmatpush1.bf16.xpose.msra.mxu0 0
        %431 = vmatprep.subr.bf16.mxu0 0
        %432 = vmatpush1.bf16.xpose.msra.mxu0 0
        %433 = vmatprep.subr.bf16.mxu0 0
        %434 = vmatpush1.bf16.xpose.msra.mxu0 0
        %435 = vmatprep.subr.bf16.mxu0 0
        %436 = vmatpush1.bf16.xpose.msra.mxu0 0
        %437 = vmatprep.subr.bf16.mxu0 0
        %438 = vmatpush1.bf16.xpose.msra.mxu0 0
        %439 = vmatprep.subr.bf16.mxu0 0
        %440 = vmatpush1.bf16.xpose.msra.mxu0 0
        %441 = vmatprep.subr.bf16.mxu0 0
        %442 = vmatpush1.bf16.xpose.msra.mxu0 0
        %443 = vmatprep.subr.bf16.mxu0 0
        %444 = vmatpush1.bf16.xpose.msra.mxu0 0
        %445 = vmatprep.subr.bf16.mxu0 0
        %446 = vmatpush1.bf16.xpose.msra.mxu0 0
        %447 = vmatprep.subr.bf16.mxu0 0
        %448 = vmatpush1.bf16.xpose.msra.mxu0 0
        %449 = vmatprep.subr.bf16.mxu0 0
        %450 = vmatpush1.bf16.xpose.msra.mxu0 0
        %451 = vmatprep.mubr.bf16.mxu0 0
        %452 = vmatmul.mubr.bf16.gmra.mrb[0].mxu0 %v414
        %v453 = vpop.f32.mrb[0].mxu0
        %v454 = vadd.f32 0.0, %v453
        %v455 = vpop.f32.mrb[0].mxu0
        %v456 = vpop.f32.mrb[0].mxu0
        %v457 = vpop.f32.mrb[0].mxu0
        %458 = vdwg.mxu0
        %v460 = vsel %vm274, %v254, 0
        %v463 = vsel %vm274, %v262, 0
        %465 = vmatprep.subr.bf16.mxu0 0
        %466 = vmatpush1.bf16.xpose.msra.mxu0 %v463
        %467 = vmatprep.subr.bf16.mxu0 0
        %468 = vmatpush1.bf16.xpose.msra.mxu0 0
        %469 = vmatprep.subr.bf16.mxu0 0
        %470 = vmatpush1.bf16.xpose.msra.mxu0 0
        %471 = vmatprep.subr.bf16.mxu0 0
        %472 = vmatpush1.bf16.xpose.msra.mxu0 0
        %473 = vmatprep.subr.bf16.mxu0 0
        %474 = vmatpush1.bf16.xpose.msra.mxu0 0
        %475 = vmatprep.subr.bf16.mxu0 0
        %476 = vmatpush1.bf16.xpose.msra.mxu0 0
        %477 = vmatprep.subr.bf16.mxu0 0
        %478 = vmatpush1.bf16.xpose.msra.mxu0 0
        %479 = vmatprep.subr.bf16.mxu0 0
        %480 = vmatpush1.bf16.xpose.msra.mxu0 0
        %481 = vmatprep.subr.bf16.mxu0 0
        %482 = vmatpush1.bf16.xpose.msra.mxu0 0
        %483 = vmatprep.subr.bf16.mxu0 0
        %484 = vmatpush1.bf16.xpose.msra.mxu0 0
        %485 = vmatprep.subr.bf16.mxu0 0
        %486 = vmatpush1.bf16.xpose.msra.mxu0 0
        %487 = vmatprep.subr.bf16.mxu0 0
        %488 = vmatpush1.bf16.xpose.msra.mxu0 0
        %489 = vmatprep.subr.bf16.mxu0 0
        %490 = vmatpush1.bf16.xpose.msra.mxu0 0
        %491 = vmatprep.subr.bf16.mxu0 0
        %492 = vmatpush1.bf16.xpose.msra.mxu0 0
        %493 = vmatprep.subr.bf16.mxu0 0
        %494 = vmatpush1.bf16.xpose.msra.mxu0 0
        %495 = vmatprep.subr.bf16.mxu0 0
        %496 = vmatpush1.bf16.xpose.msra.mxu0 0
        %497 = vmatprep.mubr.bf16.mxu0 0
        %498 = vmatmul.mubr.bf16.gmra.mrb[0].mxu0 %v460
        %v499 = vpop.f32.mrb[0].mxu0
        %v500 = vadd.f32 0.0, %v499
        %v501 = vpop.f32.mrb[0].mxu0
        %v502 = vpop.f32.mrb[0].mxu0
        %v503 = vpop.f32.mrb[0].mxu0
        %504 = vdwg.mxu0
        %v506 = vsel %vm274, %v255, 0
        %v509 = vsel %vm274, %v263, 0
        %511 = vmatprep.subr.bf16.mxu0 0
        %512 = vmatpush1.bf16.xpose.msra.mxu0 %v509
        %513 = vmatprep.subr.bf16.mxu0 0
        %514 = vmatpush1.bf16.xpose.msra.mxu0 0
        %515 = vmatprep.subr.bf16.mxu0 0
        %516 = vmatpush1.bf16.xpose.msra.mxu0 0
        %517 = vmatprep.subr.bf16.mxu0 0
        %518 = vmatpush1.bf16.xpose.msra.mxu0 0
        %519 = vmatprep.subr.bf16.mxu0 0
        %520 = vmatpush1.bf16.xpose.msra.mxu0 0
        %521 = vmatprep.subr.bf16.mxu0 0
        %522 = vmatpush1.bf16.xpose.msra.mxu0 0
        %523 = vmatprep.subr.bf16.mxu0 0
        %524 = vmatpush1.bf16.xpose.msra.mxu0 0
        %525 = vmatprep.subr.bf16.mxu0 0
        %526 = vmatpush1.bf16.xpose.msra.mxu0 0
        %527 = vmatprep.subr.bf16.mxu0 0
        %528 = vmatpush1.bf16.xpose.msra.mxu0 0
        %529 = vmatprep.subr.bf16.mxu0 0
        %530 = vmatpush1.bf16.xpose.msra.mxu0 0
        %531 = vmatprep.subr.bf16.mxu0 0
        %532 = vmatpush1.bf16.xpose.msra.mxu0 0
        %533 = vmatprep.subr.bf16.mxu0 0
        %534 = vmatpush1.bf16.xpose.msra.mxu0 0
        %535 = vmatprep.subr.bf16.mxu0 0
        %536 = vmatpush1.bf16.xpose.msra.mxu0 0
        %537 = vmatprep.subr.bf16.mxu0 0
        %538 = vmatpush1.bf16.xpose.msra.mxu0 0
        %539 = vmatprep.subr.bf16.mxu0 0
        %540 = vmatpush1.bf16.xpose.msra.mxu0 0
        %541 = vmatprep.subr.bf16.mxu0 0
        %542 = vmatpush1.bf16.xpose.msra.mxu0 0
        %543 = vmatprep.mubr.bf16.mxu0 0
        %544 = vmatmul.mubr.bf16.gmra.mrb[0].mxu0 %v506
        %v545 = vpop.f32.mrb[0].mxu0
        %v546 = vadd.f32 0.0, %v545
        %v547 = vpop.f32.mrb[0].mxu0
        %v548 = vpop.f32.mrb[0].mxu0
        %v549 = vpop.f32.mrb[0].mxu0
        %550 = vdwg.mxu0
        %v552 = vsel %vm274, %v256, 0
        %v555 = vsel %vm274, %v264, 0
        %557 = vmatprep.subr.bf16.mxu0 0
        %558 = vmatpush1.bf16.xpose.msra.mxu0 %v555
        %559 = vmatprep.subr.bf16.mxu0 0
        %560 = vmatpush1.bf16.xpose.msra.mxu0 0
        %561 = vmatprep.subr.bf16.mxu0 0
        %562 = vmatpush1.bf16.xpose.msra.mxu0 0
        %563 = vmatprep.subr.bf16.mxu0 0
        %564 = vmatpush1.bf16.xpose.msra.mxu0 0
        %565 = vmatprep.subr.bf16.mxu0 0
        %566 = vmatpush1.bf16.xpose.msra.mxu0 0
        %567 = vmatprep.subr.bf16.mxu0 0
        %568 = vmatpush1.bf16.xpose.msra.mxu0 0
        %569 = vmatprep.subr.bf16.mxu0 0
        %570 = vmatpush1.bf16.xpose.msra.mxu0 0
        %571 = vmatprep.subr.bf16.mxu0 0
        %572 = vmatpush1.bf16.xpose.msra.mxu0 0
        %573 = vmatprep.subr.bf16.mxu0 0
        %574 = vmatpush1.bf16.xpose.msra.mxu0 0
        %575 = vmatprep.subr.bf16.mxu0 0
        %576 = vmatpush1.bf16.xpose.msra.mxu0 0
        %577 = vmatprep.subr.bf16.mxu0 0
        %578 = vmatpush1.bf16.xpose.msra.mxu0 0
        %579 = vmatprep.subr.bf16.mxu0 0
        %580 = vmatpush1.bf16.xpose.msra.mxu0 0
        %581 = vmatprep.subr.bf16.mxu0 0
        %582 = vmatpush1.bf16.xpose.msra.mxu0 0
        %583 = vmatprep.subr.bf16.mxu0 0
        %584 = vmatpush1.bf16.xpose.msra.mxu0 0
        %585 = vmatprep.subr.bf16.mxu0 0
        %586 = vmatpush1.bf16.xpose.msra.mxu0 0
        %587 = vmatprep.subr.bf16.mxu0 0
        %588 = vmatpush1.bf16.xpose.msra.mxu0 0
        %589 = vmatprep.mubr.bf16.mxu0 0
        %590 = vmatmul.mubr.bf16.gmra.mrb[0].mxu0 %v552
        %v591 = vpop.f32.mrb[0].mxu0
        %v592 = vadd.f32 0.0, %v591
        %v593 = vpop.f32.mrb[0].mxu0
        %v594 = vpop.f32.mrb[0].mxu0
        %v595 = vpop.f32.mrb[0].mxu0
        %596 = vdwg.mxu0
        %v598 = vsel %vm274, %v257, 0
        %v601 = vsel %vm274, %v265, 0
        %603 = vmatprep.subr.bf16.mxu0 0
        %604 = vmatpush1.bf16.xpose.msra.mxu0 %v601
        %605 = vmatprep.subr.bf16.mxu0 0
        %606 = vmatpush1.bf16.xpose.msra.mxu0 0
        %607 = vmatprep.subr.bf16.mxu0 0
        %608 = vmatpush1.bf16.xpose.msra.mxu0 0
        %609 = vmatprep.subr.bf16.mxu0 0
        %610 = vmatpush1.bf16.xpose.msra.mxu0 0
        %611 = vmatprep.subr.bf16.mxu0 0
        %612 = vmatpush1.bf16.xpose.msra.mxu0 0
        %613 = vmatprep.subr.bf16.mxu0 0
        %614 = vmatpush1.bf16.xpose.msra.mxu0 0
        %615 = vmatprep.subr.bf16.mxu0 0
        %616 = vmatpush1.bf16.xpose.msra.mxu0 0
        %617 = vmatprep.subr.bf16.mxu0 0
        %618 = vmatpush1.bf16.xpose.msra.mxu0 0
        %619 = vmatprep.subr.bf16.mxu0 0
        %620 = vmatpush1.bf16.xpose.msra.mxu0 0
        %621 = vmatprep.subr.bf16.mxu0 0
        %622 = vmatpush1.bf16.xpose.msra.mxu0 0
        %623 = vmatprep.subr.bf16.mxu0 0
        %624 = vmatpush1.bf16.xpose.msra.mxu0 0
        %625 = vmatprep.subr.bf16.mxu0 0
        %626 = vmatpush1.bf16.xpose.msra.mxu0 0
        %627 = vmatprep.subr.bf16.mxu0 0
        %628 = vmatpush1.bf16.xpose.msra.mxu0 0
        %629 = vmatprep.subr.bf16.mxu0 0
        %630 = vmatpush1.bf16.xpose.msra.mxu0 0
        %631 = vmatprep.subr.bf16.mxu0 0
        %632 = vmatpush1.bf16.xpose.msra.mxu0 0
        %633 = vmatprep.subr.bf16.mxu0 0
        %634 = vmatpush1.bf16.xpose.msra.mxu0 0
        %635 = vmatprep.mubr.bf16.mxu0 0
        %636 = vmatmul.mubr.bf16.gmra.mrb[0].mxu0 %v598
        %v637 = vpop.f32.mrb[0].mxu0
        %v638 = vadd.f32 0.0, %v637
        %v639 = vpop.f32.mrb[0].mxu0
        %v640 = vpop.f32.mrb[0].mxu0
        %v641 = vpop.f32.mrb[0].mxu0
        %642 = vdwg.mxu0
        %v643 = vmul.f32 %v316, 0.5
        %v644 = vmul.f32 %v362, 0.5
        %v645 = vmul.f32 %v408, 0.5
        %v646 = vmul.f32 %v454, 0.5
        %v647 = vmul.f32 %v500, 0.5
        %v648 = vmul.f32 %v546, 0.5
        %v649 = vmul.f32 %v592, 0.5
        %v650 = vmul.f32 %v638, 0.5
        %vm651 = vcmask 64512
        %v652 = vsel %vm651, %v643, -inf
        %653 = vmax.xlane.f32.xlu0 %v652
        %v654 = vpop.xlane.xlu0 %653
        %v655 = vsel %vm651, %v644, -inf
        %656 = vmax.xlane.f32.xlu0 %v655
        %v657 = vpop.xlane.xlu0 %656
        %v658 = vsel %vm651, %v645, -inf
        %659 = vmax.xlane.f32.xlu0 %v658
        %v660 = vpop.xlane.xlu0 %659
        %v661 = vsel %vm651, %v646, -inf
        %662 = vmax.xlane.f32.xlu0 %v661
        %v663 = vpop.xlane.xlu0 %662
        %v664 = vsel %vm651, %v647, -inf
        %665 = vmax.xlane.f32.xlu0 %v664
        %v666 = vpop.xlane.xlu0 %665
        %v667 = vsel %vm651, %v648, -inf
        %668 = vmax.xlane.f32.xlu0 %v667
        %v669 = vpop.xlane.xlu0 %668
        %v670 = vsel %vm651, %v649, -inf
        %671 = vmax.xlane.f32.xlu0 %v670
        %v672 = vpop.xlane.xlu0 %671
        %v673 = vsel %vm651, %v650, -inf
        %674 = vmax.xlane.f32.xlu0 %v673
        %v675 = vpop.xlane.xlu0 %674
        %v676 = vsub.f32 %v643, %v654
        %v677 = vsub.f32 %v644, %v657
        %v678 = vsub.f32 %v645, %v660
        %v679 = vsub.f32 %v646, %v663
        %v680 = vsub.f32 %v647, %v666
        %v681 = vsub.f32 %v648, %v669
        %v682 = vsub.f32 %v649, %v672
        %v683 = vsub.f32 %v650, %v675
        %v684 = vmul.f32 %v676, 1.442695
        %v685 = vpow.pop %v684
        %v686 = vmul.f32 %v677, 1.442695
        %v687 = vpow.pop %v686
        %v688 = vmul.f32 %v678, 1.442695
        %v689 = vpow.pop %v688
        %v690 = vmul.f32 %v679, 1.442695
        %v691 = vpow.pop %v690
        %v692 = vmul.f32 %v680, 1.442695
        %v693 = vpow.pop %v692
        %v694 = vmul.f32 %v681, 1.442695
        %v695 = vpow.pop %v694
        %v696 = vmul.f32 %v682, 1.442695
        %v697 = vpow.pop %v696
        %v698 = vmul.f32 %v683, 1.442695
        %v699 = vpow.pop %v698
        %v700 = vsel %vm651, %v685, 0.0
        %701 = vadd.xlane.f32.xlu0 %v700
        %v702 = vpop.xlane.xlu0 %701
        %v703 = vsel %vm651, %v687, 0.0
        %704 = vadd.xlane.f32.xlu0 %v703
        %v705 = vpop.xlane.xlu0 %704
        %v706 = vsel %vm651, %v689, 0.0
        %707 = vadd.xlane.f32.xlu0 %v706
        %v708 = vpop.xlane.xlu0 %707
        %v709 = vsel %vm651, %v691, 0.0
        %710 = vadd.xlane.f32.xlu0 %v709
        %v711 = vpop.xlane.xlu0 %710
        %v712 = vsel %vm651, %v693, 0.0
        %713 = vadd.xlane.f32.xlu0 %v712
        %v714 = vpop.xlane.xlu0 %713
        %v715 = vsel %vm651, %v695, 0.0
        %716 = vadd.xlane.f32.xlu0 %v715
        %v717 = vpop.xlane.xlu0 %716
        %v718 = vsel %vm651, %v697, 0.0
        %719 = vadd.xlane.f32.xlu0 %v718
        %v720 = vpop.xlane.xlu0 %719
        %v721 = vsel %vm651, %v699, 0.0
        %722 = vadd.xlane.f32.xlu0 %v721
        %v723 = vpop.xlane.xlu0 %722
        %v724 = vrcp.pop %v702
        %v725 = vrcp.pop %v705
        %v726 = vrcp.pop %v708
        %v727 = vrcp.pop %v711
        %v728 = vrcp.pop %v714
        %v729 = vrcp.pop %v717
        %v730 = vrcp.pop %v720
        %v731 = vrcp.pop %v723
        %v732 = vmul.f32 %v685, %v724
        %v733 = vmul.f32 %v687, %v725
        %v734 = vmul.f32 %v689, %v726
        %v735 = vmul.f32 %v691, %v727
        %v736 = vmul.f32 %v693, %v728
        %v737 = vmul.f32 %v695, %v729
        %v738 = vmul.f32 %v697, %v730
        %v739 = vmul.f32 %v699, %v731
        %v740 = vpack.c.bf16 %v732, %v732
        %v741 = vpack.c.bf16 %v733, %v733
        %v742 = vpack.c.bf16 %v734, %v734
        %v743 = vpack.c.bf16 %v735, %v735
        %v744 = vpack.c.bf16 %v736, %v736
        %v745 = vpack.c.bf16 %v737, %v737
        %v746 = vpack.c.bf16 %v738, %v738
        %v747 = vpack.c.bf16 %v739, %v739
        %v749 = vsel %vm651, %v740, 0
        %vm751 = vcmask 1043456
        %v753 = vsel %vm751, %v266, 0
        %755 = vmatprep.subr.bf16.mxu0 0
        %756 = vmatpush1.bf16.msra.mxu0 %v753
        %757 = vmatprep.subr.bf16.mxu0 0
        %758 = vmatpush1.bf16.msra.mxu0 0
        %759 = vmatprep.subr.bf16.mxu0 0
        %760 = vmatpush1.bf16.msra.mxu0 0
        %761 = vmatprep.subr.bf16.mxu0 0
        %762 = vmatpush1.bf16.msra.mxu0 0
        %763 = vmatprep.subr.bf16.mxu0 0
        %764 = vmatpush1.bf16.msra.mxu0 0
        %765 = vmatprep.subr.bf16.mxu0 0
        %766 = vmatpush1.bf16.msra.mxu0 0
        %767 = vmatprep.subr.bf16.mxu0 0
        %768 = vmatpush1.bf16.msra.mxu0 0
        %769 = vmatprep.subr.bf16.mxu0 0
        %770 = vmatpush1.bf16.msra.mxu0 0
        %771 = vmatprep.subr.bf16.mxu0 0
        %772 = vmatpush1.bf16.msra.mxu0 0
        %773 = vmatprep.subr.bf16.mxu0 0
        %774 = vmatpush1.bf16.msra.mxu0 0
        %775 = vmatprep.subr.bf16.mxu0 0
        %776 = vmatpush1.bf16.msra.mxu0 0
        %777 = vmatprep.subr.bf16.mxu0 0
        %778 = vmatpush1.bf16.msra.mxu0 0
        %779 = vmatprep.subr.bf16.mxu0 0
        %780 = vmatpush1.bf16.msra.mxu0 0
        %781 = vmatprep.subr.bf16.mxu0 0
        %782 = vmatpush1.bf16.msra.mxu0 0
        %783 = vmatprep.subr.bf16.mxu0 0
        %784 = vmatpush1.bf16.msra.mxu0 0
        %785 = vmatprep.subr.bf16.mxu0 0
        %786 = vmatpush1.bf16.msra.mxu0 0
        %787 = vmatprep.mubr.bf16.mxu0 0
        %788 = vmatmul.mubr.bf16.gmra.mrb[0].mxu0 %v749
        %v789 = vpop.f32.mrb[0].mxu0
        %v790 = vadd.f32 0.0, %v789
        %v791 = vpop.f32.mrb[0].mxu0
        %v792 = vpop.f32.mrb[0].mxu0
        %v793 = vpop.f32.mrb[0].mxu0
        %794 = vdwg.mxu0
        %v796 = vsel %vm651, %v741, 0
        %v799 = vsel %vm751, %v267, 0
        %801 = vmatprep.subr.bf16.mxu0 0
        %802 = vmatpush1.bf16.msra.mxu0 %v799
        %803 = vmatprep.subr.bf16.mxu0 0
        %804 = vmatpush1.bf16.msra.mxu0 0
        %805 = vmatprep.subr.bf16.mxu0 0
        %806 = vmatpush1.bf16.msra.mxu0 0
        %807 = vmatprep.subr.bf16.mxu0 0
        %808 = vmatpush1.bf16.msra.mxu0 0
        %809 = vmatprep.subr.bf16.mxu0 0
        %810 = vmatpush1.bf16.msra.mxu0 0
        %811 = vmatprep.subr.bf16.mxu0 0
        %812 = vmatpush1.bf16.msra.mxu0 0
        %813 = vmatprep.subr.bf16.mxu0 0
        %814 = vmatpush1.bf16.msra.mxu0 0
        %815 = vmatprep.subr.bf16.mxu0 0
        %816 = vmatpush1.bf16.msra.mxu0 0
        %817 = vmatprep.subr.bf16.mxu0 0
        %818 = vmatpush1.bf16.msra.mxu0 0
        %819 = vmatprep.subr.bf16.mxu0 0
        %820 = vmatpush1.bf16.msra.mxu0 0
        %821 = vmatprep.subr.bf16.mxu0 0
        %822 = vmatpush1.bf16.msra.mxu0 0
        %823 = vmatprep.subr.bf16.mxu0 0
        %824 = vmatpush1.bf16.msra.mxu0 0
        %825 = vmatprep.subr.bf16.mxu0 0
        %826 = vmatpush1.bf16.msra.mxu0 0
        %827 = vmatprep.subr.bf16.mxu0 0
        %828 = vmatpush1.bf16.msra.mxu0 0
        %829 = vmatprep.subr.bf16.mxu0 0
        %830 = vmatpush1.bf16.msra.mxu0 0
        %831 = vmatprep.subr.bf16.mxu0 0
        %832 = vmatpush1.bf16.msra.mxu0 0
        %833 = vmatprep.mubr.bf16.mxu0 0
        %834 = vmatmul.mubr.bf16.gmra.mrb[0].mxu0 %v796
        %v835 = vpop.f32.mrb[0].mxu0
        %v836 = vadd.f32 0.0, %v835
        %v837 = vpop.f32.mrb[0].mxu0
        %v838 = vpop.f32.mrb[0].mxu0
        %v839 = vpop.f32.mrb[0].mxu0
        %840 = vdwg.mxu0
        %v842 = vsel %vm651, %v742, 0
        %v845 = vsel %vm751, %v268, 0
        %847 = vmatprep.subr.bf16.mxu0 0
        %848 = vmatpush1.bf16.msra.mxu0 %v845
        %849 = vmatprep.subr.bf16.mxu0 0
        %850 = vmatpush1.bf16.msra.mxu0 0
        %851 = vmatprep.subr.bf16.mxu0 0
        %852 = vmatpush1.bf16.msra.mxu0 0
        %853 = vmatprep.subr.bf16.mxu0 0
        %854 = vmatpush1.bf16.msra.mxu0 0
        %855 = vmatprep.subr.bf16.mxu0 0
        %856 = vmatpush1.bf16.msra.mxu0 0
        %857 = vmatprep.subr.bf16.mxu0 0
        %858 = vmatpush1.bf16.msra.mxu0 0
        %859 = vmatprep.subr.bf16.mxu0 0
        %860 = vmatpush1.bf16.msra.mxu0 0
        %861 = vmatprep.subr.bf16.mxu0 0
        %862 = vmatpush1.bf16.msra.mxu0 0
        %863 = vmatprep.subr.bf16.mxu0 0
        %864 = vmatpush1.bf16.msra.mxu0 0
        %865 = vmatprep.subr.bf16.mxu0 0
        %866 = vmatpush1.bf16.msra.mxu0 0
        %867 = vmatprep.subr.bf16.mxu0 0
        %868 = vmatpush1.bf16.msra.mxu0 0
        %869 = vmatprep.subr.bf16.mxu0 0
        %870 = vmatpush1.bf16.msra.mxu0 0
        %871 = vmatprep.subr.bf16.mxu0 0
        %872 = vmatpush1.bf16.msra.mxu0 0
        %873 = vmatprep.subr.bf16.mxu0 0
        %874 = vmatpush1.bf16.msra.mxu0 0
        %875 = vmatprep.subr.bf16.mxu0 0
        %876 = vmatpush1.bf16.msra.mxu0 0
        %877 = vmatprep.subr.bf16.mxu0 0
        %878 = vmatpush1.bf16.msra.mxu0 0
        %879 = vmatprep.mubr.bf16.mxu0 0
        %880 = vmatmul.mubr.bf16.gmra.mrb[0].mxu0 %v842
        %v881 = vpop.f32.mrb[0].mxu0
        %v882 = vadd.f32 0.0, %v881
        %v883 = vpop.f32.mrb[0].mxu0
        %v884 = vpop.f32.mrb[0].mxu0
        %v885 = vpop.f32.mrb[0].mxu0
        %886 = vdwg.mxu0
        %v888 = vsel %vm651, %v743, 0
        %v891 = vsel %vm751, %v269, 0
        %893 = vmatprep.subr.bf16.mxu0 0
        %894 = vmatpush1.bf16.msra.mxu0 %v891
        %895 = vmatprep.subr.bf16.mxu0 0
        %896 = vmatpush1.bf16.msra.mxu0 0
        %897 = vmatprep.subr.bf16.mxu0 0
        %898 = vmatpush1.bf16.msra.mxu0 0
        %899 = vmatprep.subr.bf16.mxu0 0
        %900 = vmatpush1.bf16.msra.mxu0 0
        %901 = vmatprep.subr.bf16.mxu0 0
        %902 = vmatpush1.bf16.msra.mxu0 0
        %903 = vmatprep.subr.bf16.mxu0 0
        %904 = vmatpush1.bf16.msra.mxu0 0
        %905 = vmatprep.subr.bf16.mxu0 0
        %906 = vmatpush1.bf16.msra.mxu0 0
        %907 = vmatprep.subr.bf16.mxu0 0
        %908 = vmatpush1.bf16.msra.mxu0 0
        %909 = vmatprep.subr.bf16.mxu0 0
        %910 = vmatpush1.bf16.msra.mxu0 0
        %911 = vmatprep.subr.bf16.mxu0 0
        %912 = vmatpush1.bf16.msra.mxu0 0
        %913 = vmatprep.subr.bf16.mxu0 0
        %914 = vmatpush1.bf16.msra.mxu0 0
        %915 = vmatprep.subr.bf16.mxu0 0
        %916 = vmatpush1.bf16.msra.mxu0 0
        %917 = vmatprep.subr.bf16.mxu0 0
        %918 = vmatpush1.bf16.msra.mxu0 0
        %919 = vmatprep.subr.bf16.mxu0 0
        %920 = vmatpush1.bf16.msra.mxu0 0
        %921 = vmatprep.subr.bf16.mxu0 0
        %922 = vmatpush1.bf16.msra.mxu0 0
        %923 = vmatprep.subr.bf16.mxu0 0
        %924 = vmatpush1.bf16.msra.mxu0 0
        %925 = vmatprep.mubr.bf16.mxu0 0
        %926 = vmatmul.mubr.bf16.gmra.mrb[0].mxu0 %v888
        %v927 = vpop.f32.mrb[0].mxu0
        %v928 = vadd.f32 0.0, %v927
        %v929 = vpop.f32.mrb[0].mxu0
        %v930 = vpop.f32.mrb[0].mxu0
        %v931 = vpop.f32.mrb[0].mxu0
        %932 = vdwg.mxu0
        %v934 = vsel %vm651, %v744, 0
        %v937 = vsel %vm751, %v270, 0
        %939 = vmatprep.subr.bf16.mxu0 0
        %940 = vmatpush1.bf16.msra.mxu0 %v937
        %941 = vmatprep.subr.bf16.mxu0 0
        %942 = vmatpush1.bf16.msra.mxu0 0
        %943 = vmatprep.subr.bf16.mxu0 0
        %944 = vmatpush1.bf16.msra.mxu0 0
        %945 = vmatprep.subr.bf16.mxu0 0
        %946 = vmatpush1.bf16.msra.mxu0 0
        %947 = vmatprep.subr.bf16.mxu0 0
        %948 = vmatpush1.bf16.msra.mxu0 0
        %949 = vmatprep.subr.bf16.mxu0 0
        %950 = vmatpush1.bf16.msra.mxu0 0
        %951 = vmatprep.subr.bf16.mxu0 0
        %952 = vmatpush1.bf16.msra.mxu0 0
        %953 = vmatprep.subr.bf16.mxu0 0
        %954 = vmatpush1.bf16.msra.mxu0 0
        %955 = vmatprep.subr.bf16.mxu0 0
        %956 = vmatpush1.bf16.msra.mxu0 0
        %957 = vmatprep.subr.bf16.mxu0 0
        %958 = vmatpush1.bf16.msra.mxu0 0
        %959 = vmatprep.subr.bf16.mxu0 0
        %960 = vmatpush1.bf16.msra.mxu0 0
        %961 = vmatprep.subr.bf16.mxu0 0
        %962 = vmatpush1.bf16.msra.mxu0 0
        %963 = vmatprep.subr.bf16.mxu0 0
        %964 = vmatpush1.bf16.msra.mxu0 0
        %965 = vmatprep.subr.bf16.mxu0 0
        %966 = vmatpush1.bf16.msra.mxu0 0
        %967 = vmatprep.subr.bf16.mxu0 0
        %968 = vmatpush1.bf16.msra.mxu0 0
        %969 = vmatprep.subr.bf16.mxu0 0
        %970 = vmatpush1.bf16.msra.mxu0 0
        %971 = vmatprep.mubr.bf16.mxu0 0
        %972 = vmatmul.mubr.bf16.gmra.mrb[0].mxu0 %v934
        %v973 = vpop.f32.mrb[0].mxu0
        %v974 = vadd.f32 0.0, %v973
        %v975 = vpop.f32.mrb[0].mxu0
        %v976 = vpop.f32.mrb[0].mxu0
        %v977 = vpop.f32.mrb[0].mxu0
        %978 = vdwg.mxu0
        %v980 = vsel %vm651, %v745, 0
        %v983 = vsel %vm751, %v271, 0
        %985 = vmatprep.subr.bf16.mxu0 0
        %986 = vmatpush1.bf16.msra.mxu0 %v983
        %987 = vmatprep.subr.bf16.mxu0 0
        %988 = vmatpush1.bf16.msra.mxu0 0
        %989 = vmatprep.subr.bf16.mxu0 0
        %990 = vmatpush1.bf16.msra.mxu0 0
        %991 = vmatprep.subr.bf16.mxu0 0
        %992 = vmatpush1.bf16.msra.mxu0 0
        %993 = vmatprep.subr.bf16.mxu0 0
        %994 = vmatpush1.bf16.msra.mxu0 0
        %995 = vmatprep.subr.bf16.mxu0 0
        %996 = vmatpush1.bf16.msra.mxu0 0
        %997 = vmatprep.subr.bf16.mxu0 0
        %998 = vmatpush1.bf16.msra.mxu0 0
        %999 = vmatprep.subr.bf16.mxu0 0
        %1000 = vmatpush1.bf16.msra.mxu0 0
        %1001 = vmatprep.subr.bf16.mxu0 0
        %1002 = vmatpush1.bf16.msra.mxu0 0
        %1003 = vmatprep.subr.bf16.mxu0 0
        %1004 = vmatpush1.bf16.msra.mxu0 0
        %1005 = vmatprep.subr.bf16.mxu0 0
        %1006 = vmatpush1.bf16.msra.mxu0 0
        %1007 = vmatprep.subr.bf16.mxu0 0
        %1008 = vmatpush1.bf16.msra.mxu0 0
        %1009 = vmatprep.subr.bf16.mxu0 0
        %1010 = vmatpush1.bf16.msra.mxu0 0
        %1011 = vmatprep.subr.bf16.mxu0 0
        %1012 = vmatpush1.bf16.msra.mxu0 0
        %1013 = vmatprep.subr.bf16.mxu0 0
        %1014 = vmatpush1.bf16.msra.mxu0 0
        %1015 = vmatprep.subr.bf16.mxu0 0
        %1016 = vmatpush1.bf16.msra.mxu0 0
        %1017 = vmatprep.mubr.bf16.mxu0 0
        %1018 = vmatmul.mubr.bf16.gmra.mrb[0].mxu0 %v980
        %v1019 = vpop.f32.mrb[0].mxu0
        %v1020 = vadd.f32 0.0, %v1019
        %v1021 = vpop.f32.mrb[0].mxu0
        %v1022 = vpop.f32.mrb[0].mxu0
        %v1023 = vpop.f32.mrb[0].mxu0
        %1024 = vdwg.mxu0
        %v1026 = vsel %vm651, %v746, 0
        %v1029 = vsel %vm751, %v272, 0
        %1031 = vmatprep.subr.bf16.mxu0 0
        %1032 = vmatpush1.bf16.msra.mxu0 %v1029
        %1033 = vmatprep.subr.bf16.mxu0 0
        %1034 = vmatpush1.bf16.msra.mxu0 0
        %1035 = vmatprep.subr.bf16.mxu0 0
        %1036 = vmatpush1.bf16.msra.mxu0 0
        %1037 = vmatprep.subr.bf16.mxu0 0
        %1038 = vmatpush1.bf16.msra.mxu0 0
        %1039 = vmatprep.subr.bf16.mxu0 0
        %1040 = vmatpush1.bf16.msra.mxu0 0
        %1041 = vmatprep.subr.bf16.mxu0 0
        %1042 = vmatpush1.bf16.msra.mxu0 0
        %1043 = vmatprep.subr.bf16.mxu0 0
        %1044 = vmatpush1.bf16.msra.mxu0 0
        %1045 = vmatprep.subr.bf16.mxu0 0
        %1046 = vmatpush1.bf16.msra.mxu0 0
        %1047 = vmatprep.subr.bf16.mxu0 0
        %1048 = vmatpush1.bf16.msra.mxu0 0
        %1049 = vmatprep.subr.bf16.mxu0 0
        %1050 = vmatpush1.bf16.msra.mxu0 0
        %1051 = vmatprep.subr.bf16.mxu0 0
        %1052 = vmatpush1.bf16.msra.mxu0 0
        %1053 = vmatprep.subr.bf16.mxu0 0
        %1054 = vmatpush1.bf16.msra.mxu0 0
        %1055 = vmatprep.subr.bf16.mxu0 0
        %1056 = vmatpush1.bf16.msra.mxu0 0
        %1057 = vmatprep.subr.bf16.mxu0 0
        %1058 = vmatpush1.bf16.msra.mxu0 0
        %1059 = vmatprep.subr.bf16.mxu0 0
        %1060 = vmatpush1.bf16.msra.mxu0 0
        %1061 = vmatprep.subr.bf16.mxu0 0
        %1062 = vmatpush1.bf16.msra.mxu0 0
        %1063 = vmatprep.mubr.bf16.mxu0 0
        %1064 = vmatmul.mubr.bf16.gmra.mrb[0].mxu0 %v1026
        %v1065 = vpop.f32.mrb[0].mxu0
        %v1066 = vadd.f32 0.0, %v1065
        %v1067 = vpop.f32.mrb[0].mxu0
        %v1068 = vpop.f32.mrb[0].mxu0
        %v1069 = vpop.f32.mrb[0].mxu0
        %1070 = vdwg.mxu0
        %v1072 = vsel %vm651, %v747, 0
        %v1075 = vsel %vm751, %v273, 0
        %1077 = vmatprep.subr.bf16.mxu0 0
        %1078 = vmatpush1.bf16.msra.mxu0 %v1075
        %1079 = vmatprep.subr.bf16.mxu0 0
        %1080 = vmatpush1.bf16.msra.mxu0 0
        %1081 = vmatprep.subr.bf16.mxu0 0
        %1082 = vmatpush1.bf16.msra.mxu0 0
        %1083 = vmatprep.subr.bf16.mxu0 0
        %1084 = vmatpush1.bf16.msra.mxu0 0
        %1085 = vmatprep.subr.bf16.mxu0 0
        %1086 = vmatpush1.bf16.msra.mxu0 0
        %1087 = vmatprep.subr.bf16.mxu0 0
        %1088 = vmatpush1.bf16.msra.mxu0 0
        %1089 = vmatprep.subr.bf16.mxu0 0
        %1090 = vmatpush1.bf16.msra.mxu0 0
        %1091 = vmatprep.subr.bf16.mxu0 0
        %1092 = vmatpush1.bf16.msra.mxu0 0
        %1093 = vmatprep.subr.bf16.mxu0 0
        %1094 = vmatpush1.bf16.msra.mxu0 0
        %1095 = vmatprep.subr.bf16.mxu0 0
        %1096 = vmatpush1.bf16.msra.mxu0 0
        %1097 = vmatprep.subr.bf16.mxu0 0
        %1098 = vmatpush1.bf16.msra.mxu0 0
        %1099 = vmatprep.subr.bf16.mxu0 0
        %1100 = vmatpush1.bf16.msra.mxu0 0
        %1101 = vmatprep.subr.bf16.mxu0 0
        %1102 = vmatpush1.bf16.msra.mxu0 0
        %1103 = vmatprep.subr.bf16.mxu0 0
        %1104 = vmatpush1.bf16.msra.mxu0 0
        %1105 = vmatprep.subr.bf16.mxu0 0
        %1106 = vmatpush1.bf16.msra.mxu0 0
        %1107 = vmatprep.subr.bf16.mxu0 0
        %1108 = vmatpush1.bf16.msra.mxu0 0
        %1109 = vmatprep.mubr.bf16.mxu0 0
        %1110 = vmatmul.mubr.bf16.gmra.mrb[0].mxu0 %v1072
        %v1111 = vpop.f32.mrb[0].mxu0
        %v1112 = vadd.f32 0.0, %v1111
        %v1113 = vpop.f32.mrb[0].mxu0
        %v1114 = vpop.f32.mrb[0].mxu0
        %v1115 = vpop.f32.mrb[0].mxu0
        %1116 = vdwg.mxu0
        %v1117 = vpack.c.bf16 %v790, %v790
        %v1118 = vpack.c.bf16 %v836, %v836
        %v1119 = vpack.c.bf16 %v882, %v882
        %v1120 = vpack.c.bf16 %v928, %v928
        %v1121 = vpack.c.bf16 %v974, %v974
        %v1122 = vpack.c.bf16 %v1020, %v1020
        %v1123 = vpack.c.bf16 %v1066, %v1066
        %v1124 = vpack.c.bf16 %v1112, %v1112
        %vm1125 = vcmask 27648
        %1126 = vst.msk [vmem:[%s248] sm:$0xf] %vm1125, %v1117
        %1127 = vst.msk [vmem:[%s248 + $0x4] sm:$0xf] %vm1125, %v1118
        %1128 = vst.msk [vmem:[%s248 + $0x8] sm:$0xf] %vm1125, %v1119
        %1129 = vst.msk [vmem:[%s248 + $0xc] sm:$0xf] %vm1125, %v1120
        %1130 = vst.msk [vmem:[%s248 + $0x10] sm:$0xf] %vm1125, %v1121
        %1131 = vst.msk [vmem:[%s248 + $0x14] sm:$0xf] %vm1125, %v1122
        %1132 = vst.msk [vmem:[%s248 + $0x18] sm:$0xf] %vm1125, %v1123
        %1133 = vst.msk [vmem:[%s248 + $0x1c] sm:$0xf] %vm1125, %v1124
        %1134 = vst.msk [vmem:[%s228] sm:$0xff] %vm651, %v732
        %1135 = vst.msk [vmem:[%s228 + $0x8] sm:$0xff] %vm651, %v733
        %1136 = vst.msk [vmem:[%s228 + $0x10] sm:$0xff] %vm651, %v734
        %1137 = vst.msk [vmem:[%s228 + $0x18] sm:$0xff] %vm651, %v735
        %1138 = vst.msk [vmem:[%s228 + $0x20] sm:$0xff] %vm651, %v736
        %1139 = vst.msk [vmem:[%s228 + $0x28] sm:$0xff] %vm651, %v737
        %1140 = vst.msk [vmem:[%s228 + $0x30] sm:$0xff] %vm651, %v738
        %1141 = vst.msk [vmem:[%s228 + $0x38] sm:$0xff] %vm651, %v739
        %p1142 = scmp.lt.s32.totalorder %s19, 1
        %s1143 = scalar_select %p1142, %s19, 1
        %s1144 = smul.addr %s1143, 8
        %s1145 = smul.addr %s1144, 4
        %s1146 = scalar_lea.vmem %s3, %s1145
        %s1147 = sand.u32 %s131, 1
        %s1148 = scalar_lea.sflag [#allocation3], %s1147
        %s1149 = sand.u32 %s131, 1
        %s1150 = smul.addr %s1149, 64
        %s1151 = scalar_lea.vmem [#allocation2], %s1150
        // Predicated region
        $region33: #{multiway_contextual_attention.14} parent=31 // pred_check
          %p1152 = pneg %p115
        $region34: #{multiway_contextual_attention.14} parent=31 // pred_check_branch
          %1154 = sbr.rel (%p1152) target = $region36
        $region35: #{multiway_contextual_attention.14} parent=31 // pred_region
          _
        $region36: #{multiway_contextual_attention.14} parent=31 // pred_fallthru
          _
        // Predicated region
        $region37: #{multiway_contextual_attention.14} parent=31 // pred_check
          %p1155 = pneg %p141
        $region38: #{multiway_contextual_attention.14} parent=31 // pred_check_branch
          %1157 = sbr.rel (%p1155) target = $region40
        $region39: #{multiway_contextual_attention.14} parent=31 // pred_region
          %s1159 = ssub.s32 1024, 1024
          %1160 = vsyncadd %s1148, %s1159
          %s1161 = smul.addr %s19, 8
          %s1162 = smul.addr %s1161, 128
          %s1163 = scalar_lea.hbm %s4, %s1162
          %s1164 = sshll.u32 %s1151, 4
          %s1165 = int_to_ptr.vmem [resolvable:$true] %s1164
          %1170 = dma.vmem_to_hbm [thread:$0]  %s1165, 1024, %s1163, %s1148, 128, 128, 8
        $region40: #{multiway_contextual_attention.14} parent=31 // pred_fallthru
          _
      $region32: #{multiway_contextual_attention.14} parent=5 // pred_fallthru
        _
      %p1171 = scmp.le.s32.totalorder 2, %s14
      // Predicated region
      $region41: #{multiway_contextual_attention.14} parent=5 // pred_check
        %p1172 = pneg %p1171
      $region42: #{multiway_contextual_attention.14} parent=5 // pred_check_branch
        %1174 = sbr.rel (%p1172) target = $region44
      $region43: #{multiway_contextual_attention.14} parent=5 // pred_region
        %s1175 = ssub.s32 %s14, 2
        // Predicated region
        $region45: #{multiway_contextual_attention.14} parent=43 // pred_check
          %p1176 = pneg %p121
        $region46: #{multiway_contextual_attention.14} parent=43 // pred_check_branch
          %1178 = sbr.rel (%p1176) target = $region48
        $region47: #{multiway_contextual_attention.14} parent=43 // pred_region
          %p1179 = scmp.lt.s32.totalorder %s20, 1
          %s1180 = scalar_select %p1179, %s20, 1
          %s1181 = smul.addr %s1180, 8
          %s1182 = smul.addr %s1181, 4
          %s1183 = scalar_lea.vmem %s3, %s1182
        $region48: #{multiway_contextual_attention.14} parent=43 // pred_fallthru
          _
        // Predicated region
        $region49: #{multiway_contextual_attention.14} parent=43 // pred_check
          %p1184 = pneg %p147
        $region50: #{multiway_contextual_attention.14} parent=43 // pred_check_branch
          %1186 = sbr.rel (%p1184) target = $region52
        $region51: #{multiway_contextual_attention.14} parent=43 // pred_region
          %s1187 = sand.u32 %s132, 1
          %s1188 = scalar_lea.sflag [#allocation3], %s1187
          %s1189 = sand.u32 %s132, 1
          %s1190 = smul.addr %s1189, 64
          %s1191 = scalar_lea.vmem [#allocation2], %s1190
          %1192 = dma.done %s1188, 1024
        $region52: #{multiway_contextual_attention.14} parent=43 // pred_fallthru
          _
      $region44: #{multiway_contextual_attention.14} parent=5 // pred_fallthru
        _
    $region6: #{multiway_contextual_attention.14} parent=1 // loop_footer
      %s18 = sadd.s32 1, %s14
    $region7: #{multiway_contextual_attention.14} parent=1 // loop_footer_branch
      %13 = sbr.rel target = $region3
    $region8: #{multiway_contextual_attention.14} parent=1 // loop_exit
      _
    %1193 = vsyncpa [#allocation3], 1
    %s1194 = scalar_lea.sflag [#allocation3], 1
    %1195 = vsyncpa %s1194, 1

// kernel: multiway_contextual_attention.17
$region0: #{multiway_contextual_attention.17}
  #allocation0 [shape = 'u32[]', space=smem, size = 0x4, offset = 0x4, fixed_abs, tag = 'smem constant byte address 0x4 - core index']
  #allocation1 [shape = 'u32[144,128]{1,0:T(1,128)}', space=vmem, size = 0x12000, scoped, tag = 'internal scratch']
  %s0 = inlined_call_operand.vmem [shape: f32[16,32], index: 0, kind: input, shape index: {}]
  %s1 = inlined_call_operand.vmem [shape: bf16[32,6], index: 1, kind: input, shape index: {}]
  %s2 = inlined_call_operand.vmem [shape: f32[1,6], index: 2, kind: input, shape index: {}]
  %s3 = inlined_call_operand.vmem [shape: f32[16,6], index: 3, kind: output, shape index: {}]
  %s4 = sld [smem:[#allocation0]]
  $region22: #{multiway_contextual_attention.17} parent=0
    _
  %s6 = ssub.s32 1, %s4
  %s7 = scalar_select 0, %s6, %s4
  // Predicated region
  $region2: #{multiway_contextual_attention.17} parent=0 // pred_check
    _
  $region3: #{multiway_contextual_attention.17} parent=0 // pred_check_branch
    %9 = sbr.rel (0) target = $region5
  $region4: #{multiway_contextual_attention.17} parent=0 // pred_region
    _
  $region5: #{multiway_contextual_attention.17} parent=0 // pred_fallthru
    _
  // Predicated region
  $region6: #{multiway_contextual_attention.17} parent=0 // pred_check
    _
  $region7: #{multiway_contextual_attention.17} parent=0 // pred_check_branch
    %11 = sbr.rel (0) target = $region9
  $region8: #{multiway_contextual_attention.17} parent=0 // pred_region
    _
  $region9: #{multiway_contextual_attention.17} parent=0 // pred_fallthru
    _
  // Predicated region
  $region10: #{multiway_contextual_attention.17} parent=0 // pred_check
    _
  $region11: #{multiway_contextual_attention.17} parent=0 // pred_check_branch
    %13 = sbr.rel (0) target = $region13
  $region12: #{multiway_contextual_attention.17} parent=0 // pred_region
    _
  $region13: #{multiway_contextual_attention.17} parent=0 // pred_fallthru
    _
  %v15 = vld [vmem:[%s0] sm:$0xff]
  %v16 = vld [vmem:[%s0 + $0x8] sm:$0xff]
  %v17 = vpack.c.bf16 %v16, %v15
  %v18 = vld [vmem:[%s1] sm:$0xf]
  %v19 = vld [vmem:[%s1 + $0x4] sm:$0xf]
  %v20 = vld [vmem:[%s1 + $0x8] sm:$0xf]
  %v21 = vld [vmem:[%s1 + $0xc] sm:$0xf]
  %v22 = vld [vmem:[%s2] sm:$0x1]
  %v24 = vlaneseq
  %v25 = vshrl.u32 %v24, 7
  %v26 = vsub.s32 0, %v25
  %v27 = vrot.slane %v22, %v26
  %v33 = vunpack.c.l.b16 %v18
  %v34 = vunpack.c.l.b16 %v19
  %v35 = vunpack.c.l.b16 %v20
  %v36 = vunpack.c.l.b16 %v21
  %v37 = vpack.c.b16 %v34, %v33
  %v38 = vpack.c.b16 %v36, %v35
  %vm41 = vcmask 261120
  %v43 = vsel %vm41, %v17, 0
  %45 = vmatprep.subr.bf16.mxu0 0
  %46 = vmatpush1.bf16.msra.mxu0 %v37
  %47 = vmatprep.subr.bf16.mxu0 0
  %48 = vmatpush1.bf16.msra.mxu0 %v38
  %49 = vmatprep.subr.bf16.mxu0 0
  %50 = vmatpush1.bf16.msra.mxu0 0
  %51 = vmatprep.subr.bf16.mxu0 0
  %52 = vmatpush1.bf16.msra.mxu0 0
  %53 = vmatprep.subr.bf16.mxu0 0
  %54 = vmatpush1.bf16.msra.mxu0 0
  %55 = vmatprep.subr.bf16.mxu0 0
  %56 = vmatpush1.bf16.msra.mxu0 0
  %57 = vmatprep.subr.bf16.mxu0 0
  %58 = vmatpush1.bf16.msra.mxu0 0
  %59 = vmatprep.subr.bf16.mxu0 0
  %60 = vmatpush1.bf16.msra.mxu0 0
  %61 = vmatprep.subr.bf16.mxu0 0
  %62 = vmatpush1.bf16.msra.mxu0 0
  %63 = vmatprep.subr.bf16.mxu0 0
  %64 = vmatpush1.bf16.msra.mxu0 0
  %65 = vmatprep.subr.bf16.mxu0 0
  %66 = vmatpush1.bf16.msra.mxu0 0
  %67 = vmatprep.subr.bf16.mxu0 0
  %68 = vmatpush1.bf16.msra.mxu0 0
  %69 = vmatprep.subr.bf16.mxu0 0
  %70 = vmatpush1.bf16.msra.mxu0 0
  %71 = vmatprep.subr.bf16.mxu0 0
  %72 = vmatpush1.bf16.msra.mxu0 0
  %73 = vmatprep.subr.bf16.mxu0 0
  %74 = vmatpush1.bf16.msra.mxu0 0
  %75 = vmatprep.subr.bf16.mxu0 0
  %76 = vmatpush1.bf16.msra.mxu0 0
  %77 = vmatprep.mubr.bf16.mxu0 0
  %78 = vmatmul.mubr.bf16.gmra.mrb[0].mxu0 %v43
  %v79 = vpop.f32.mrb[0].mxu0
  %v80 = vadd.f32 %v27, %v79
  %v81 = vpop.f32.mrb[0].mxu0
  %v82 = vpop.f32.mrb[0].mxu0
  %v83 = vadd.f32 %v27, %v82
  %v84 = vpop.f32.mrb[0].mxu0
  %85 = vdwg.mxu0
  %vm86 = vcmask 48128
  %87 = vst.msk [vmem:[%s3] sm:$0xff] %vm86, %v80
  %88 = vst.msk [vmem:[%s3 + $0x8] sm:$0xff] %vm86, %v83
  // Predicated region
  $region14: #{multiway_contextual_attention.17} parent=0 // pred_check
    _
  $region15: #{multiway_contextual_attention.17} parent=0 // pred_check_branch
    %90 = sbr.rel (0) target = $region17
  $region16: #{multiway_contextual_attention.17} parent=0 // pred_region
    _
  $region17: #{multiway_contextual_attention.17} parent=0 // pred_fallthru
    _
  // Predicated region
  $region18: #{multiway_contextual_attention.17} parent=0 // pred_check
    _
  $region19: #{multiway_contextual_attention.17} parent=0 // pred_check_branch
    %92 = sbr.rel (0) target = $region21
  $region20: #{multiway_contextual_attention.17} parent=0 // pred_region
    _
  $region21: #{multiway_contextual_attention.17} parent=0 // pred_fallthru
    _

// kernel: multiway_contextual_attention.16
$region0: #{multiway_contextual_attention.16}
  #allocation0 [shape = 'u32[]', space=smem, size = 0x4, offset = 0x4, fixed_abs, tag = 'smem constant byte address 0x4 - core index']
  #allocation1 [shape = 'u32[144,128]{1,0:T(1,128)}', space=vmem, size = 0x12000, scoped, tag = 'internal scratch']
  #allocation2 [shape = 's32[1]{0}', space=sflag, size = 0x4, scoped, tag = 'scoped memory for multiway_contextual_attention.16']
  #allocation3 [shape = 'u8[512]{0}', space=smem, size = 0x200, scoped, tag = 'prefetched SMEM operand 0']
  %s0 = inlined_call_operand.vmem [shape: s32[1,6], index: 0, kind: input, shape index: {}]
  %s1 = inlined_call_operand.vmem [shape: f32[16,32], index: 1, kind: input, shape index: {}]
  %s2 = inlined_call_operand.vmem [shape: s32[16,1], index: 2, kind: input, shape index: {}]
  %s3 = inlined_call_operand.vmem [shape: bf16[6,32,128], index: 3, kind: input, shape index: {}]
  %s4 = inlined_call_operand.vmem [shape: f32[6,1,128], index: 4, kind: input, shape index: {}]
  %s5 = inlined_call_operand.vmem [shape: bf16[6,128,32], index: 5, kind: input, shape index: {}]
  %s6 = inlined_call_operand.vmem [shape: f32[6,1,32], index: 6, kind: input, shape index: {}]
  %s7 = inlined_call_operand.hbm [shape: f32[16,32], index: 7, kind: output, shape index: {}]
  %s8 = sld [smem:[#allocation0]]
  $region65: #{multiway_contextual_attention.16} parent=0
    _
  %s10 = ssub.s32 1, %s8
  %s11 = scalar_select 0, %s10, %s8
  %s12 = sshll.u32 %s0, 4
  %s13 = int_to_ptr.vmem [resolvable:$true] %s12
  %15 = dma.vmem_to_smem %s13, 16, [#allocation3], [#allocation2]
  %16 = dma.done [#allocation2], 16
  %17 = sfence
  $region1: #{multiway_contextual_attention.16} parent=0
    #allocation4 [shape = 'u8[8192]{0}', space=vmem, size = 0x2000, scoped, tag = 'output window, operand 0, single buffered']
    #allocation5 [shape = 's32[2]{0}', space=sflag, size = 0x8, scoped, tag = 'scoped memory for multiway_contextual_attention.16']
    %18 = vsyncpa [#allocation5], 0
    loop: start=0, step=1, limit=8
    $region2: #{multiway_contextual_attention.16} parent=1 // loop_pre_header
      _
    $region3: #{multiway_contextual_attention.16} parent=1 // loop_header
      %s20 = sphi 0, %s24
      %p21 = scmp.ge.s32.totalorder %s20, 8
      %s27 = sphi 0, %s39
      %s28 = sphi 0, %s35
      %s29 = sphi 0, %s27
      %s30 = sphi 0, %s28
      %s31 = sphi 0, %s29
      %s32 = sphi 0, %s30
      %s42 = sphi 0, %s44
      %s45 = sphi 0, %s42
      %s46 = sphi 0, %s45
      %s62 = sphi 0, %s46
      %s68 = sphi 0, %s70
      %s71 = sphi 0, %s68
      %s72 = sphi 0, %s71
      %s88 = sphi 0, %s72
      %s94 = sphi 0, %s96
      %s97 = sphi 0, %s94
      %s98 = sphi 0, %s97
      %s114 = sphi 0, %s98
      %s120 = sphi 0, %s122
      %s123 = sphi 0, %s120
      %s124 = sphi 0, %s123
      %s140 = sphi 0, %s124
      %s146 = sphi 0, %s148
      %s149 = sphi 0, %s146
      %s150 = sphi 0, %s149
      %s166 = sphi 0, %s150
      %s172 = sphi 0, %s174
      %s175 = sphi 0, %s172
      %s176 = sphi 0, %s175
      %s192 = sphi 0, %s176
      %s198 = sphi 0, %s200
      %s201 = sphi 0, %s198
      %s202 = sphi 0, %s201
      %s218 = sphi 0, %s202
    $region4: #{multiway_contextual_attention.16} parent=1 // loop_header_branch
      %23 = sbr.rel (%p21) target = $region8
    $region5: #{multiway_contextual_attention.16} parent=1 // loop_body
      %s25 = ssub.s32 %s20, 1
      %s26 = ssub.s32 %s20, 2
      %s33 = sadd.s32 1, %s28
      %p34 = scmp.ge.s32.totalorder %s33, 6
      %s35 = scalar_select %p34, 0, %s33
      %s36 = sadd.s32 1, %s27
      %s37 = scalar_select %p34, %s36, %s27
      %p38 = scmp.ge.s32.totalorder %s37, 1
      %s39 = scalar_select %p38, 0, %s37
      %s40 = ssub.s32 %s27, %s39
      %p41 = scmp.eq.s32.totalorder %s40, 0
      %s43 = sadd.s32 %s42, 1
      %s44 = scalar_select %p41, %s42, %s43
      %p47 = pneg %p41
      %p48 = scmp.eq.s32.totalorder %s20, 5
      %p49 = por %p47, %p48
      %p50 = scmp.ne.s32.totalorder %s42, %s45
      %p51 = scmp.eq.s32.totalorder %s20, 0
      %p52 = por %p50, %p51
      %p53 = scmp.ne.s32.totalorder %s42, %s45
      %p54 = scmp.eq.s32.totalorder %s25, 5
      %p55 = por %p53, %p54
      %p56 = scmp.ne.s32.totalorder %s45, %s46
      %p57 = scmp.eq.s32.totalorder %s25, 0
      %p58 = por %p56, %p57
      %p59 = scmp.ne.s32.totalorder %s45, %s46
      %p60 = scmp.eq.s32.totalorder %s26, 5
      %p61 = por %p59, %p60
      %p63 = scmp.ne.s32.totalorder %s46, %s62
      %p64 = scmp.eq.s32.totalorder %s26, 0
      %p65 = por %p63, %p64
      %s66 = ssub.s32 %s27, %s39
      %p67 = scmp.eq.s32.totalorder %s66, 0
      %s69 = sadd.s32 %s68, 1
      %s70 = scalar_select %p67, %s68, %s69
      %p73 = pneg %p67
      %p74 = scmp.eq.s32.totalorder %s20, 5
      %p75 = por %p73, %p74
      %p76 = scmp.ne.s32.totalorder %s68, %s71
      %p77 = scmp.eq.s32.totalorder %s20, 0
      %p78 = por %p76, %p77
      %p79 = scmp.ne.s32.totalorder %s68, %s71
      %p80 = scmp.eq.s32.totalorder %s25, 5
      %p81 = por %p79, %p80
      %p82 = scmp.ne.s32.totalorder %s71, %s72
      %p83 = scmp.eq.s32.totalorder %s25, 0
      %p84 = por %p82, %p83
      %p85 = scmp.ne.s32.totalorder %s71, %s72
      %p86 = scmp.eq.s32.totalorder %s26, 5
      %p87 = por %p85, %p86
      %p89 = scmp.ne.s32.totalorder %s72, %s88
      %p90 = scmp.eq.s32.totalorder %s26, 0
      %p91 = por %p89, %p90
      %s92 = ssub.s32 %s28, %s35
      %p93 = scmp.eq.s32.totalorder %s92, 0
      %s95 = sadd.s32 %s94, 1
      %s96 = scalar_select %p93, %s94, %s95
      %p99 = pneg %p93
      %p100 = scmp.eq.s32.totalorder %s20, 5
      %p101 = por %p99, %p100
      %p102 = scmp.ne.s32.totalorder %s94, %s97
      %p103 = scmp.eq.s32.totalorder %s20, 0
      %p104 = por %p102, %p103
      %p105 = scmp.ne.s32.totalorder %s94, %s97
      %p106 = scmp.eq.s32.totalorder %s25, 5
      %p107 = por %p105, %p106
      %p108 = scmp.ne.s32.totalorder %s97, %s98
      %p109 = scmp.eq.s32.totalorder %s25, 0
      %p110 = por %p108, %p109
      %p111 = scmp.ne.s32.totalorder %s97, %s98
      %p112 = scmp.eq.s32.totalorder %s26, 5
      %p113 = por %p111, %p112
      %p115 = scmp.ne.s32.totalorder %s98, %s114
      %p116 = scmp.eq.s32.totalorder %s26, 0
      %p117 = por %p115, %p116
      %s118 = ssub.s32 %s28, %s35
      %p119 = scmp.eq.s32.totalorder %s118, 0
      %s121 = sadd.s32 %s120, 1
      %s122 = scalar_select %p119, %s120, %s121
      %p125 = pneg %p119
      %p126 = scmp.eq.s32.totalorder %s20, 5
      %p127 = por %p125, %p126
      %p128 = scmp.ne.s32.totalorder %s120, %s123
      %p129 = scmp.eq.s32.totalorder %s20, 0
      %p130 = por %p128, %p129
      %p131 = scmp.ne.s32.totalorder %s120, %s123
      %p132 = scmp.eq.s32.totalorder %s25, 5
      %p133 = por %p131, %p132
      %p134 = scmp.ne.s32.totalorder %s123, %s124
      %p135 = scmp.eq.s32.totalorder %s25, 0
      %p136 = por %p134, %p135
      %p137 = scmp.ne.s32.totalorder %s123, %s124
      %p138 = scmp.eq.s32.totalorder %s26, 5
      %p139 = por %p137, %p138
      %p141 = scmp.ne.s32.totalorder %s124, %s140
      %p142 = scmp.eq.s32.totalorder %s26, 0
      %p143 = por %p141, %p142
      %s144 = ssub.s32 %s28, %s35
      %p145 = scmp.eq.s32.totalorder %s144, 0
      %s147 = sadd.s32 %s146, 1
      %s148 = scalar_select %p145, %s146, %s147
      %p151 = pneg %p145
      %p152 = scmp.eq.s32.totalorder %s20, 5
      %p153 = por %p151, %p152
      %p154 = scmp.ne.s32.totalorder %s146, %s149
      %p155 = scmp.eq.s32.totalorder %s20, 0
      %p156 = por %p154, %p155
      %p157 = scmp.ne.s32.totalorder %s146, %s149
      %p158 = scmp.eq.s32.totalorder %s25, 5
      %p159 = por %p157, %p158
      %p160 = scmp.ne.s32.totalorder %s149, %s150
      %p161 = scmp.eq.s32.totalorder %s25, 0
      %p162 = por %p160, %p161
      %p163 = scmp.ne.s32.totalorder %s149, %s150
      %p164 = scmp.eq.s32.totalorder %s26, 5
      %p165 = por %p163, %p164
      %p167 = scmp.ne.s32.totalorder %s150, %s166
      %p168 = scmp.eq.s32.totalorder %s26, 0
      %p169 = por %p167, %p168
      %s170 = ssub.s32 %s28, %s35
      %p171 = scmp.eq.s32.totalorder %s170, 0
      %s173 = sadd.s32 %s172, 1
      %s174 = scalar_select %p171, %s172, %s173
      %p177 = pneg %p171
      %p178 = scmp.eq.s32.totalorder %s20, 5
      %p179 = por %p177, %p178
      %p180 = scmp.ne.s32.totalorder %s172, %s175
      %p181 = scmp.eq.s32.totalorder %s20, 0
      %p182 = por %p180, %p181
      %p183 = scmp.ne.s32.totalorder %s172, %s175
      %p184 = scmp.eq.s32.totalorder %s25, 5
      %p185 = por %p183, %p184
      %p186 = scmp.ne.s32.totalorder %s175, %s176
      %p187 = scmp.eq.s32.totalorder %s25, 0
      %p188 = por %p186, %p187
      %p189 = scmp.ne.s32.totalorder %s175, %s176
      %p190 = scmp.eq.s32.totalorder %s26, 5
      %p191 = por %p189, %p190
      %p193 = scmp.ne.s32.totalorder %s176, %s192
      %p194 = scmp.eq.s32.totalorder %s26, 0
      %p195 = por %p193, %p194
      %s196 = ssub.s32 %s27, %s39
      %p197 = scmp.eq.s32.totalorder %s196, 0
      %s199 = sadd.s32 %s198, 1
      %s200 = scalar_select %p197, %s198, %s199
      %p203 = pneg %p197
      %p204 = scmp.eq.s32.totalorder %s20, 5
      %p205 = por %p203, %p204
      %p206 = scmp.ne.s32.totalorder %s198, %s201
      %p207 = scmp.eq.s32.totalorder %s20, 0
      %p208 = por %p206, %p207
      %p209 = scmp.ne.s32.totalorder %s198, %s201
      %p210 = scmp.eq.s32.totalorder %s25, 5
      %p211 = por %p209, %p210
      %p212 = scmp.ne.s32.totalorder %s201, %s202
      %p213 = scmp.eq.s32.totalorder %s25, 0
      %p214 = por %p212, %p213
      %p215 = scmp.ne.s32.totalorder %s201, %s202
      %p216 = scmp.eq.s32.totalorder %s26, 5
      %p217 = por %p215, %p216
      %p219 = scmp.ne.s32.totalorder %s202, %s218
      %p220 = scmp.eq.s32.totalorder %s26, 0
      %p221 = por %p219, %p220
      %p222 = scmp.le.s32.totalorder 1, %s20
      %p223 = scmp.lt.s32.totalorder %s20, 7
      %p224 = pnand %p222, %p223
      %p225 = pneg %p224
      // Predicated region
      $region9: #{multiway_contextual_attention.16} parent=5 // pred_check
        _
      $region10: #{multiway_contextual_attention.16} parent=5 // pred_check_branch
        %227 = sbr.rel (%p224) target = $region12
      $region11: #{multiway_contextual_attention.16} parent=5 // pred_region
        %s228 = ssub.s32 %s20, 1
        // Predicated region
        $region13: #{multiway_contextual_attention.16} parent=11 // pred_check
          %p229 = pneg %p58
        $region14: #{multiway_contextual_attention.16} parent=11 // pred_check_branch
          %231 = sbr.rel (%p229) target = $region16
        $region15: #{multiway_contextual_attention.16} parent=11 // pred_region
          %s232 = smul.u32 2, %s29
          %p233 = scmp.lt.s32.totalorder %s232, 1
          %s234 = scalar_select %p233, %s232, 1
          %s235 = smul.addr %s234, 8
          %s236 = scalar_lea.vmem %s1, %s235
          %s237 = smul.u32 2, %s29
        $region16: #{multiway_contextual_attention.16} parent=11 // pred_fallthru
          _
        // Predicated region
        $region17: #{multiway_contextual_attention.16} parent=11 // pred_check
          %p238 = pneg %p84
        $region18: #{multiway_contextual_attention.16} parent=11 // pred_check_branch
          %240 = sbr.rel (%p238) target = $region20
        $region19: #{multiway_contextual_attention.16} parent=11 // pred_region
          %s241 = smul.u32 2, %s29
          %p242 = scmp.lt.s32.totalorder %s241, 1
          %s243 = scalar_select %p242, %s241, 1
          %s244 = smul.addr %s243, 8
          %s245 = scalar_lea.vmem %s2, %s244
          %s246 = smul.u32 2, %s29
        $region20: #{multiway_contextual_attention.16} parent=11 // pred_fallthru
          _
      $region12: #{multiway_contextual_attention.16} parent=5 // pred_fallthru
        _
      %p247 = scmp.lt.s32.totalorder %s20, 6
      // Predicated region
      $region21: #{multiway_contextual_attention.16} parent=5 // pred_check
        %p248 = pneg %p247
      $region22: #{multiway_contextual_attention.16} parent=5 // pred_check_branch
        %250 = sbr.rel (%p248) target = $region24
      $region23: #{multiway_contextual_attention.16} parent=5 // pred_region
        // Predicated region
        $region25: #{multiway_contextual_attention.16} parent=23 // pred_check
          %p251 = pneg %p104
        $region26: #{multiway_contextual_attention.16} parent=23 // pred_check_branch
          %253 = sbr.rel (%p251) target = $region28
        $region27: #{multiway_contextual_attention.16} parent=23 // pred_region
          %p254 = scmp.lt.s32.totalorder %s28, 5
          %s255 = scalar_select %p254, %s28, 5
          %s256 = smul.addr %s255, 4
          %s257 = smul.addr %s256, 4
          %s258 = scalar_lea.vmem %s3, %s257
        $region28: #{multiway_contextual_attention.16} parent=23 // pred_fallthru
          _
        // Predicated region
        $region29: #{multiway_contextual_attention.16} parent=23 // pred_check
          %p259 = pneg %p130
        $region30: #{multiway_contextual_attention.16} parent=23 // pred_check_branch
          %261 = sbr.rel (%p259) target = $region32
        $region31: #{multiway_contextual_attention.16} parent=23 // pred_region
          %p262 = scmp.lt.s32.totalorder %s28, 5
          %s263 = scalar_select %p262, %s28, 5
          %s264 = scalar_lea.vmem %s4, %s263
        $region32: #{multiway_contextual_attention.16} parent=23 // pred_fallthru
          _
        // Predicated region
        $region33: #{multiway_contextual_attention.16} parent=23 // pred_check
          %p265 = pneg %p156
        $region34: #{multiway_contextual_attention.16} parent=23 // pred_check_branch
          %267 = sbr.rel (%p265) target = $region36
        $region35: #{multiway_contextual_attention.16} parent=23 // pred_region
          %p268 = scmp.lt.s32.totalorder %s28, 5
          %s269 = scalar_select %p268, %s28, 5
          %s270 = smul.addr %s269, 16
          %s271 = smul.addr %s270, 4
          %s272 = scalar_lea.vmem %s5, %s271
        $region36: #{multiway_contextual_attention.16} parent=23 // pred_fallthru
          _
        // Predicated region
        $region37: #{multiway_contextual_attention.16} parent=23 // pred_check
          %p273 = pneg %p182
        $region38: #{multiway_contextual_attention.16} parent=23 // pred_check_branch
          %275 = sbr.rel (%p273) target = $region40
        $region39: #{multiway_contextual_attention.16} parent=23 // pred_region
          %p276 = scmp.lt.s32.totalorder %s28, 5
          %s277 = scalar_select %p276, %s28, 5
          %s278 = scalar_lea.vmem %s6, %s277
        $region40: #{multiway_contextual_attention.16} parent=23 // pred_fallthru
          _
      $region24: #{multiway_contextual_attention.16} parent=5 // pred_fallthru
        _
      %p279 = scmp.le.s32.totalorder 1, %s20
      %p280 = scmp.lt.s32.totalorder %s20, 7
      %p281 = pnand %p279, %p280
      %p282 = pneg %p281
      // Predicated region
      $region41: #{multiway_contextual_attention.16} parent=5 // pred_check
        _
      $region42: #{multiway_contextual_attention.16} parent=5 // pred_check_branch
        %284 = sbr.rel (%p281) target = $region44
      $region43: #{multiway_contextual_attention.16} parent=5 // pred_region
        %s285 = ssub.s32 %s20, 1
        %s286 = smul.u32 2, %s29
        %p287 = scmp.lt.s32.totalorder %s286, 1
        %s288 = scalar_select %p287, %s286, 1
        %s289 = smul.addr %s288, 8
        %s290 = scalar_lea.vmem %s1, %s289
        %p291 = pneg %p58
        %p292 = pneg %p55
        %s293 = smul.u32 2, %s29
        %p294 = scmp.lt.s32.totalorder %s293, 1
        %s295 = scalar_select %p294, %s293, 1
        %s296 = smul.addr %s295, 8
        %s297 = scalar_lea.vmem %s2, %s296
        %p298 = pneg %p84
        %p299 = pneg %p81
        %p300 = scmp.lt.s32.totalorder %s30, 5
        %s301 = scalar_select %p300, %s30, 5
        %s302 = smul.addr %s301, 4
        %s303 = smul.addr %s302, 4
        %s304 = scalar_lea.vmem %s3, %s303
        %p305 = pneg %p110
        %p306 = pneg %p107
        %p307 = scmp.lt.s32.totalorder %s30, 5
        %s308 = scalar_select %p307, %s30, 5
        %s309 = scalar_lea.vmem %s4, %s308
        %p310 = pneg %p136
        %p311 = pneg %p133
        %p312 = scmp.lt.s32.totalorder %s30, 5
        %s313 = scalar_select %p312, %s30, 5
        %s314 = smul.addr %s313, 16
        %s315 = smul.addr %s314, 4
        %s316 = scalar_lea.vmem %s5, %s315
        %p317 = pneg %p162
        %p318 = pneg %p159
        %p319 = scmp.lt.s32.totalorder %s30, 5
        %s320 = scalar_select %p319, %s30, 5
        %s321 = scalar_lea.vmem %s6, %s320
        %p322 = pneg %p188
        %p323 = pneg %p185
        %p324 = pneg %p214
        %p325 = pneg %p211
        %s326 = smul.u32 2, %s29
        %p327 = scmp.lt.s32.totalorder %s326, 1
        %s328 = scalar_select %p327, %s326, 1
        %s329 = smul.addr %s328, 8
        %s330 = scalar_lea.vmem %s1, %s329
        %s331 = smul.u32 2, %s29
        %s332 = smul.u32 2, %s29
        %p333 = scmp.lt.s32.totalorder %s332, 1
        %s334 = scalar_select %p333, %s332, 1
        %s335 = smul.addr %s334, 8
        %s336 = scalar_lea.vmem %s2, %s335
        %s337 = smul.u32 2, %s29
        %p338 = scmp.lt.s32.totalorder %s30, 5
        %s339 = scalar_select %p338, %s30, 5
        %s340 = smul.addr %s339, 4
        %s341 = smul.addr %s340, 4
        %s342 = scalar_lea.vmem %s3, %s341
        %p343 = scmp.lt.s32.totalorder %s30, 5
        %s344 = scalar_select %p343, %s30, 5
        %s345 = scalar_lea.vmem %s4, %s344
        %p346 = scmp.lt.s32.totalorder %s30, 5
        %s347 = scalar_select %p346, %s30, 5
        %s348 = smul.addr %s347, 16
        %s349 = smul.addr %s348, 4
        %s350 = scalar_lea.vmem %s5, %s349
        %p351 = scmp.lt.s32.totalorder %s30, 5
        %s352 = scalar_select %p351, %s30, 5
        %s353 = scalar_lea.vmem %s6, %s352
        %s354 = smul.u32 2, %s29
        %s356 = sshra.s32 %s30, 7
        %s357 = sand.u32 %s30, 127
        %s358 = sadd.s32 %s356, %s29
        %s359 = smul.u32 %s358, 128
        %s360 = sshra.s32 %s30, 7
        %s361 = sand.u32 %s30, 127
        %s362 = sadd.s32 %s359, %s361
        %s363 = sld [smem:[#allocation3 + %s362]]
        %p364 = scmp.eq.s32.totalorder %s30, 0
        // Predicated region
        $region45: #{multiway_contextual_attention.16} parent=43 // pred_check
          %p365 = pneg %p364
        $region46: #{multiway_contextual_attention.16} parent=43 // pred_check_branch
          %367 = sbr.rel (%p365) target = $region48
        $region47: #{multiway_contextual_attention.16} parent=43 // pred_region
          %v368 = vld [vmem:[%s330] sm:$0xff]
          %v369 = vld [vmem:[%s330 + $0x8] sm:$0xff]
          %v370 = vpack.c.bf16 %v369, %v368
          %v371 = vld [vmem:[%s342] sm:$0xf]
          %v372 = vld [vmem:[%s342 + $0x4] sm:$0xf]
          %v373 = vld [vmem:[%s342 + $0x8] sm:$0xf]
          %v374 = vld [vmem:[%s342 + $0xc] sm:$0xf]
          %v375 = vld [vmem:[%s345] sm:$0x1]
          %v377 = vlaneseq
          %v378 = vshrl.u32 %v377, 7
          %v379 = vsub.s32 0, %v378
          %v380 = vrot.slane %v375, %v379
          %v386 = vunpack.c.l.b16 %v371
          %v387 = vunpack.c.l.b16 %v372
          %v388 = vunpack.c.l.b16 %v373
          %v389 = vunpack.c.l.b16 %v374
          %v390 = vpack.c.b16 %v387, %v386
          %v391 = vpack.c.b16 %v389, %v388
          %vm394 = vcmask 261120
          %v396 = vsel %vm394, %v370, 0
          %398 = vmatprep.subr.bf16.mxu0 0
          %399 = vmatpush1.bf16.msra.mxu0 %v390
          %400 = vmatprep.subr.bf16.mxu0 0
          %401 = vmatpush1.bf16.msra.mxu0 %v391
          %402 = vmatprep.subr.bf16.mxu0 0
          %403 = vmatpush1.bf16.msra.mxu0 0
          %404 = vmatprep.subr.bf16.mxu0 0
          %405 = vmatpush1.bf16.msra.mxu0 0
          %406 = vmatprep.subr.bf16.mxu0 0
          %407 = vmatpush1.bf16.msra.mxu0 0
          %408 = vmatprep.subr.bf16.mxu0 0
          %409 = vmatpush1.bf16.msra.mxu0 0
          %410 = vmatprep.subr.bf16.mxu0 0
          %411 = vmatpush1.bf16.msra.mxu0 0
          %412 = vmatprep.subr.bf16.mxu0 0
          %413 = vmatpush1.bf16.msra.mxu0 0
          %414 = vmatprep.subr.bf16.mxu0 0
          %415 = vmatpush1.bf16.msra.mxu0 0
          %416 = vmatprep.subr.bf16.mxu0 0
          %417 = vmatpush1.bf16.msra.mxu0 0
          %418 = vmatprep.subr.bf16.mxu0 0
          %419 = vmatpush1.bf16.msra.mxu0 0
          %420 = vmatprep.subr.bf16.mxu0 0
          %421 = vmatpush1.bf16.msra.mxu0 0
          %422 = vmatprep.subr.bf16.mxu0 0
          %423 = vmatpush1.bf16.msra.mxu0 0
          %424 = vmatprep.subr.bf16.mxu0 0
          %425 = vmatpush1.bf16.msra.mxu0 0
          %426 = vmatprep.subr.bf16.mxu0 0
          %427 = vmatpush1.bf16.msra.mxu0 0
          %428 = vmatprep.subr.bf16.mxu0 0
          %429 = vmatpush1.bf16.msra.mxu0 0
          %430 = vmatprep.mubr.bf16.mxu0 0
          %431 = vmatmul.mubr.bf16.gmra.mrb[0].mxu0 %v396
          %v432 = vpop.f32.mrb[0].mxu0
          %v433 = vadd.f32 %v380, %v432
          %v434 = vpop.f32.mrb[0].mxu0
          %v435 = vpop.f32.mrb[0].mxu0
          %v436 = vadd.f32 %v380, %v435
          %v437 = vpop.f32.mrb[0].mxu0
          %438 = vdwg.mxu0
          %v439 = vmax.f32 %v433, 0.0
          %v440 = vmax.f32 %v436, 0.0
          %v441 = vpack.c.bf16 %v440, %v439
          %v442 = vld [vmem:[%s350] sm:$0xf]
          %v443 = vld [vmem:[%s350 + $0x4] sm:$0xf]
          %v444 = vld [vmem:[%s350 + $0x8] sm:$0xf]
          %v445 = vld [vmem:[%s350 + $0xc] sm:$0xf]
          %v446 = vld [vmem:[%s350 + $0x10] sm:$0xf]
          %v447 = vld [vmem:[%s350 + $0x14] sm:$0xf]
          %v448 = vld [vmem:[%s350 + $0x18] sm:$0xf]
          %v449 = vld [vmem:[%s350 + $0x1c] sm:$0xf]
          %v450 = vld [vmem:[%s350 + $0x20] sm:$0xf]
          %v451 = vld [vmem:[%s350 + $0x24] sm:$0xf]
          %v452 = vld [vmem:[%s350 + $0x28] sm:$0xf]
          %v453 = vld [vmem:[%s350 + $0x2c] sm:$0xf]
          %v454 = vld [vmem:[%s350 + $0x30] sm:$0xf]
          %v455 = vld [vmem:[%s350 + $0x34] sm:$0xf]
          %v456 = vld [vmem:[%s350 + $0x38] sm:$0xf]
          %v457 = vld [vmem:[%s350 + $0x3c] sm:$0xf]
          %v458 = vld [vmem:[%s353] sm:$0x1]
          %v460 = vlaneseq
          %v461 = vshrl.u32 %v460, 7
          %v462 = vsub.s32 0, %v461
          %v463 = vrot.slane %v458, %v462
          %v481 = vunpack.c.l.b16 %v442
          %v482 = vunpack.c.l.b16 %v443
          %v483 = vunpack.c.l.b16 %v444
          %v484 = vunpack.c.l.b16 %v445
          %v485 = vunpack.c.l.b16 %v446
          %v486 = vunpack.c.l.b16 %v447
          %v487 = vunpack.c.l.b16 %v448
          %v488 = vunpack.c.l.b16 %v449
          %v489 = vunpack.c.l.b16 %v450
          %v490 = vunpack.c.l.b16 %v451
          %v491 = vunpack.c.l.b16 %v452
          %v492 = vunpack.c.l.b16 %v453
          %v493 = vunpack.c.l.b16 %v454
          %v494 = vunpack.c.l.b16 %v455
          %v495 = vunpack.c.l.b16 %v456
          %v496 = vunpack.c.l.b16 %v457
          %v497 = vpack.c.b16 %v482, %v481
          %v498 = vpack.c.b16 %v484, %v483
          %v499 = vpack.c.b16 %v486, %v485
          %v500 = vpack.c.b16 %v488, %v487
          %v501 = vpack.c.b16 %v490, %v489
          %v502 = vpack.c.b16 %v492, %v491
          %v503 = vpack.c.b16 %v494, %v493
          %v504 = vpack.c.b16 %v496, %v495
          %513 = vmatprep.subr.bf16.mxu0 0
          %514 = vmatpush1.bf16.msra.mxu0 %v497
          %515 = vmatprep.subr.bf16.mxu0 0
          %516 = vmatpush1.bf16.msra.mxu0 %v498
          %517 = vmatprep.subr.bf16.mxu0 0
          %518 = vmatpush1.bf16.msra.mxu0 %v499
          %519 = vmatprep.subr.bf16.mxu0 0
          %520 = vmatpush1.bf16.msra.mxu0 %v500
          %521 = vmatprep.subr.bf16.mxu0 0
          %522 = vmatpush1.bf16.msra.mxu0 %v501
          %523 = vmatprep.subr.bf16.mxu0 0
          %524 = vmatpush1.bf16.msra.mxu0 %v502
          %525 = vmatprep.subr.bf16.mxu0 0
          %526 = vmatpush1.bf16.msra.mxu0 %v503
          %527 = vmatprep.subr.bf16.mxu0 0
          %528 = vmatpush1.bf16.msra.mxu0 %v504
          %529 = vmatprep.subr.bf16.mxu0 0
          %530 = vmatpush1.bf16.msra.mxu0 0
          %531 = vmatprep.subr.bf16.mxu0 0
          %532 = vmatpush1.bf16.msra.mxu0 0
          %533 = vmatprep.subr.bf16.mxu0 0
          %534 = vmatpush1.bf16.msra.mxu0 0
          %535 = vmatprep.subr.bf16.mxu0 0
          %536 = vmatpush1.bf16.msra.mxu0 0
          %537 = vmatprep.subr.bf16.mxu0 0
          %538 = vmatpush1.bf16.msra.mxu0 0
          %539 = vmatprep.subr.bf16.mxu0 0
          %540 = vmatpush1.bf16.msra.mxu0 0
          %541 = vmatprep.subr.bf16.mxu0 0
          %542 = vmatpush1.bf16.msra.mxu0 0
          %543 = vmatprep.subr.bf16.mxu0 0
          %544 = vmatpush1.bf16.msra.mxu0 0
          %545 = vmatprep.mubr.bf16.mxu0 0
          %546 = vmatmul.mubr.bf16.gmra.mrb[0].mxu0 %v441
          %v547 = vpop.f32.mrb[0].mxu0
          %v548 = vadd.f32 %v463, %v547
          %v549 = vpop.f32.mrb[0].mxu0
          %v550 = vpop.f32.mrb[0].mxu0
          %v551 = vadd.f32 %v463, %v550
          %v552 = vpop.f32.mrb[0].mxu0
          %553 = vdwg.mxu0
          %554 = vst.msk [vmem:[#allocation4] sm:$0xff] %vm394, %v548
          %555 = vst.msk [vmem:[#allocation4 + $0x8] sm:$0xff] %vm394, %v551
        $region48: #{multiway_contextual_attention.16} parent=43 // pred_fallthru
          _
        %p556 = scmp.gt.s32.totalorder %s30, 0
        %p557 = scmp.gt.s32.totalorder %s363, 0
        %p558 = pnand %p556, %p557
        %p559 = pneg %p558
        // Predicated region
        $region49: #{multiway_contextual_attention.16} parent=43 // pred_check
          _
        $region50: #{multiway_contextual_attention.16} parent=43 // pred_check_branch
          %561 = sbr.rel (%p558) target = $region52
        $region51: #{multiway_contextual_attention.16} parent=43 // pred_region
          %v562 = vld [vmem:[%s330] sm:$0xff]
          %v563 = vld [vmem:[%s330 + $0x8] sm:$0xff]
          %v564 = vpack.c.bf16 %v563, %v562
          %v565 = vld [vmem:[%s342] sm:$0xf]
          %v566 = vld [vmem:[%s342 + $0x4] sm:$0xf]
          %v567 = vld [vmem:[%s342 + $0x8] sm:$0xf]
          %v568 = vld [vmem:[%s342 + $0xc] sm:$0xf]
          %v569 = vld [vmem:[%s345] sm:$0x1]
          %v571 = vlaneseq
          %v572 = vshrl.u32 %v571, 7
          %v573 = vsub.s32 0, %v572
          %v574 = vrot.slane %v569, %v573
          %v580 = vunpack.c.l.b16 %v565
          %v581 = vunpack.c.l.b16 %v566
          %v582 = vunpack.c.l.b16 %v567
          %v583 = vunpack.c.l.b16 %v568
          %v584 = vpack.c.b16 %v581, %v580
          %v585 = vpack.c.b16 %v583, %v582
          %vm588 = vcmask 261120
          %v590 = vsel %vm588, %v564, 0
          %592 = vmatprep.subr.bf16.mxu0 0
          %593 = vmatpush1.bf16.msra.mxu0 %v584
          %594 = vmatprep.subr.bf16.mxu0 0
          %595 = vmatpush1.bf16.msra.mxu0 %v585
          %596 = vmatprep.subr.bf16.mxu0 0
          %597 = vmatpush1.bf16.msra.mxu0 0
          %598 = vmatprep.subr.bf16.mxu0 0
          %599 = vmatpush1.bf16.msra.mxu0 0
          %600 = vmatprep.subr.bf16.mxu0 0
          %601 = vmatpush1.bf16.msra.mxu0 0
          %602 = vmatprep.subr.bf16.mxu0 0
          %603 = vmatpush1.bf16.msra.mxu0 0
          %604 = vmatprep.subr.bf16.mxu0 0
          %605 = vmatpush1.bf16.msra.mxu0 0
          %606 = vmatprep.subr.bf16.mxu0 0
          %607 = vmatpush1.bf16.msra.mxu0 0
          %608 = vmatprep.subr.bf16.mxu0 0
          %609 = vmatpush1.bf16.msra.mxu0 0
          %610 = vmatprep.subr.bf16.mxu0 0
          %611 = vmatpush1.bf16.msra.mxu0 0
          %612 = vmatprep.subr.bf16.mxu0 0
          %613 = vmatpush1.bf16.msra.mxu0 0
          %614 = vmatprep.subr.bf16.mxu0 0
          %615 = vmatpush1.bf16.msra.mxu0 0
          %616 = vmatprep.subr.bf16.mxu0 0
          %617 = vmatpush1.bf16.msra.mxu0 0
          %618 = vmatprep.subr.bf16.mxu0 0
          %619 = vmatpush1.bf16.msra.mxu0 0
          %620 = vmatprep.subr.bf16.mxu0 0
          %621 = vmatpush1.bf16.msra.mxu0 0
          %622 = vmatprep.subr.bf16.mxu0 0
          %623 = vmatpush1.bf16.msra.mxu0 0
          %624 = vmatprep.mubr.bf16.mxu0 0
          %625 = vmatmul.mubr.bf16.gmra.mrb[0].mxu0 %v590
          %v626 = vpop.f32.mrb[0].mxu0
          %v627 = vadd.f32 %v574, %v626
          %v628 = vpop.f32.mrb[0].mxu0
          %v629 = vpop.f32.mrb[0].mxu0
          %v630 = vadd.f32 %v574, %v629
          %v631 = vpop.f32.mrb[0].mxu0
          %632 = vdwg.mxu0
          %v633 = vmax.f32 %v627, 0.0
          %v634 = vmax.f32 %v630, 0.0
          %v635 = vpack.c.bf16 %v634, %v633
          %v636 = vld [vmem:[%s350] sm:$0xf]
          %v637 = vld [vmem:[%s350 + $0x4] sm:$0xf]
          %v638 = vld [vmem:[%s350 + $0x8] sm:$0xf]
          %v639 = vld [vmem:[%s350 + $0xc] sm:$0xf]
          %v640 = vld [vmem:[%s350 + $0x10] sm:$0xf]
          %v641 = vld [vmem:[%s350 + $0x14] sm:$0xf]
          %v642 = vld [vmem:[%s350 + $0x18] sm:$0xf]
          %v643 = vld [vmem:[%s350 + $0x1c] sm:$0xf]
          %v644 = vld [vmem:[%s350 + $0x20] sm:$0xf]
          %v645 = vld [vmem:[%s350 + $0x24] sm:$0xf]
          %v646 = vld [vmem:[%s350 + $0x28] sm:$0xf]
          %v647 = vld [vmem:[%s350 + $0x2c] sm:$0xf]
          %v648 = vld [vmem:[%s350 + $0x30] sm:$0xf]
          %v649 = vld [vmem:[%s350 + $0x34] sm:$0xf]
          %v650 = vld [vmem:[%s350 + $0x38] sm:$0xf]
          %v651 = vld [vmem:[%s350 + $0x3c] sm:$0xf]
          %v652 = vld [vmem:[%s353] sm:$0x1]
          %v654 = vlaneseq
          %v655 = vshrl.u32 %v654, 7
          %v656 = vsub.s32 0, %v655
          %v657 = vrot.slane %v652, %v656
          %v675 = vunpack.c.l.b16 %v636
          %v676 = vunpack.c.l.b16 %v637
          %v677 = vunpack.c.l.b16 %v638
          %v678 = vunpack.c.l.b16 %v639
          %v679 = vunpack.c.l.b16 %v640
          %v680 = vunpack.c.l.b16 %v641
          %v681 = vunpack.c.l.b16 %v642
          %v682 = vunpack.c.l.b16 %v643
          %v683 = vunpack.c.l.b16 %v644
          %v684 = vunpack.c.l.b16 %v645
          %v685 = vunpack.c.l.b16 %v646
          %v686 = vunpack.c.l.b16 %v647
          %v687 = vunpack.c.l.b16 %v648
          %v688 = vunpack.c.l.b16 %v649
          %v689 = vunpack.c.l.b16 %v650
          %v690 = vunpack.c.l.b16 %v651
          %v691 = vpack.c.b16 %v676, %v675
          %v692 = vpack.c.b16 %v678, %v677
          %v693 = vpack.c.b16 %v680, %v679
          %v694 = vpack.c.b16 %v682, %v681
          %v695 = vpack.c.b16 %v684, %v683
          %v696 = vpack.c.b16 %v686, %v685
          %v697 = vpack.c.b16 %v688, %v687
          %v698 = vpack.c.b16 %v690, %v689
          %707 = vmatprep.subr.bf16.mxu0 0
          %708 = vmatpush1.bf16.msra.mxu0 %v691
          %709 = vmatprep.subr.bf16.mxu0 0
          %710 = vmatpush1.bf16.msra.mxu0 %v692
          %711 = vmatprep.subr.bf16.mxu0 0
          %712 = vmatpush1.bf16.msra.mxu0 %v693
          %713 = vmatprep.subr.bf16.mxu0 0
          %714 = vmatpush1.bf16.msra.mxu0 %v694
          %715 = vmatprep.subr.bf16.mxu0 0
          %716 = vmatpush1.bf16.msra.mxu0 %v695
          %717 = vmatprep.subr.bf16.mxu0 0
          %718 = vmatpush1.bf16.msra.mxu0 %v696
          %719 = vmatprep.subr.bf16.mxu0 0
          %720 = vmatpush1.bf16.msra.mxu0 %v697
          %721 = vmatprep.subr.bf16.mxu0 0
          %722 = vmatpush1.bf16.msra.mxu0 %v698
          %723 = vmatprep.subr.bf16.mxu0 0
          %724 = vmatpush1.bf16.msra.mxu0 0
          %725 = vmatprep.subr.bf16.mxu0 0
          %726 = vmatpush1.bf16.msra.mxu0 0
          %727 = vmatprep.subr.bf16.mxu0 0
          %728 = vmatpush1.bf16.msra.mxu0 0
          %729 = vmatprep.subr.bf16.mxu0 0
          %730 = vmatpush1.bf16.msra.mxu0 0
          %731 = vmatprep.subr.bf16.mxu0 0
          %732 = vmatpush1.bf16.msra.mxu0 0
          %733 = vmatprep.subr.bf16.mxu0 0
          %734 = vmatpush1.bf16.msra.mxu0 0
          %735 = vmatprep.subr.bf16.mxu0 0
          %736 = vmatpush1.bf16.msra.mxu0 0
          %737 = vmatprep.subr.bf16.mxu0 0
          %738 = vmatpush1.bf16.msra.mxu0 0
          %739 = vmatprep.mubr.bf16.mxu0 0
          %740 = vmatmul.mubr.bf16.gmra.mrb[0].mxu0 %v635
          %v741 = vpop.f32.mrb[0].mxu0
          %v742 = vadd.f32 %v657, %v741
          %v743 = vpop.f32.mrb[0].mxu0
          %v744 = vpop.f32.mrb[0].mxu0
          %v745 = vadd.f32 %v657, %v744
          %v746 = vpop.f32.mrb[0].mxu0
          %747 = vdwg.mxu0
          %v748 = vld [vmem:[%s336] sm:$0xff]
          %v749 = vld [vmem:[%s336 + $0x8] sm:$0xff]
          %v750 = vstv %s30
          %vm751 = vcmp.eq.s32.totalorder %v748, %v750
          %vm752 = vcmp.eq.s32.totalorder %v749, %v750
          %v753 = vld [vmem:[#allocation4] sm:$0xff]
          %v754 = vld [vmem:[#allocation4 + $0x8] sm:$0xff]
          %v755 = vsel %vm751, 1, 0
          %v756 = vsel %vm752, 1, 0
          %757 = vset.pattern.permute.xlu0 0
          %758 = vperm.xlu0 %757, %v755
          %v759 = vpop.permute.xlu0 %758
          %760 = vset.pattern.permute.xlu0 0
          %761 = vperm.xlu0 %760, %v756
          %v762 = vpop.permute.xlu0 %761
          %vm763 = vcmp.eq.s32.totalorder %v759, 1
          %vm764 = vcmp.eq.s32.totalorder %v762, 1
          %v765 = vsel %vm763, %v742, %v753
          %v766 = vsel %vm764, %v745, %v754
          %767 = vst.msk [vmem:[#allocation4] sm:$0xff] %vm588, %v765
          %768 = vst.msk [vmem:[#allocation4 + $0x8] sm:$0xff] %vm588, %v766
        $region52: #{multiway_contextual_attention.16} parent=43 // pred_fallthru
          _
        // Predicated region
        $region53: #{multiway_contextual_attention.16} parent=43 // pred_check
          %p769 = pneg %p211
        $region54: #{multiway_contextual_attention.16} parent=43 // pred_check_branch
          %771 = sbr.rel (%p769) target = $region56
        $region55: #{multiway_contextual_attention.16} parent=43 // pred_region
          %s772 = smul.u32 2, %s29
          %s774 = ssub.s32 256, 256
          %775 = vsyncadd [#allocation5], %s774
          %s776 = smul.addr %s772, 128
          %s777 = scalar_lea.hbm %s7, %s776
          %s778 = sshll.u32 [#allocation4], 4
          %s779 = int_to_ptr.vmem [resolvable:$true] %s778
          %784 = dma.vmem_to_hbm [thread:$0]  %s779, 256, %s777, [#allocation5], 128, 128, 8
        $region56: #{multiway_contextual_attention.16} parent=43 // pred_fallthru
          _
        // Predicated region
        $region57: #{multiway_contextual_attention.16} parent=43 // pred_check
          %p785 = pneg %p211
        $region58: #{multiway_contextual_attention.16} parent=43 // pred_check_branch
          %787 = sbr.rel (%p785) target = $region60
        $region59: #{multiway_contextual_attention.16} parent=43 // pred_region
          %788 = dma.done [#allocation5], 256
        $region60: #{multiway_contextual_attention.16} parent=43 // pred_fallthru
          _
      $region44: #{multiway_contextual_attention.16} parent=5 // pred_fallthru
        _
      %p789 = scmp.le.s32.totalorder 2, %s20
      // Predicated region
      $region61: #{multiway_contextual_attention.16} parent=5 // pred_check
        %p790 = pneg %p789
      $region62: #{multiway_contextual_attention.16} parent=5 // pred_check_branch
        %792 = sbr.rel (%p790) target = $region64
      $region63: #{multiway_contextual_attention.16} parent=5 // pred_region
        %s793 = ssub.s32 %s20, 2
      $region64: #{multiway_contextual_attention.16} parent=5 // pred_fallthru
        _
    $region6: #{multiway_contextual_attention.16} parent=1 // loop_footer
      %s24 = sadd.s32 1, %s20
    $region7: #{multiway_contextual_attention.16} parent=1 // loop_footer_branch
      %19 = sbr.rel target = $region3
    $region8: #{multiway_contextual_attention.16} parent=1 // loop_exit
      _
    %794 = vsyncpa [#allocation5], 1
    %s795 = scalar_lea.sflag [#allocation5], 1
    %796 = vsyncpa %s795, 1

</llo_original>
